<compile_context>
chip_gen: v5e
topology: v5e:2x2
jax: 0.10.0
libtpu: 0.0.40
codegen_flags: <defaults>
</compile_context>

<pallas_src>
import functools

import jax
import jax.numpy as jnp
from jax.experimental import pallas as pl
from jax.experimental.pallas import tpu as pltpu

BN_EPS = 1e-5
BN_SCALE = float(1.0 / (1.0 + BN_EPS) ** 0.5)   # eval-mode BatchNorm, default stats
GIN_EPS = 0.0

LANE = 128                       # pad channel dims to lane width (lane-dense stores)
TILE_M = 128                     # node-row tile
TILE_K = 128                     # adjacency-column (reduction) tile
VMEM_LIMIT = 48 * 1024 * 1024    # safe on v5e/v6e (128 MiB) and v7x (64 MiB physical)


def _round_up(n, m):
    return (n + m - 1) // m * m


def _pad_to(a, shape):
    return jnp.pad(a, [(0, t - s) for s, t in zip(a.shape, shape)])


# ----------------------------------------------------------------------------
# Pallas kernels
# ----------------------------------------------------------------------------
def _frontend_kernel(*refs, num_side):
    """transfer(x) + the whole SideMLP for one row tile of nodes.

    refs = (x, w_t, b_t, w_s0, b_s0, ..., w_s{L-1}, b_s{L-1}, h_out, side_out)
    Eval-mode BN is pre-folded into the side weights; relu on all but the last
    side layer; dropout is identity at inference.
    """
    x_ref, wt_ref, bt_ref = refs[0], refs[1], refs[2]
    side_refs = refs[3:3 + 2 * num_side]
    h_out, side_out = refs[3 + 2 * num_side], refs[4 + 2 * num_side]

    x = x_ref[...]
    h_out[...] = jnp.dot(x, wt_ref[...], preferred_element_type=jnp.float32) + bt_ref[...]

    s = x
    for l in range(num_side):
        w = side_refs[2 * l][...]
        b = side_refs[2 * l + 1][...]
        s = jnp.dot(s, w, preferred_element_type=jnp.float32) + b
        if l != num_side - 1:
            s = jnp.maximum(s, 0.0)
    side_out[...] = s


def _gin_kernel(a_ref, hc_ref, hs_ref, w_ref, b_ref, o_ref, acc_ref, *, eps_gin, relu):
    """One merged GIN layer, row-tiled with a reduction over adjacency columns.

    grid = (row tiles, adjacency column tiles).  acc accumulates
    (1+eps)*h_self + A@h over the column axis (A, h streamed in bf16, f32
    accumulate); at the last column step the gate/BN-folded linear (+relu)
    epilogue runs once and the row tile is written out.
    """
    kc = pl.program_id(1)

    @pl.when(kc == 0)
    def _():
        acc_ref[...] = (1.0 + eps_gin) * hs_ref[...]

    acc_ref[...] += jnp.dot(a_ref[...], hc_ref[...], preferred_element_type=jnp.float32)

    @pl.when(kc == pl.num_programs(1) - 1)
    def _():
        y = jnp.dot(acc_ref[...], w_ref[...], preferred_element_type=jnp.float32) + b_ref[...]
        if relu:
            y = jnp.maximum(y, 0.0)
        o_ref[...] = y


def _pool_pred_kernel(node_ref, side_ref, mask_ref, wp_ref, bp_ref, alpha_ref,
                      o_ref, acc_ref):
    """node/side merge + per-graph running max pool + graph_pred_linear.

    grid = (row tiles,).  acc [G, D] holds the per-graph running max; at the
    last row tile it is pushed through the prediction linear.  The masked
    broadcast is bounded per tile ([G, TM, D]), never [G, N, D].
    """
    i = pl.program_id(0)

    @pl.when(i == 0)
    def _():
        acc_ref[...] = jnp.full(acc_ref.shape, -1e30, jnp.float32)

    a = alpha_ref[...]                                          # (1, 1)
    merged = (1.0 - a) * node_ref[...] + a * side_ref[...]      # [TM, D]
    m = mask_ref[...]                                           # [G, TM]
    masked = jnp.where(m[:, :, None] > 0.0, merged[None, :, :], -1e30)
    acc_ref[...] = jnp.maximum(acc_ref[...], jnp.max(masked, axis=1))

    @pl.when(i == pl.num_programs(0) - 1)
    def _():
        g = acc_ref[...]
        g = jnp.where(g > -1e29, g, 0.0)      # guard graphs with no nodes
        o_ref[...] = (jnp.dot(g, wp_ref[...], preferred_element_type=jnp.float32)
                      + bp_ref[...])


# ----------------------------------------------------------------------------
# pallas_call wrappers
# ----------------------------------------------------------------------------
def frontend(x_p, wt, bt, side_ws, side_bs, *, tile_m):
    n_p, f_p = x_p.shape
    d_p = wt.shape[1]
    o_p = side_ws[-1].shape[1]
    ns = len(side_ws)

    side_args, side_specs = [], []
    for w, b in zip(side_ws, side_bs):
        side_args += [w, b]
        side_specs += [pl.BlockSpec(w.shape, lambda i: (0, 0)),
                       pl.BlockSpec(b.shape, lambda i: (0, 0))]

    return pl.pallas_call(
        functools.partial(_frontend_kernel, num_side=ns),
        out_shape=(jax.ShapeDtypeStruct((n_p, d_p), jnp.float32),
                   jax.ShapeDtypeStruct((n_p, o_p), jnp.float32)),
        grid_spec=pltpu.PrefetchScalarGridSpec(
            num_scalar_prefetch=0, grid=(n_p // tile_m,),
            in_specs=[pl.BlockSpec((tile_m, f_p), lambda i: (i, 0)),
                      pl.BlockSpec(wt.shape, lambda i: (0, 0)),
                      pl.BlockSpec(bt.shape, lambda i: (0, 0)),
                      *side_specs],
            out_specs=[pl.BlockSpec((tile_m, d_p), lambda i: (i, 0)),
                       pl.BlockSpec((tile_m, o_p), lambda i: (i, 0))]),
        compiler_params=pltpu.CompilerParams(
            dimension_semantics=("parallel",), vmem_limit_bytes=VMEM_LIMIT),
    )(x_p, wt, bt, *side_args)


def gin_layer(adj_b16, h, w_eff, b_eff, *, relu, tile_m, tile_k):
    n_p, d_p = h.shape
    h_b16 = h.astype(jnp.bfloat16)     # agg matmul inputs in bf16, f32 accumulate
    return pl.pallas_call(
        functools.partial(_gin_kernel, eps_gin=GIN_EPS, relu=relu),
        out_shape=jax.ShapeDtypeStruct((n_p, d_p), jnp.float32),
        grid_spec=pltpu.PrefetchScalarGridSpec(
            num_scalar_prefetch=0, grid=(n_p // tile_m, n_p // tile_k),
            in_specs=[pl.BlockSpec((tile_m, tile_k), lambda i, kc: (i, kc)),   # A
                      pl.BlockSpec((tile_k, d_p), lambda i, kc: (kc, 0)),      # h cols (bf16)
                      pl.BlockSpec((tile_m, d_p), lambda i, kc: (i, 0)),       # h self rows (f32)
                      pl.BlockSpec((d_p, d_p), lambda i, kc: (0, 0)),          # W_eff
                      pl.BlockSpec((1, d_p), lambda i, kc: (0, 0))],           # b_eff
            out_specs=pl.BlockSpec((tile_m, d_p), lambda i, kc: (i, 0)),
            scratch_shapes=[pltpu.VMEM((tile_m, d_p), jnp.float32)]),
        compiler_params=pltpu.CompilerParams(
            dimension_semantics=("parallel", "arbitrary"),
            vmem_limit_bytes=VMEM_LIMIT),
    )(adj_b16, h_b16, h, w_eff, b_eff)


def merge_pool_pred(node, side, mask, wp, bp, alpha, *, tile_m):
    n_p, d_p = node.shape
    g_n = mask.shape[0]
    c_p = wp.shape[1]
    return pl.pallas_call(
        _pool_pred_kernel,
        out_shape=jax.ShapeDtypeStruct((g_n, c_p), jnp.float32),
        grid_spec=pltpu.PrefetchScalarGridSpec(
            num_scalar_prefetch=0, grid=(n_p // tile_m,),
            in_specs=[pl.BlockSpec((tile_m, d_p), lambda i: (i, 0)),    # node rows
                      pl.BlockSpec((tile_m, d_p), lambda i: (i, 0)),    # side rows
                      pl.BlockSpec((g_n, tile_m), lambda i: (0, i)),    # mask cols
                      pl.BlockSpec(wp.shape, lambda i: (0, 0)),         # pred W
                      pl.BlockSpec(bp.shape, lambda i: (0, 0)),         # pred b
                      pl.BlockSpec((1, 1), lambda i: (0, 0))],          # alpha
            out_specs=pl.BlockSpec((g_n, c_p), lambda i: (0, 0)),
            scratch_shapes=[pltpu.VMEM((g_n, d_p), jnp.float32)]),
        compiler_params=pltpu.CompilerParams(
            dimension_semantics=("arbitrary",), vmem_limit_bytes=VMEM_LIMIT),
    )(node, side, mask, wp, bp, alpha)
    # TODO(synk): for very large graph counts, grid over graphs with
    # scalar-prefetched per-graph node offsets instead of the [G, TM] mask.


# ----------------------------------------------------------------------------
# Glue (plain JAX): kNN graph construction, parameter init, model driver
# ----------------------------------------------------------------------------
def knn_adjacency(x, batch, k):
    """A[i, j] = 1.0 if j is among the k nearest same-graph points to i.

    Self-matches are included (torch_cluster.knn(x, x, k) behavior).
    Distances use the matmul form (no [N, N, F] broadcast)."""
    sq = jnp.sum(x * x, axis=-1)
    d2 = sq[:, None] + sq[None, :] - 2.0 * (x @ x.T)
    same = batch[:, None] == batch[None, :]
    d2 = jnp.where(same, d2, jnp.inf)
    _, idx = jax.lax.top_k(-d2, k)                 # [N, k], includes self
    n = x.shape[0]
    adj = jnp.zeros((n, n), jnp.float32)
    adj = adj.at[jnp.arange(n)[:, None], idx].set(1.0)
    return adj


def xavier(key, fan_in, fan_out):
    limit = (6.0 / (fan_in + fan_out)) ** 0.5
    return jax.random.uniform(key, (fan_in, fan_out), jnp.float32, -limit, limit)


def init_params(key, feat_dim, hid_dim, out_dim, num_class,
                num_layer, num_side_layer, side_hid_dim):
    keys = jax.random.split(key, 4 + num_layer + num_side_layer)
    p = {}
    p["transfer_w"] = xavier(keys[0], feat_dim, hid_dim)
    p["transfer_b"] = jnp.zeros((hid_dim,), jnp.float32)

    conv_w, conv_b = [], []
    for l in range(num_layer):
        conv_w.append(xavier(keys[1 + l], hid_dim, hid_dim))
        conv_b.append(jnp.zeros((hid_dim,), jnp.float32))
    p["conv_w1"], p["conv_b1"] = conv_w, conv_b
    # conv_layers2 = copy.deepcopy(conv_layers) -> identical weights at init
    p["conv_w2"] = [w for w in conv_w]
    p["conv_b2"] = [b for b in conv_b]

    side_dims = [feat_dim] + [side_hid_dim] * (num_side_layer - 1) + [out_dim]
    side_w, side_b = [], []
    for l in range(num_side_layer):
        side_w.append(xavier(keys[1 + num_layer + l], side_dims[l], side_dims[l + 1]))
        side_b.append(jnp.zeros((side_dims[l + 1],), jnp.float32))
    p["side_w"], p["side_b"] = side_w, side_b

    p["pred_w"] = xavier(keys[-1], hid_dim, num_class)
    p["pred_b"] = jnp.zeros((num_class,), jnp.float32)

    p["alpha_merge"] = [jnp.float32(0.5) for _ in range(num_layer)]
    p["alpha_merge_bth"] = [jnp.float32(0.5) for _ in range(num_layer)]
    p["alpha"] = jnp.float32(0.0)
    return p


def gnn_ptcldpred_merg_side_forward(params, x, batch, *, k, num_graphs,
                                    tile_m=TILE_M, tile_k=TILE_K):
    n, feat = x.shape
    hid = params["transfer_w"].shape[1]
    out_dim = params["side_w"][-1].shape[1]
    n_cls = params["pred_w"].shape[1]
    assert out_dim == hid, "node/side merge + graph_pred_linear require out_dim == hid_dim"

    n_p = _round_up(n, tile_m)
    f_p = _round_up(feat, LANE)
    d_p = _round_up(hid, LANE)
    c_p = _round_up(n_cls, LANE)

    # --- graph construction (plain JAX glue) ---
    adj = knn_adjacency(x, batch, k)
    adj_p = _pad_to(adj, (n_p, n_p)).astype(jnp.bfloat16)        # 0/1 exact in bf16
    x_p = _pad_to(x, (n_p, f_p))
    batch_p = jnp.concatenate(
        [batch, jnp.full((n_p - n,), -1, batch.dtype)]) if n_p > n else batch

    # --- transfer + SideMLP (eval-mode BN folded into side weights) ---
    wt = _pad_to(params["transfer_w"], (f_p, d_p))
    bt = _pad_to(params["transfer_b"].reshape(1, -1), (1, d_p))
    side_ws, side_bs = [], []
    for w, b in zip(params["side_w"], params["side_b"]):
        i_p = _round_up(w.shape[0], LANE)
        o_p = _round_up(w.shape[1], LANE)
        side_ws.append(_pad_to(w * BN_SCALE, (i_p, o_p)))
        side_bs.append(_pad_to((b * BN_SCALE).reshape(1, -1), (1, o_p)))
    h, side_rep = frontend(x_p, wt, bt, side_ws, side_bs, tile_m=tile_m)

    # --- GIN layers: merge gates + BN folded into one W_eff/b_eff per layer ---
    # (exact: conv merge is linear; BN2==BN in eval mode so the gb blend is a no-op)
    num_layer = len(params["conv_w1"])
    for l in range(num_layer):
        g = params["alpha_merge"][l]
        w_eff = BN_SCALE * (g * params["conv_w1"][l] + (1.0 - g) * params["conv_w2"][l])
        b_eff = BN_SCALE * (g * params["conv_b1"][l] + (1.0 - g) * params["conv_b2"][l])
        w_eff = _pad_to(w_eff, (d_p, d_p))
        b_eff = _pad_to(b_eff.reshape(1, -1), (1, d_p))
        h = gin_layer(adj_p, h, w_eff, b_eff, relu=(l != num_layer - 1),
                      tile_m=tile_m, tile_k=tile_k)
    node_rep = h

    # --- merge + global_max_pool + graph_pred_linear (fused) ---
    mask = (batch_p[None, :] == jnp.arange(num_graphs)[:, None]).astype(jnp.float32)
    wp = _pad_to(params["pred_w"], (d_p, c_p))
    bp = _pad_to(params["pred_b"].reshape(1, -1), (1, c_p))
    alpha = params["alpha"].reshape(1, 1)
    logits_p = merge_pool_pred(node_rep, side_rep, mask, wp, bp, alpha, tile_m=tile_m)
    return logits_p[:, :n_cls]


# ----------------------------------------------------------------------------
# Pure-JAX reference (same math, same bf16 aggregation cast) for verification
# ----------------------------------------------------------------------------
def reference_forward(params, x, batch, *, k, num_graphs):
    adj = knn_adjacency(x, batch, k)
    h = x @ params["transfer_w"] + params["transfer_b"]
    num_layer = len(params["conv_w1"])
    for l in range(num_layer):
        g = params["alpha_merge"][l]
        w = BN_SCALE * (g * params["conv_w1"][l] + (1.0 - g) * params["conv_w2"][l])
        b = BN_SCALE * (g * params["conv_b1"][l] + (1.0 - g) * params["conv_b2"][l])
        agg = jnp.dot(adj.astype(jnp.bfloat16), h.astype(jnp.bfloat16),
                      preferred_element_type=jnp.float32)
        t = (1.0 + GIN_EPS) * h + agg
        h = t @ w + b
        if l != num_layer - 1:
            h = jnp.maximum(h, 0.0)

    s = x
    num_side = len(params["side_w"])
    for l in range(num_side):
        s = (s @ params["side_w"][l] + params["side_b"][l]) * BN_SCALE
        if l != num_side - 1:
            s = jnp.maximum(s, 0.0)

    a = params["alpha"]
    merged = (1.0 - a) * h + a * s
    mask = batch[None, :] == jnp.arange(num_graphs)[:, None]
    pooled = jnp.max(jnp.where(mask[:, :, None], merged[None, :, :], -jnp.inf), axis=1)
    return pooled @ params["pred_w"] + params["pred_b"]


if __name__ == "__main__":
    # Small but tile-exercising shapes: 256 points in 2 graphs of 128, feat=8,
    # hid=out=32, 2 GNN layers, 3 side layers (side_hid=16), k=4, 3 classes.
    FEAT_DIM, HID_DIM, OUT_DIM = 8, 32, 32
    NUM_CLASS, NUM_LAYER, NUM_SIDE, SIDE_HID, K = 3, 2, 3, 16, 4
    N, G = 256, 2

    key = jax.random.PRNGKey(0)
    kx, kp = jax.random.split(key)
    x = jax.random.normal(kx, (N, FEAT_DIM), jnp.float32)
    batch = jnp.repeat(jnp.arange(G, dtype=jnp.int32), N // G)

    params = init_params(kp, FEAT_DIM, HID_DIM, OUT_DIM, NUM_CLASS,
                         NUM_LAYER, NUM_SIDE, SIDE_HID)

    fwd = jax.jit(functools.partial(gnn_ptcldpred_merg_side_forward,
                                    k=K, num_graphs=G))
    out = fwd(params, x, batch)
    jax.block_until_ready(out)
    assert out.shape == (G, NUM_CLASS)

    ref = jax.jit(functools.partial(reference_forward, k=K, num_graphs=G))(params, x, batch)
    jax.block_until_ready(ref)
    assert bool(jnp.all(jnp.isfinite(out)))
    assert bool(jnp.allclose(out, ref, rtol=1e-2, atol=1e-2)), (out, ref)
    print("KERNEL_OK")
</pallas_src>

<mosaic_0001>
module attributes {stable_mosaic.version = 11 : i64} {
  func.func @_frontend_kernel(%arg0: i32, %arg1: memref<128x128xf32, #tpu.memory_space<vmem>>, %arg2: memref<128x128xf32, #tpu.memory_space<vmem>>, %arg3: memref<1x128xf32, #tpu.memory_space<vmem>>, %arg4: memref<128x128xf32, #tpu.memory_space<vmem>>, %arg5: memref<1x128xf32, #tpu.memory_space<vmem>>, %arg6: memref<128x128xf32, #tpu.memory_space<vmem>>, %arg7: memref<1x128xf32, #tpu.memory_space<vmem>>, %arg8: memref<128x128xf32, #tpu.memory_space<vmem>>, %arg9: memref<1x128xf32, #tpu.memory_space<vmem>>, %arg10: memref<128x128xf32, #tpu.memory_space<vmem>>, %arg11: memref<128x128xf32, #tpu.memory_space<vmem>>) attributes {dimension_semantics = [#tpu.dimension_semantics<parallel>], iteration_bounds = array<i64: 2>, scalar_prefetch = 0 : i64, scratch_operands = 0 : i64, tpu.core_type = #tpu.core_type<tc>, window_params = [{transform_indices = @transform_0, window_bounds = array<i64: 128, 128>}, {pipeline_mode = #tpu.pipeline_mode<synchronous>, transform_indices = @transform_1, window_bounds = array<i64: 128, 128>}, {pipeline_mode = #tpu.pipeline_mode<synchronous>, transform_indices = @transform_2, window_bounds = array<i64: 1, 128>}, {pipeline_mode = #tpu.pipeline_mode<synchronous>, transform_indices = @transform_3, window_bounds = array<i64: 128, 128>}, {pipeline_mode = #tpu.pipeline_mode<synchronous>, transform_indices = @transform_4, window_bounds = array<i64: 1, 128>}, {pipeline_mode = #tpu.pipeline_mode<synchronous>, transform_indices = @transform_5, window_bounds = array<i64: 128, 128>}, {pipeline_mode = #tpu.pipeline_mode<synchronous>, transform_indices = @transform_6, window_bounds = array<i64: 1, 128>}, {pipeline_mode = #tpu.pipeline_mode<synchronous>, transform_indices = @transform_7, window_bounds = array<i64: 128, 128>}, {pipeline_mode = #tpu.pipeline_mode<synchronous>, transform_indices = @transform_8, window_bounds = array<i64: 1, 128>}, {transform_indices = @transform_9, window_bounds = array<i64: 128, 128>}, {transform_indices = @transform_10, window_bounds = array<i64: 128, 128>}]} {
    %c0 = arith.constant 0 : index
    %c0_0 = arith.constant 0 : index
    %0 = vector.load %arg1[%c0, %c0_0] : memref<128x128xf32, #tpu.memory_space<vmem>>, vector<128x128xf32>
    %c0_1 = arith.constant 0 : index
    %c0_2 = arith.constant 0 : index
    %1 = vector.load %arg2[%c0_1, %c0_2] : memref<128x128xf32, #tpu.memory_space<vmem>>, vector<128x128xf32>
    %cst = arith.constant dense<0.000000e+00> : vector<128x128xf32>
    %2 = tpu.matmul %0, %1, %cst {dimension_numbers = #tpu.dot_dimension_numbers<[1], [0], [0], [1], [0, 0, 1, 1], [], []>} : vector<128x128xf32>, vector<128x128xf32>, vector<128x128xf32> -> vector<128x128xf32>
    %c0_3 = arith.constant 0 : index
    %c0_4 = arith.constant 0 : index
    %3 = vector.load %arg3[%c0_3, %c0_4] : memref<1x128xf32, #tpu.memory_space<vmem>>, vector<1x128xf32>
    %4 = vector.broadcast %3 : vector<1x128xf32> to vector<128x128xf32>
    %5 = arith.addf %2, %4 : vector<128x128xf32>
    %c0_5 = arith.constant 0 : index
    %c0_6 = arith.constant 0 : index
    %6 = vector.load %arg10[%c0_5, %c0_6] : memref<128x128xf32, #tpu.memory_space<vmem>>, vector<128x128xf32>
    tpu.vector_store %arg10[%c0_5, %c0_6], %5 {strides = array<i32>} : memref<128x128xf32, #tpu.memory_space<vmem>>, vector<128x128xf32>,
    %c0_7 = arith.constant 0 : index
    %c0_8 = arith.constant 0 : index
    %7 = vector.load %arg4[%c0_7, %c0_8] : memref<128x128xf32, #tpu.memory_space<vmem>>, vector<128x128xf32>
    %c0_9 = arith.constant 0 : index
    %c0_10 = arith.constant 0 : index
    %8 = vector.load %arg5[%c0_9, %c0_10] : memref<1x128xf32, #tpu.memory_space<vmem>>, vector<1x128xf32>
    %cst_11 = arith.constant dense<0.000000e+00> : vector<128x128xf32>
    %9 = tpu.matmul %0, %7, %cst_11 {dimension_numbers = #tpu.dot_dimension_numbers<[1], [0], [0], [1], [0, 0, 1, 1], [], []>} : vector<128x128xf32>, vector<128x128xf32>, vector<128x128xf32> -> vector<128x128xf32>
    %10 = vector.broadcast %8 : vector<1x128xf32> to vector<128x128xf32>
    %11 = arith.addf %9, %10 : vector<128x128xf32>
    %cst_12 = arith.constant 0.000000e+00 : f32
    %12 = vector.broadcast %cst_12 : f32 to vector<128x128xf32>
    %13 = arith.maximumf %11, %12 : vector<128x128xf32>
    %c0_13 = arith.constant 0 : index
    %c0_14 = arith.constant 0 : index
    %14 = vector.load %arg6[%c0_13, %c0_14] : memref<128x128xf32, #tpu.memory_space<vmem>>, vector<128x128xf32>
    %c0_15 = arith.constant 0 : index
    %c0_16 = arith.constant 0 : index
    %15 = vector.load %arg7[%c0_15, %c0_16] : memref<1x128xf32, #tpu.memory_space<vmem>>, vector<1x128xf32>
    %cst_17 = arith.constant dense<0.000000e+00> : vector<128x128xf32>
    %16 = tpu.matmul %13, %14, %cst_17 {dimension_numbers = #tpu.dot_dimension_numbers<[1], [0], [0], [1], [0, 0, 1, 1], [], []>} : vector<128x128xf32>, vector<128x128xf32>, vector<128x128xf32> -> vector<128x128xf32>
    %17 = vector.broadcast %15 : vector<1x128xf32> to vector<128x128xf32>
    %18 = arith.addf %16, %17 : vector<128x128xf32>
    %cst_18 = arith.constant 0.000000e+00 : f32
    %19 = vector.broadcast %cst_18 : f32 to vector<128x128xf32>
    %20 = arith.maximumf %18, %19 : vector<128x128xf32>
    %c0_19 = arith.constant 0 : index
    %c0_20 = arith.constant 0 : index
    %21 = vector.load %arg8[%c0_19, %c0_20] : memref<128x128xf32, #tpu.memory_space<vmem>>, vector<128x128xf32>
    %c0_21 = arith.constant 0 : index
    %c0_22 = arith.constant 0 : index
    %22 = vector.load %arg9[%c0_21, %c0_22] : memref<1x128xf32, #tpu.memory_space<vmem>>, vector<1x128xf32>
    %cst_23 = arith.constant dense<0.000000e+00> : vector<128x128xf32>
    %23 = tpu.matmul %20, %21, %cst_23 {dimension_numbers = #tpu.dot_dimension_numbers<[1], [0], [0], [1], [0, 0, 1, 1], [], []>} : vector<128x128xf32>, vector<128x128xf32>, vector<128x128xf32> -> vector<128x128xf32>
    %24 = vector.broadcast %22 : vector<1x128xf32> to vector<128x128xf32>
    %25 = arith.addf %23, %24 : vector<128x128xf32>
    %c0_24 = arith.constant 0 : index
    %c0_25 = arith.constant 0 : index
    %26 = vector.load %arg11[%c0_24, %c0_25] : memref<128x128xf32, #tpu.memory_space<vmem>>, vector<128x128xf32>
    tpu.vector_store %arg11[%c0_24, %c0_25], %25 {strides = array<i32>} : memref<128x128xf32, #tpu.memory_space<vmem>>, vector<128x128xf32>,
    return
  }
  func.func @transform_0(%arg0: i32) -> (i32, i32) {
    %c0_i32 = arith.constant 0 : i32
    %c0_i32_0 = arith.constant 0 : i32
    return %arg0, %c0_i32 : i32, i32
  }
  func.func @transform_1(%arg0: i32) -> (i32, i32) {
    %c0_i32 = arith.constant 0 : i32
    %c0_i32_0 = arith.constant 0 : i32
    %c0_i32_1 = arith.constant 0 : i32
    return %c0_i32, %c0_i32_0 : i32, i32
  }
  func.func @transform_2(%arg0: i32) -> (i32, i32) {
    %c0_i32 = arith.constant 0 : i32
    %c0_i32_0 = arith.constant 0 : i32
    %c0_i32_1 = arith.constant 0 : i32
    return %c0_i32, %c0_i32_0 : i32, i32
  }
  func.func @transform_3(%arg0: i32) -> (i32, i32) {
    %c0_i32 = arith.constant 0 : i32
    %c0_i32_0 = arith.constant 0 : i32
    %c0_i32_1 = arith.constant 0 : i32
    return %c0_i32, %c0_i32_0 : i32, i32
  }
  func.func @transform_4(%arg0: i32) -> (i32, i32) {
    %c0_i32 = arith.constant 0 : i32
    %c0_i32_0 = arith.constant 0 : i32
    %c0_i32_1 = arith.constant 0 : i32
    return %c0_i32, %c0_i32_0 : i32, i32
  }
  func.func @transform_5(%arg0: i32) -> (i32, i32) {
    %c0_i32 = arith.constant 0 : i32
    %c0_i32_0 = arith.constant 0 : i32
    %c0_i32_1 = arith.constant 0 : i32
    return %c0_i32, %c0_i32_0 : i32, i32
  }
  func.func @transform_6(%arg0: i32) -> (i32, i32) {
    %c0_i32 = arith.constant 0 : i32
    %c0_i32_0 = arith.constant 0 : i32
    %c0_i32_1 = arith.constant 0 : i32
    return %c0_i32, %c0_i32_0 : i32, i32
  }
  func.func @transform_7(%arg0: i32) -> (i32, i32) {
    %c0_i32 = arith.constant 0 : i32
    %c0_i32_0 = arith.constant 0 : i32
    %c0_i32_1 = arith.constant 0 : i32
    return %c0_i32, %c0_i32_0 : i32, i32
  }
  func.func @transform_8(%arg0: i32) -> (i32, i32) {
    %c0_i32 = arith.constant 0 : i32
    %c0_i32_0 = arith.constant 0 : i32
    %c0_i32_1 = arith.constant 0 : i32
    return %c0_i32, %c0_i32_0 : i32, i32
  }
  func.func @transform_9(%arg0: i32) -> (i32, i32) {
    %c0_i32 = arith.constant 0 : i32
    %c0_i32_0 = arith.constant 0 : i32
    return %arg0, %c0_i32 : i32, i32
  }
  func.func @transform_10(%arg0: i32) -> (i32, i32) {
    %c0_i32 = arith.constant 0 : i32
    %c0_i32_0 = arith.constant 0 : i32
    return %arg0, %c0_i32 : i32, i32
  }
}

module attributes {stable_mosaic.version = 11 : i64} {
  func.func @_gin_kernel(%arg0: i32, %arg1: i32, %arg2: memref<128x128xbf16, #tpu.memory_space<vmem>>, %arg3: memref<128x128xbf16, #tpu.memory_space<vmem>>, %arg4: memref<128x128xf32, #tpu.memory_space<vmem>>, %arg5: memref<128x128xf32, #tpu.memory_space<vmem>>, %arg6: memref<1x128xf32, #tpu.memory_space<vmem>>, %arg7: memref<128x128xf32, #tpu.memory_space<vmem>>, %arg8: memref<128x128xf32, #tpu.memory_space<vmem>>) attributes {dimension_semantics = [#tpu.dimension_semantics<parallel>, #tpu.dimension_semantics<arbitrary>], iteration_bounds = array<i64: 2, 2>, scalar_prefetch = 0 : i64, scratch_operands = 1 : i64, tpu.core_type = #tpu.core_type<tc>, window_params = [{transform_indices = @transform_0, window_bounds = array<i64: 128, 128>}, {transform_indices = @transform_1, window_bounds = array<i64: 128, 128>}, {transform_indices = @transform_2, window_bounds = array<i64: 128, 128>}, {pipeline_mode = #tpu.pipeline_mode<synchronous>, transform_indices = @transform_3, window_bounds = array<i64: 128, 128>}, {pipeline_mode = #tpu.pipeline_mode<synchronous>, transform_indices = @transform_4, window_bounds = array<i64: 1, 128>}, {transform_indices = @transform_5, window_bounds = array<i64: 128, 128>}]} {
    %c0_i32 = arith.constant 0 : i32
    %0 = arith.cmpi eq, %arg1, %c0_i32 : i32
    %1 = arith.extui %0 : i1 to i32
    %c0_i32_0 = arith.constant 0 : i32
    %2 = arith.cmpi ne, %1, %c0_i32_0 : i32
    scf.if %2 {
      %c0_9 = arith.constant 0 : index
      %c0_10 = arith.constant 0 : index
      %12 = vector.load %arg4[%c0_9, %c0_10] : memref<128x128xf32, #tpu.memory_space<vmem>>, vector<128x128xf32>
      %cst_11 = arith.constant 1.000000e+00 : f32
      %13 = vector.broadcast %cst_11 : f32 to vector<128x128xf32>
      %14 = arith.mulf %13, %12 : vector<128x128xf32>
      %c0_12 = arith.constant 0 : index
      %c0_13 = arith.constant 0 : index
      %15 = vector.load %arg8[%c0_12, %c0_13] : memref<128x128xf32, #tpu.memory_space<vmem>>, vector<128x128xf32>
      tpu.vector_store %arg8[%c0_12, %c0_13], %14 {strides = array<i32>} : memref<128x128xf32, #tpu.memory_space<vmem>>, vector<128x128xf32>,
    } else {
    }
    %c0 = arith.constant 0 : index
    %c0_1 = arith.constant 0 : index
    %3 = vector.load %arg8[%c0, %c0_1] : memref<128x128xf32, #tpu.memory_space<vmem>>, vector<128x128xf32>
    %c0_2 = arith.constant 0 : index
    %c0_3 = arith.constant 0 : index
    %4 = vector.load %arg2[%c0_2, %c0_3] : memref<128x128xbf16, #tpu.memory_space<vmem>>, vector<128x128xbf16>
    %c0_4 = arith.constant 0 : index
    %c0_5 = arith.constant 0 : index
    %5 = vector.load %arg3[%c0_4, %c0_5] : memref<128x128xbf16, #tpu.memory_space<vmem>>, vector<128x128xbf16>
    %cst = arith.constant dense<0.000000e+00> : vector<128x128xf32>
    %6 = tpu.matmul %4, %5, %cst {dimension_numbers = #tpu.dot_dimension_numbers<[1], [0], [0], [1], [0, 0, 1, 1], [], []>} : vector<128x128xbf16>, vector<128x128xbf16>, vector<128x128xf32> -> vector<128x128xf32>
    %7 = arith.addf %3, %6 : vector<128x128xf32>
    %c0_6 = arith.constant 0 : index
    %c0_7 = arith.constant 0 : index
    %8 = vector.load %arg8[%c0_6, %c0_7] : memref<128x128xf32, #tpu.memory_space<vmem>>, vector<128x128xf32>
    tpu.vector_store %arg8[%c0_6, %c0_7], %7 {strides = array<i32>} : memref<128x128xf32, #tpu.memory_space<vmem>>, vector<128x128xf32>,
    %c1_i32 = arith.constant 1 : i32
    %9 = arith.cmpi eq, %arg1, %c1_i32 : i32
    %10 = arith.extui %9 : i1 to i32
    %c0_i32_8 = arith.constant 0 : i32
    %11 = arith.cmpi ne, %10, %c0_i32_8 : i32
    scf.if %11 {
      %c0_9 = arith.constant 0 : index
      %c0_10 = arith.constant 0 : index
      %12 = vector.load %arg8[%c0_9, %c0_10] : memref<128x128xf32, #tpu.memory_space<vmem>>, vector<128x128xf32>
      %c0_11 = arith.constant 0 : index
      %c0_12 = arith.constant 0 : index
      %13 = vector.load %arg5[%c0_11, %c0_12] : memref<128x128xf32, #tpu.memory_space<vmem>>, vector<128x128xf32>
      %cst_13 = arith.constant dense<0.000000e+00> : vector<128x128xf32>
      %14 = tpu.matmul %12, %13, %cst_13 {dimension_numbers = #tpu.dot_dimension_numbers<[1], [0], [0], [1], [0, 0, 1, 1], [], []>} : vector<128x128xf32>, vector<128x128xf32>, vector<128x128xf32> -> vector<128x128xf32>
      %c0_14 = arith.constant 0 : index
      %c0_15 = arith.constant 0 : index
      %15 = vector.load %arg6[%c0_14, %c0_15] : memref<1x128xf32, #tpu.memory_space<vmem>>, vector<1x128xf32>
      %16 = vector.broadcast %15 : vector<1x128xf32> to vector<128x128xf32>
      %17 = arith.addf %14, %16 : vector<128x128xf32>
      %cst_16 = arith.constant 0.000000e+00 : f32
      %18 = vector.broadcast %cst_16 : f32 to vector<128x128xf32>
      %19 = arith.maximumf %17, %18 : vector<128x128xf32>
      %c0_17 = arith.constant 0 : index
      %c0_18 = arith.constant 0 : index
      %20 = vector.load %arg7[%c0_17, %c0_18] : memref<128x128xf32, #tpu.memory_space<vmem>>, vector<128x128xf32>
      tpu.vector_store %arg7[%c0_17, %c0_18], %19 {strides = array<i32>} : memref<128x128xf32, #tpu.memory_space<vmem>>, vector<128x128xf32>,
    } else {
    }
    return
  }
  func.func @transform_0(%arg0: i32, %arg1: i32) -> (i32, i32) {
    %c0_i32 = arith.constant 0 : i32
    return %arg0, %arg1 : i32, i32
  }
  func.func @transform_1(%arg0: i32, %arg1: i32) -> (i32, i32) {
    %c0_i32 = arith.constant 0 : i32
    %c0_i32_0 = arith.constant 0 : i32
    return %arg1, %c0_i32 : i32, i32
  }
  func.func @transform_2(%arg0: i32, %arg1: i32) -> (i32, i32) {
    %c0_i32 = arith.constant 0 : i32
    %c0_i32_0 = arith.constant 0 : i32
    return %arg0, %c0_i32 : i32, i32
  }
  func.func @transform_3(%arg0: i32, %arg1: i32) -> (i32, i32) {
    %c0_i32 = arith.constant 0 : i32
    %c0_i32_0 = arith.constant 0 : i32
    %c0_i32_1 = arith.constant 0 : i32
    return %c0_i32, %c0_i32_0 : i32, i32
  }
  func.func @transform_4(%arg0: i32, %arg1: i32) -> (i32, i32) {
    %c0_i32 = arith.constant 0 : i32
    %c0_i32_0 = arith.constant 0 : i32
    %c0_i32_1 = arith.constant 0 : i32
    return %c0_i32, %c0_i32_0 : i32, i32
  }
  func.func @transform_5(%arg0: i32, %arg1: i32) -> (i32, i32) {
    %c0_i32 = arith.constant 0 : i32
    %c0_i32_0 = arith.constant 0 : i32
    return %arg0, %c0_i32 : i32, i32
  }
}

module attributes {stable_mosaic.version = 11 : i64} {
  func.func @_gin_kernel(%arg0: i32, %arg1: i32, %arg2: memref<128x128xbf16, #tpu.memory_space<vmem>>, %arg3: memref<128x128xbf16, #tpu.memory_space<vmem>>, %arg4: memref<128x128xf32, #tpu.memory_space<vmem>>, %arg5: memref<128x128xf32, #tpu.memory_space<vmem>>, %arg6: memref<1x128xf32, #tpu.memory_space<vmem>>, %arg7: memref<128x128xf32, #tpu.memory_space<vmem>>, %arg8: memref<128x128xf32, #tpu.memory_space<vmem>>) attributes {dimension_semantics = [#tpu.dimension_semantics<parallel>, #tpu.dimension_semantics<arbitrary>], iteration_bounds = array<i64: 2, 2>, scalar_prefetch = 0 : i64, scratch_operands = 1 : i64, tpu.core_type = #tpu.core_type<tc>, window_params = [{transform_indices = @transform_0, window_bounds = array<i64: 128, 128>}, {transform_indices = @transform_1, window_bounds = array<i64: 128, 128>}, {transform_indices = @transform_2, window_bounds = array<i64: 128, 128>}, {pipeline_mode = #tpu.pipeline_mode<synchronous>, transform_indices = @transform_3, window_bounds = array<i64: 128, 128>}, {pipeline_mode = #tpu.pipeline_mode<synchronous>, transform_indices = @transform_4, window_bounds = array<i64: 1, 128>}, {transform_indices = @transform_5, window_bounds = array<i64: 128, 128>}]} {
    %c0_i32 = arith.constant 0 : i32
    %0 = arith.cmpi eq, %arg1, %c0_i32 : i32
    %1 = arith.extui %0 : i1 to i32
    %c0_i32_0 = arith.constant 0 : i32
    %2 = arith.cmpi ne, %1, %c0_i32_0 : i32
    scf.if %2 {
      %c0_9 = arith.constant 0 : index
      %c0_10 = arith.constant 0 : index
      %12 = vector.load %arg4[%c0_9, %c0_10] : memref<128x128xf32, #tpu.memory_space<vmem>>, vector<128x128xf32>
      %cst_11 = arith.constant 1.000000e+00 : f32
      %13 = vector.broadcast %cst_11 : f32 to vector<128x128xf32>
      %14 = arith.mulf %13, %12 : vector<128x128xf32>
      %c0_12 = arith.constant 0 : index
      %c0_13 = arith.constant 0 : index
      %15 = vector.load %arg8[%c0_12, %c0_13] : memref<128x128xf32, #tpu.memory_space<vmem>>, vector<128x128xf32>
      tpu.vector_store %arg8[%c0_12, %c0_13], %14 {strides = array<i32>} : memref<128x128xf32, #tpu.memory_space<vmem>>, vector<128x128xf32>,
    } else {
    }
    %c0 = arith.constant 0 : index
    %c0_1 = arith.constant 0 : index
    %3 = vector.load %arg8[%c0, %c0_1] : memref<128x128xf32, #tpu.memory_space<vmem>>, vector<128x128xf32>
    %c0_2 = arith.constant 0 : index
    %c0_3 = arith.constant 0 : index
    %4 = vector.load %arg2[%c0_2, %c0_3] : memref<128x128xbf16, #tpu.memory_space<vmem>>, vector<128x128xbf16>
    %c0_4 = arith.constant 0 : index
    %c0_5 = arith.constant 0 : index
    %5 = vector.load %arg3[%c0_4, %c0_5] : memref<128x128xbf16, #tpu.memory_space<vmem>>, vector<128x128xbf16>
    %cst = arith.constant dense<0.000000e+00> : vector<128x128xf32>
    %6 = tpu.matmul %4, %5, %cst {dimension_numbers = #tpu.dot_dimension_numbers<[1], [0], [0], [1], [0, 0, 1, 1], [], []>} : vector<128x128xbf16>, vector<128x128xbf16>, vector<128x128xf32> -> vector<128x128xf32>
    %7 = arith.addf %3, %6 : vector<128x128xf32>
    %c0_6 = arith.constant 0 : index
    %c0_7 = arith.constant 0 : index
    %8 = vector.load %arg8[%c0_6, %c0_7] : memref<128x128xf32, #tpu.memory_space<vmem>>, vector<128x128xf32>
    tpu.vector_store %arg8[%c0_6, %c0_7], %7 {strides = array<i32>} : memref<128x128xf32, #tpu.memory_space<vmem>>, vector<128x128xf32>,
    %c1_i32 = arith.constant 1 : i32
    %9 = arith.cmpi eq, %arg1, %c1_i32 : i32
    %10 = arith.extui %9 : i1 to i32
    %c0_i32_8 = arith.constant 0 : i32
    %11 = arith.cmpi ne, %10, %c0_i32_8 : i32
    scf.if %11 {
      %c0_9 = arith.constant 0 : index
      %c0_10 = arith.constant 0 : index
      %12 = vector.load %arg8[%c0_9, %c0_10] : memref<128x128xf32, #tpu.memory_space<vmem>>, vector<128x128xf32>
      %c0_11 = arith.constant 0 : index
      %c0_12 = arith.constant 0 : index
      %13 = vector.load %arg5[%c0_11, %c0_12] : memref<128x128xf32, #tpu.memory_space<vmem>>, vector<128x128xf32>
      %cst_13 = arith.constant dense<0.000000e+00> : vector<128x128xf32>
      %14 = tpu.matmul %12, %13, %cst_13 {dimension_numbers = #tpu.dot_dimension_numbers<[1], [0], [0], [1], [0, 0, 1, 1], [], []>} : vector<128x128xf32>, vector<128x128xf32>, vector<128x128xf32> -> vector<128x128xf32>
      %c0_14 = arith.constant 0 : index
      %c0_15 = arith.constant 0 : index
      %15 = vector.load %arg6[%c0_14, %c0_15] : memref<1x128xf32, #tpu.memory_space<vmem>>, vector<1x128xf32>
      %16 = vector.broadcast %15 : vector<1x128xf32> to vector<128x128xf32>
      %17 = arith.addf %14, %16 : vector<128x128xf32>
      %c0_16 = arith.constant 0 : index
      %c0_17 = arith.constant 0 : index
      %18 = vector.load %arg7[%c0_16, %c0_17] : memref<128x128xf32, #tpu.memory_space<vmem>>, vector<128x128xf32>
      tpu.vector_store %arg7[%c0_16, %c0_17], %17 {strides = array<i32>} : memref<128x128xf32, #tpu.memory_space<vmem>>, vector<128x128xf32>,
    } else {
    }
    return
  }
  func.func @transform_0(%arg0: i32, %arg1: i32) -> (i32, i32) {
    %c0_i32 = arith.constant 0 : i32
    return %arg0, %arg1 : i32, i32
  }
  func.func @transform_1(%arg0: i32, %arg1: i32) -> (i32, i32) {
    %c0_i32 = arith.constant 0 : i32
    %c0_i32_0 = arith.constant 0 : i32
    return %arg1, %c0_i32 : i32, i32
  }
  func.func @transform_2(%arg0: i32, %arg1: i32) -> (i32, i32) {
    %c0_i32 = arith.constant 0 : i32
    %c0_i32_0 = arith.constant 0 : i32
    return %arg0, %c0_i32 : i32, i32
  }
  func.func @transform_3(%arg0: i32, %arg1: i32) -> (i32, i32) {
    %c0_i32 = arith.constant 0 : i32
    %c0_i32_0 = arith.constant 0 : i32
    %c0_i32_1 = arith.constant 0 : i32
    return %c0_i32, %c0_i32_0 : i32, i32
  }
  func.func @transform_4(%arg0: i32, %arg1: i32) -> (i32, i32) {
    %c0_i32 = arith.constant 0 : i32
    %c0_i32_0 = arith.constant 0 : i32
    %c0_i32_1 = arith.constant 0 : i32
    return %c0_i32, %c0_i32_0 : i32, i32
  }
  func.func @transform_5(%arg0: i32, %arg1: i32) -> (i32, i32) {
    %c0_i32 = arith.constant 0 : i32
    %c0_i32_0 = arith.constant 0 : i32
    return %arg0, %c0_i32 : i32, i32
  }
}

module attributes {stable_mosaic.version = 11 : i64} {
  func.func @_pool_pred_kernel(%arg0: i32, %arg1: memref<128x128xf32, #tpu.memory_space<vmem>>, %arg2: memref<128x128xf32, #tpu.memory_space<vmem>>, %arg3: memref<2x128xf32, #tpu.memory_space<vmem>>, %arg4: memref<128x128xf32, #tpu.memory_space<vmem>>, %arg5: memref<1x128xf32, #tpu.memory_space<vmem>>, %arg6: memref<1x1xf32, #tpu.memory_space<vmem>>, %arg7: memref<2x128xf32, #tpu.memory_space<vmem>>, %arg8: memref<2x128xf32, #tpu.memory_space<vmem>>) attributes {dimension_semantics = [#tpu.dimension_semantics<arbitrary>], iteration_bounds = array<i64: 2>, scalar_prefetch = 0 : i64, scratch_operands = 1 : i64, tpu.core_type = #tpu.core_type<tc>, window_params = [{transform_indices = @transform_0, window_bounds = array<i64: 128, 128>}, {transform_indices = @transform_1, window_bounds = array<i64: 128, 128>}, {transform_indices = @transform_2, window_bounds = array<i64: 2, 128>}, {pipeline_mode = #tpu.pipeline_mode<synchronous>, transform_indices = @transform_3, window_bounds = array<i64: 128, 128>}, {pipeline_mode = #tpu.pipeline_mode<synchronous>, transform_indices = @transform_4, window_bounds = array<i64: 1, 128>}, {pipeline_mode = #tpu.pipeline_mode<synchronous>, transform_indices = @transform_5, window_bounds = array<i64: 1, 1>}, {pipeline_mode = #tpu.pipeline_mode<synchronous>, transform_indices = @transform_6, window_bounds = array<i64: 2, 128>}]} {
    %c0_i32 = arith.constant 0 : i32
    %0 = arith.cmpi eq, %arg0, %c0_i32 : i32
    %1 = arith.extui %0 : i1 to i32
    %c0_i32_0 = arith.constant 0 : i32
    %2 = arith.cmpi ne, %1, %c0_i32_0 : i32
    scf.if %2 {
      %cst_16 = arith.constant -1.000000e+30 : f32
      %31 = vector.broadcast %cst_16 : f32 to vector<2x128xf32>
      %c0_17 = arith.constant 0 : index
      %c0_18 = arith.constant 0 : index
      %32 = vector.load %arg8[%c0_17, %c0_18] : memref<2x128xf32, #tpu.memory_space<vmem>>, vector<2x128xf32>
      tpu.vector_store %arg8[%c0_17, %c0_18], %31 {strides = array<i32>} : memref<2x128xf32, #tpu.memory_space<vmem>>, vector<2x128xf32>,
    } else {
    }
    %c0 = arith.constant 0 : index
    %c0_1 = arith.constant 0 : index
    %3 = vector.load %arg6[%c0, %c0_1] : memref<1x1xf32, #tpu.memory_space<vmem>>, vector<1x1xf32>
    %cst = arith.constant 1.000000e+00 : f32
    %4 = vector.broadcast %cst : f32 to vector<1x1xf32>
    %5 = arith.subf %4, %3 : vector<1x1xf32>
    %c0_2 = arith.constant 0 : index
    %c0_3 = arith.constant 0 : index
    %6 = vector.load %arg1[%c0_2, %c0_3] : memref<128x128xf32, #tpu.memory_space<vmem>>, vector<128x128xf32>
    %7 = vector.broadcast %5 : vector<1x1xf32> to vector<128x128xf32>
    %8 = arith.mulf %7, %6 : vector<128x128xf32>
    %c0_4 = arith.constant 0 : index
    %c0_5 = arith.constant 0 : index
    %9 = vector.load %arg2[%c0_4, %c0_5] : memref<128x128xf32, #tpu.memory_space<vmem>>, vector<128x128xf32>
    %10 = vector.broadcast %3 : vector<1x1xf32> to vector<128x128xf32>
    %11 = arith.mulf %10, %9 : vector<128x128xf32>
    %12 = arith.addf %8, %11 : vector<128x128xf32>
    %c0_6 = arith.constant 0 : index
    %c0_7 = arith.constant 0 : index
    %13 = vector.load %arg3[%c0_6, %c0_7] : memref<2x128xf32, #tpu.memory_space<vmem>>, vector<2x128xf32>
    %14 = vector.shape_cast %13 : vector<2x128xf32> to vector<2x128x1xf32>
    %cst_8 = arith.constant 0.000000e+00 : f32
    %15 = vector.broadcast %cst_8 : f32 to vector<2x128x1xf32>
    %16 = arith.cmpf ogt, %14, %15 : vector<2x128x1xf32>
    %17 = vector.shape_cast %12 : vector<128x128xf32> to vector<1x128x128xf32>
    %cst_9 = arith.constant -1.000000e+30 : f32
    %18 = vector.shape_cast %16 : vector<2x128x1xi1> to vector<2x128x1xi1>
    %19 = vector.broadcast %18 : vector<2x128x1xi1> to vector<2x128x128xi1>
    %20 = vector.shape_cast %17 : vector<1x128x128xf32> to vector<1x128x128xf32>
    %21 = vector.broadcast %20 : vector<1x128x128xf32> to vector<2x128x128xf32>
    %22 = vector.broadcast %cst_9 : f32 to vector<2x128x128xf32>
    %23 = arith.select %19, %21, %22 : vector<2x128x128xi1>, vector<2x128x128xf32>
    %c0_10 = arith.constant 0 : index
    %c0_11 = arith.constant 0 : index
    %24 = vector.load %arg8[%c0_10, %c0_11] : memref<2x128xf32, #tpu.memory_space<vmem>>, vector<2x128xf32>
    %cst_12 = arith.constant dense<0xFF800000> : vector<2x128xf32>
    %25 = vector.multi_reduction <maximumf>, %23, %cst_12 [1] : vector<2x128x128xf32> to vector<2x128xf32>
    %26 = arith.maximumf %24, %25 : vector<2x128xf32>
    %c0_13 = arith.constant 0 : index
    %c0_14 = arith.constant 0 : index
    %27 = vector.load %arg8[%c0_13, %c0_14] : memref<2x128xf32, #tpu.memory_space<vmem>>, vector<2x128xf32>
    tpu.vector_store %arg8[%c0_13, %c0_14], %26 {strides = array<i32>} : memref<2x128xf32, #tpu.memory_space<vmem>>, vector<2x128xf32>,
    %c1_i32 = arith.constant 1 : i32
    %28 = arith.cmpi eq, %arg0, %c1_i32 : i32
    %29 = arith.extui %28 : i1 to i32
    %c0_i32_15 = arith.constant 0 : i32
    %30 = arith.cmpi ne, %29, %c0_i32_15 : i32
    scf.if %30 {
      %c0_16 = arith.constant 0 : index
      %c0_17 = arith.constant 0 : index
      %31 = vector.load %arg8[%c0_16, %c0_17] : memref<2x128xf32, #tpu.memory_space<vmem>>, vector<2x128xf32>
      %cst_18 = arith.constant -1.000000e+29 : f32
      %32 = vector.broadcast %cst_18 : f32 to vector<2x128xf32>
      %33 = arith.cmpf ogt, %31, %32 : vector<2x128xf32>
      %cst_19 = arith.constant 0.000000e+00 : f32
      %34 = vector.broadcast %cst_19 : f32 to vector<2x128xf32>
      %35 = arith.select %33, %31, %34 : vector<2x128xi1>, vector<2x128xf32>
      %c0_20 = arith.constant 0 : index
      %c0_21 = arith.constant 0 : index
      %36 = vector.load %arg4[%c0_20, %c0_21] : memref<128x128xf32, #tpu.memory_space<vmem>>, vector<128x128xf32>
      %cst_22 = arith.constant dense<0.000000e+00> : vector<2x128xf32>
      %37 = tpu.matmul %35, %36, %cst_22 {dimension_numbers = #tpu.dot_dimension_numbers<[1], [0], [0], [1], [0, 0, 1, 1], [], []>} : vector<2x128xf32>, vector<128x128xf32>, vector<2x128xf32> -> vector<2x128xf32>
      %c0_23 = arith.constant 0 : index
      %c0_24 = arith.constant 0 : index
      %38 = vector.load %arg5[%c0_23, %c0_24] : memref<1x128xf32, #tpu.memory_space<vmem>>, vector<1x128xf32>
      %39 = vector.broadcast %38 : vector<1x128xf32> to vector<2x128xf32>
      %40 = arith.addf %37, %39 : vector<2x128xf32>
      %c0_25 = arith.constant 0 : index
      %c0_26 = arith.constant 0 : index
      %41 = vector.load %arg7[%c0_25, %c0_26] : memref<2x128xf32, #tpu.memory_space<vmem>>, vector<2x128xf32>
      tpu.vector_store %arg7[%c0_25, %c0_26], %40 {strides = array<i32>} : memref<2x128xf32, #tpu.memory_space<vmem>>, vector<2x128xf32>,
    } else {
    }
    return
  }
  func.func @transform_0(%arg0: i32) -> (i32, i32) {
    %c0_i32 = arith.constant 0 : i32
    %c0_i32_0 = arith.constant 0 : i32
    return %arg0, %c0_i32 : i32, i32
  }
  func.func @transform_1(%arg0: i32) -> (i32, i32) {
    %c0_i32 = arith.constant 0 : i32
    %c0_i32_0 = arith.constant 0 : i32
    return %arg0, %c0_i32 : i32, i32
  }
  func.func @transform_2(%arg0: i32) -> (i32, i32) {
    %c0_i32 = arith.constant 0 : i32
    %c0_i32_0 = arith.constant 0 : i32
    return %c0_i32, %arg0 : i32, i32
  }
  func.func @transform_3(%arg0: i32) -> (i32, i32) {
    %c0_i32 = arith.constant 0 : i32
    %c0_i32_0 = arith.constant 0 : i32
    %c0_i32_1 = arith.constant 0 : i32
    return %c0_i32, %c0_i32_0 : i32, i32
  }
  func.func @transform_4(%arg0: i32) -> (i32, i32) {
    %c0_i32 = arith.constant 0 : i32
    %c0_i32_0 = arith.constant 0 : i32
    %c0_i32_1 = arith.constant 0 : i32
    return %c0_i32, %c0_i32_0 : i32, i32
  }
  func.func @transform_5(%arg0: i32) -> (i32, i32) {
    %c0_i32 = arith.constant 0 : i32
    %c0_i32_0 = arith.constant 0 : i32
    %c0_i32_1 = arith.constant 0 : i32
    return %c0_i32, %c0_i32_0 : i32, i32
  }
  func.func @transform_6(%arg0: i32) -> (i32, i32) {
    %c0_i32 = arith.constant 0 : i32
    %c0_i32_0 = arith.constant 0 : i32
    %c0_i32_1 = arith.constant 0 : i32
    return %c0_i32, %c0_i32_0 : i32, i32
  }
}

</mosaic_0001>

<llo_original>
// kernel: gnn_ptcldpred_merg_side_forward.4
$region0: #{gnn_ptcldpred_merg_side_forward.4}
  #allocation0 [shape = 'u32[]', space=smem, size = 0x4, offset = 0x4, fixed_abs, tag = 'smem constant byte address 0x4 - core index']
  #allocation1 [shape = 'u32[72,128]{1,0:T(1,128)}', space=vmem, size = 0x9000, scoped, tag = 'internal scratch']
  %s0 = inlined_call_operand.vmem [shape: f32[256,128], index: 0, kind: input, shape index: {}]
  %s1 = inlined_call_operand.vmem [shape: f32[128,128], index: 1, kind: input, shape index: {}]
  %s2 = inlined_call_operand.vmem [shape: f32[1,128], index: 2, kind: input, shape index: {}]
  %s3 = inlined_call_operand.vmem [shape: f32[128,128], index: 3, kind: input, shape index: {}]
  %s4 = inlined_call_operand.vmem [shape: f32[1,128], index: 4, kind: input, shape index: {}]
  %s5 = inlined_call_operand.vmem [shape: f32[128,128], index: 5, kind: input, shape index: {}]
  %s6 = inlined_call_operand.vmem [shape: f32[1,128], index: 6, kind: input, shape index: {}]
  %s7 = inlined_call_operand.vmem [shape: f32[128,128], index: 7, kind: input, shape index: {}]
  %s8 = inlined_call_operand.vmem [shape: f32[1,128], index: 8, kind: input, shape index: {}]
  %s9 = inlined_call_operand.vmem [shape: f32[256,128], index: 9, kind: output, shape index: {0}]
  %s10 = inlined_call_operand.vmem [shape: f32[256,128], index: 10, kind: output, shape index: {1}]
  %11 = xla_tuple %s9, %s10
  %s12 = sld [smem:[#allocation0]]
  $region77: #{gnn_ptcldpred_merg_side_forward.4} parent=0
    _
  %s14 = ssub.s32 1, %s12
  %s15 = scalar_select 0, %s14, %s12
  loop: start=0, step=1, limit=4
  $region2: #{gnn_ptcldpred_merg_side_forward.4} parent=0 // loop_pre_header
    _
  $region3: #{gnn_ptcldpred_merg_side_forward.4} parent=0 // loop_header
    %s17 = sphi 0, %s21
    %p18 = scmp.ge.s32.totalorder %s17, 4
    %s27 = sphi 0, %s29
    %s30 = sphi 0, %s27
    %s31 = sphi 0, %s30
    %s47 = sphi 0, %s31
    %s51 = sphi 0, %s51
    %s53 = sphi 0, %s51
    %s54 = sphi 0, %s53
    %s68 = sphi 0, %s54
    %s72 = sphi 0, %s72
    %s74 = sphi 0, %s72
    %s75 = sphi 0, %s74
    %s89 = sphi 0, %s75
    %s93 = sphi 0, %s93
    %s95 = sphi 0, %s93
    %s96 = sphi 0, %s95
    %s110 = sphi 0, %s96
    %s114 = sphi 0, %s114
    %s116 = sphi 0, %s114
    %s117 = sphi 0, %s116
    %s131 = sphi 0, %s117
    %s135 = sphi 0, %s135
    %s137 = sphi 0, %s135
    %s138 = sphi 0, %s137
    %s152 = sphi 0, %s138
    %s156 = sphi 0, %s156
    %s158 = sphi 0, %s156
    %s159 = sphi 0, %s158
    %s173 = sphi 0, %s159
    %s177 = sphi 0, %s177
    %s179 = sphi 0, %s177
    %s180 = sphi 0, %s179
    %s194 = sphi 0, %s180
    %s198 = sphi 0, %s198
    %s200 = sphi 0, %s198
    %s201 = sphi 0, %s200
    %s215 = sphi 0, %s201
    %s221 = sphi 0, %s223
    %s224 = sphi 0, %s221
    %s225 = sphi 0, %s224
    %s241 = sphi 0, %s225
    %s247 = sphi 0, %s249
    %s250 = sphi 0, %s247
    %s251 = sphi 0, %s250
    %s267 = sphi 0, %s251
  $region4: #{gnn_ptcldpred_merg_side_forward.4} parent=0 // loop_header_branch
    %20 = sbr.rel (%p18) target = $region8
  $region5: #{gnn_ptcldpred_merg_side_forward.4} parent=0 // loop_body
    %s22 = ssub.s32 %s17, 1
    %s23 = ssub.s32 %s17, 2
    %s24 = sadd.s32 %s17, 1
    %s25 = ssub.s32 %s17, %s24
    %p26 = scmp.eq.s32.totalorder %s25, 0
    %s28 = sadd.s32 %s27, 1
    %s29 = scalar_select %p26, %s27, %s28
    %p32 = pneg %p26
    %p33 = scmp.eq.s32.totalorder %s17, 1
    %p34 = por %p32, %p33
    %p35 = scmp.ne.s32.totalorder %s27, %s30
    %p36 = scmp.eq.s32.totalorder %s17, 0
    %p37 = por %p35, %p36
    %p38 = scmp.ne.s32.totalorder %s27, %s30
    %p39 = scmp.eq.s32.totalorder %s22, 1
    %p40 = por %p38, %p39
    %p41 = scmp.ne.s32.totalorder %s30, %s31
    %p42 = scmp.eq.s32.totalorder %s22, 0
    %p43 = por %p41, %p42
    %p44 = scmp.ne.s32.totalorder %s30, %s31
    %p45 = scmp.eq.s32.totalorder %s23, 1
    %p46 = por %p44, %p45
    %p48 = scmp.ne.s32.totalorder %s31, %s47
    %p49 = scmp.eq.s32.totalorder %s23, 0
    %p50 = por %p48, %p49
    %s52 = sadd.s32 %s51, 1
    %p55 = scmp.eq.s32.totalorder %s17, 1
    %p56 = scmp.ne.s32.totalorder %s51, %s53
    %p57 = scmp.eq.s32.totalorder %s17, 0
    %p58 = por %p56, %p57
    %p59 = scmp.ne.s32.totalorder %s51, %s53
    %p60 = scmp.eq.s32.totalorder %s22, 1
    %p61 = por %p59, %p60
    %p62 = scmp.ne.s32.totalorder %s53, %s54
    %p63 = scmp.eq.s32.totalorder %s22, 0
    %p64 = por %p62, %p63
    %p65 = scmp.ne.s32.totalorder %s53, %s54
    %p66 = scmp.eq.s32.totalorder %s23, 1
    %p67 = por %p65, %p66
    %p69 = scmp.ne.s32.totalorder %s54, %s68
    %p70 = scmp.eq.s32.totalorder %s23, 0
    %p71 = por %p69, %p70
    %s73 = sadd.s32 %s72, 1
    %p76 = scmp.eq.s32.totalorder %s17, 1
    %p77 = scmp.ne.s32.totalorder %s72, %s74
    %p78 = scmp.eq.s32.totalorder %s17, 0
    %p79 = por %p77, %p78
    %p80 = scmp.ne.s32.totalorder %s72, %s74
    %p81 = scmp.eq.s32.totalorder %s22, 1
    %p82 = por %p80, %p81
    %p83 = scmp.ne.s32.totalorder %s74, %s75
    %p84 = scmp.eq.s32.totalorder %s22, 0
    %p85 = por %p83, %p84
    %p86 = scmp.ne.s32.totalorder %s74, %s75
    %p87 = scmp.eq.s32.totalorder %s23, 1
    %p88 = por %p86, %p87
    %p90 = scmp.ne.s32.totalorder %s75, %s89
    %p91 = scmp.eq.s32.totalorder %s23, 0
    %p92 = por %p90, %p91
    %s94 = sadd.s32 %s93, 1
    %p97 = scmp.eq.s32.totalorder %s17, 1
    %p98 = scmp.ne.s32.totalorder %s93, %s95
    %p99 = scmp.eq.s32.totalorder %s17, 0
    %p100 = por %p98, %p99
    %p101 = scmp.ne.s32.totalorder %s93, %s95
    %p102 = scmp.eq.s32.totalorder %s22, 1
    %p103 = por %p101, %p102
    %p104 = scmp.ne.s32.totalorder %s95, %s96
    %p105 = scmp.eq.s32.totalorder %s22, 0
    %p106 = por %p104, %p105
    %p107 = scmp.ne.s32.totalorder %s95, %s96
    %p108 = scmp.eq.s32.totalorder %s23, 1
    %p109 = por %p107, %p108
    %p111 = scmp.ne.s32.totalorder %s96, %s110
    %p112 = scmp.eq.s32.totalorder %s23, 0
    %p113 = por %p111, %p112
    %s115 = sadd.s32 %s114, 1
    %p118 = scmp.eq.s32.totalorder %s17, 1
    %p119 = scmp.ne.s32.totalorder %s114, %s116
    %p120 = scmp.eq.s32.totalorder %s17, 0
    %p121 = por %p119, %p120
    %p122 = scmp.ne.s32.totalorder %s114, %s116
    %p123 = scmp.eq.s32.totalorder %s22, 1
    %p124 = por %p122, %p123
    %p125 = scmp.ne.s32.totalorder %s116, %s117
    %p126 = scmp.eq.s32.totalorder %s22, 0
    %p127 = por %p125, %p126
    %p128 = scmp.ne.s32.totalorder %s116, %s117
    %p129 = scmp.eq.s32.totalorder %s23, 1
    %p130 = por %p128, %p129
    %p132 = scmp.ne.s32.totalorder %s117, %s131
    %p133 = scmp.eq.s32.totalorder %s23, 0
    %p134 = por %p132, %p133
    %s136 = sadd.s32 %s135, 1
    %p139 = scmp.eq.s32.totalorder %s17, 1
    %p140 = scmp.ne.s32.totalorder %s135, %s137
    %p141 = scmp.eq.s32.totalorder %s17, 0
    %p142 = por %p140, %p141
    %p143 = scmp.ne.s32.totalorder %s135, %s137
    %p144 = scmp.eq.s32.totalorder %s22, 1
    %p145 = por %p143, %p144
    %p146 = scmp.ne.s32.totalorder %s137, %s138
    %p147 = scmp.eq.s32.totalorder %s22, 0
    %p148 = por %p146, %p147
    %p149 = scmp.ne.s32.totalorder %s137, %s138
    %p150 = scmp.eq.s32.totalorder %s23, 1
    %p151 = por %p149, %p150
    %p153 = scmp.ne.s32.totalorder %s138, %s152
    %p154 = scmp.eq.s32.totalorder %s23, 0
    %p155 = por %p153, %p154
    %s157 = sadd.s32 %s156, 1
    %p160 = scmp.eq.s32.totalorder %s17, 1
    %p161 = scmp.ne.s32.totalorder %s156, %s158
    %p162 = scmp.eq.s32.totalorder %s17, 0
    %p163 = por %p161, %p162
    %p164 = scmp.ne.s32.totalorder %s156, %s158
    %p165 = scmp.eq.s32.totalorder %s22, 1
    %p166 = por %p164, %p165
    %p167 = scmp.ne.s32.totalorder %s158, %s159
    %p168 = scmp.eq.s32.totalorder %s22, 0
    %p169 = por %p167, %p168
    %p170 = scmp.ne.s32.totalorder %s158, %s159
    %p171 = scmp.eq.s32.totalorder %s23, 1
    %p172 = por %p170, %p171
    %p174 = scmp.ne.s32.totalorder %s159, %s173
    %p175 = scmp.eq.s32.totalorder %s23, 0
    %p176 = por %p174, %p175
    %s178 = sadd.s32 %s177, 1
    %p181 = scmp.eq.s32.totalorder %s17, 1
    %p182 = scmp.ne.s32.totalorder %s177, %s179
    %p183 = scmp.eq.s32.totalorder %s17, 0
    %p184 = por %p182, %p183
    %p185 = scmp.ne.s32.totalorder %s177, %s179
    %p186 = scmp.eq.s32.totalorder %s22, 1
    %p187 = por %p185, %p186
    %p188 = scmp.ne.s32.totalorder %s179, %s180
    %p189 = scmp.eq.s32.totalorder %s22, 0
    %p190 = por %p188, %p189
    %p191 = scmp.ne.s32.totalorder %s179, %s180
    %p192 = scmp.eq.s32.totalorder %s23, 1
    %p193 = por %p191, %p192
    %p195 = scmp.ne.s32.totalorder %s180, %s194
    %p196 = scmp.eq.s32.totalorder %s23, 0
    %p197 = por %p195, %p196
    %s199 = sadd.s32 %s198, 1
    %p202 = scmp.eq.s32.totalorder %s17, 1
    %p203 = scmp.ne.s32.totalorder %s198, %s200
    %p204 = scmp.eq.s32.totalorder %s17, 0
    %p205 = por %p203, %p204
    %p206 = scmp.ne.s32.totalorder %s198, %s200
    %p207 = scmp.eq.s32.totalorder %s22, 1
    %p208 = por %p206, %p207
    %p209 = scmp.ne.s32.totalorder %s200, %s201
    %p210 = scmp.eq.s32.totalorder %s22, 0
    %p211 = por %p209, %p210
    %p212 = scmp.ne.s32.totalorder %s200, %s201
    %p213 = scmp.eq.s32.totalorder %s23, 1
    %p214 = por %p212, %p213
    %p216 = scmp.ne.s32.totalorder %s201, %s215
    %p217 = scmp.eq.s32.totalorder %s23, 0
    %p218 = por %p216, %p217
    %s219 = ssub.s32 %s17, %s24
    %p220 = scmp.eq.s32.totalorder %s219, 0
    %s222 = sadd.s32 %s221, 1
    %s223 = scalar_select %p220, %s221, %s222
    %p226 = pneg %p220
    %p227 = scmp.eq.s32.totalorder %s17, 1
    %p228 = por %p226, %p227
    %p229 = scmp.ne.s32.totalorder %s221, %s224
    %p230 = scmp.eq.s32.totalorder %s17, 0
    %p231 = por %p229, %p230
    %p232 = scmp.ne.s32.totalorder %s221, %s224
    %p233 = scmp.eq.s32.totalorder %s22, 1
    %p234 = por %p232, %p233
    %p235 = scmp.ne.s32.totalorder %s224, %s225
    %p236 = scmp.eq.s32.totalorder %s22, 0
    %p237 = por %p235, %p236
    %p238 = scmp.ne.s32.totalorder %s224, %s225
    %p239 = scmp.eq.s32.totalorder %s23, 1
    %p240 = por %p238, %p239
    %p242 = scmp.ne.s32.totalorder %s225, %s241
    %p243 = scmp.eq.s32.totalorder %s23, 0
    %p244 = por %p242, %p243
    %s245 = ssub.s32 %s17, %s24
    %p246 = scmp.eq.s32.totalorder %s245, 0
    %s248 = sadd.s32 %s247, 1
    %s249 = scalar_select %p246, %s247, %s248
    %p252 = pneg %p246
    %p253 = scmp.eq.s32.totalorder %s17, 1
    %p254 = por %p252, %p253
    %p255 = scmp.ne.s32.totalorder %s247, %s250
    %p256 = scmp.eq.s32.totalorder %s17, 0
    %p257 = por %p255, %p256
    %p258 = scmp.ne.s32.totalorder %s247, %s250
    %p259 = scmp.eq.s32.totalorder %s22, 1
    %p260 = por %p258, %p259
    %p261 = scmp.ne.s32.totalorder %s250, %s251
    %p262 = scmp.eq.s32.totalorder %s22, 0
    %p263 = por %p261, %p262
    %p264 = scmp.ne.s32.totalorder %s250, %s251
    %p265 = scmp.eq.s32.totalorder %s23, 1
    %p266 = por %p264, %p265
    %p268 = scmp.ne.s32.totalorder %s251, %s267
    %p269 = scmp.eq.s32.totalorder %s23, 0
    %p270 = por %p268, %p269
    %p271 = scmp.le.s32.totalorder 1, %s17
    %p272 = scmp.lt.s32.totalorder %s17, 3
    %p273 = pnand %p271, %p272
    %p274 = pneg %p273
    // Predicated region
    $region9: #{gnn_ptcldpred_merg_side_forward.4} parent=5 // pred_check
      _
    $region10: #{gnn_ptcldpred_merg_side_forward.4} parent=5 // pred_check_branch
      %276 = sbr.rel (%p273) target = $region12
    $region11: #{gnn_ptcldpred_merg_side_forward.4} parent=5 // pred_region
      %s277 = ssub.s32 %s17, 1
      // Predicated region
      $region13: #{gnn_ptcldpred_merg_side_forward.4} parent=11 // pred_check
        %p278 = pneg %p64
      $region14: #{gnn_ptcldpred_merg_side_forward.4} parent=11 // pred_check_branch
        %280 = sbr.rel (%p278) target = $region16
      $region15: #{gnn_ptcldpred_merg_side_forward.4} parent=11 // pred_region
        _
      $region16: #{gnn_ptcldpred_merg_side_forward.4} parent=11 // pred_fallthru
        _
      // Predicated region
      $region17: #{gnn_ptcldpred_merg_side_forward.4} parent=11 // pred_check
        %p281 = pneg %p85
      $region18: #{gnn_ptcldpred_merg_side_forward.4} parent=11 // pred_check_branch
        %283 = sbr.rel (%p281) target = $region20
      $region19: #{gnn_ptcldpred_merg_side_forward.4} parent=11 // pred_region
        _
      $region20: #{gnn_ptcldpred_merg_side_forward.4} parent=11 // pred_fallthru
        _
      // Predicated region
      $region21: #{gnn_ptcldpred_merg_side_forward.4} parent=11 // pred_check
        %p284 = pneg %p106
      $region22: #{gnn_ptcldpred_merg_side_forward.4} parent=11 // pred_check_branch
        %286 = sbr.rel (%p284) target = $region24
      $region23: #{gnn_ptcldpred_merg_side_forward.4} parent=11 // pred_region
        _
      $region24: #{gnn_ptcldpred_merg_side_forward.4} parent=11 // pred_fallthru
        _
      // Predicated region
      $region25: #{gnn_ptcldpred_merg_side_forward.4} parent=11 // pred_check
        %p287 = pneg %p127
      $region26: #{gnn_ptcldpred_merg_side_forward.4} parent=11 // pred_check_branch
        %289 = sbr.rel (%p287) target = $region28
      $region27: #{gnn_ptcldpred_merg_side_forward.4} parent=11 // pred_region
        _
      $region28: #{gnn_ptcldpred_merg_side_forward.4} parent=11 // pred_fallthru
        _
      // Predicated region
      $region29: #{gnn_ptcldpred_merg_side_forward.4} parent=11 // pred_check
        %p290 = pneg %p148
      $region30: #{gnn_ptcldpred_merg_side_forward.4} parent=11 // pred_check_branch
        %292 = sbr.rel (%p290) target = $region32
      $region31: #{gnn_ptcldpred_merg_side_forward.4} parent=11 // pred_region
        _
      $region32: #{gnn_ptcldpred_merg_side_forward.4} parent=11 // pred_fallthru
        _
      // Predicated region
      $region33: #{gnn_ptcldpred_merg_side_forward.4} parent=11 // pred_check
        %p293 = pneg %p169
      $region34: #{gnn_ptcldpred_merg_side_forward.4} parent=11 // pred_check_branch
        %295 = sbr.rel (%p293) target = $region36
      $region35: #{gnn_ptcldpred_merg_side_forward.4} parent=11 // pred_region
        _
      $region36: #{gnn_ptcldpred_merg_side_forward.4} parent=11 // pred_fallthru
        _
      // Predicated region
      $region37: #{gnn_ptcldpred_merg_side_forward.4} parent=11 // pred_check
        %p296 = pneg %p190
      $region38: #{gnn_ptcldpred_merg_side_forward.4} parent=11 // pred_check_branch
        %298 = sbr.rel (%p296) target = $region40
      $region39: #{gnn_ptcldpred_merg_side_forward.4} parent=11 // pred_region
        _
      $region40: #{gnn_ptcldpred_merg_side_forward.4} parent=11 // pred_fallthru
        _
      // Predicated region
      $region41: #{gnn_ptcldpred_merg_side_forward.4} parent=11 // pred_check
        %p299 = pneg %p211
      $region42: #{gnn_ptcldpred_merg_side_forward.4} parent=11 // pred_check_branch
        %301 = sbr.rel (%p299) target = $region44
      $region43: #{gnn_ptcldpred_merg_side_forward.4} parent=11 // pred_region
        _
      $region44: #{gnn_ptcldpred_merg_side_forward.4} parent=11 // pred_fallthru
        _
    $region12: #{gnn_ptcldpred_merg_side_forward.4} parent=5 // pred_fallthru
      _
    %p302 = scmp.lt.s32.totalorder %s17, 2
    // Predicated region
    $region45: #{gnn_ptcldpred_merg_side_forward.4} parent=5 // pred_check
      %p303 = pneg %p302
    $region46: #{gnn_ptcldpred_merg_side_forward.4} parent=5 // pred_check_branch
      %305 = sbr.rel (%p303) target = $region48
    $region47: #{gnn_ptcldpred_merg_side_forward.4} parent=5 // pred_region
      // Predicated region
      $region49: #{gnn_ptcldpred_merg_side_forward.4} parent=47 // pred_check
        %p306 = pneg %p37
      $region50: #{gnn_ptcldpred_merg_side_forward.4} parent=47 // pred_check_branch
        %308 = sbr.rel (%p306) target = $region52
      $region51: #{gnn_ptcldpred_merg_side_forward.4} parent=47 // pred_region
        %s309 = smul.u32 16, %s17
        %p310 = scmp.lt.s32.totalorder %s309, 31
        %s311 = scalar_select %p310, %s309, 31
        %s312 = smul.addr %s311, 8
        %s313 = scalar_lea.vmem %s0, %s312
        %s314 = smul.u32 16, %s17
      $region52: #{gnn_ptcldpred_merg_side_forward.4} parent=47 // pred_fallthru
        _
    $region48: #{gnn_ptcldpred_merg_side_forward.4} parent=5 // pred_fallthru
      _
    %p315 = scmp.le.s32.totalorder 1, %s17
    %p316 = scmp.lt.s32.totalorder %s17, 3
    %p317 = pnand %p315, %p316
    %p318 = pneg %p317
    // Predicated region
    $region53: #{gnn_ptcldpred_merg_side_forward.4} parent=5 // pred_check
      _
    $region54: #{gnn_ptcldpred_merg_side_forward.4} parent=5 // pred_check_branch
      %320 = sbr.rel (%p317) target = $region56
    $region55: #{gnn_ptcldpred_merg_side_forward.4} parent=5 // pred_region
      %s321 = ssub.s32 %s17, 1
      %s322 = smul.u32 16, %s22
      %p323 = scmp.lt.s32.totalorder %s322, 31
      %s324 = scalar_select %p323, %s322, 31
      %s325 = smul.addr %s324, 8
      %s326 = scalar_lea.vmem %s0, %s325
      %p327 = pneg %p43
      %p328 = pneg %p40
      %p329 = pneg %p64
      %p330 = pneg %p61
      %p331 = pneg %p85
      %p332 = pneg %p82
      %p333 = pneg %p106
      %p334 = pneg %p103
      %p335 = pneg %p127
      %p336 = pneg %p124
      %p337 = pneg %p148
      %p338 = pneg %p145
      %p339 = pneg %p169
      %p340 = pneg %p166
      %p341 = pneg %p190
      %p342 = pneg %p187
      %p343 = pneg %p211
      %p344 = pneg %p208
      %p345 = pneg %p237
      %p346 = pneg %p234
      %s347 = smul.u32 16, %s22
      %p348 = scmp.lt.s32.totalorder %s347, 31
      %s349 = scalar_select %p348, %s347, 31
      %s350 = smul.addr %s349, 8
      %s351 = scalar_lea.vmem %s9, %s350
      %p352 = pneg %p263
      %p353 = pneg %p260
      %s354 = smul.u32 16, %s22
      %p355 = scmp.lt.s32.totalorder %s354, 31
      %s356 = scalar_select %p355, %s354, 31
      %s357 = smul.addr %s356, 8
      %s358 = scalar_lea.vmem %s10, %s357
      %s359 = smul.u32 16, %s22
      %p360 = scmp.lt.s32.totalorder %s359, 31
      %s361 = scalar_select %p360, %s359, 31
      %s362 = smul.addr %s361, 8
      %s363 = scalar_lea.vmem %s0, %s362
      %s364 = smul.u32 16, %s22
      %s365 = smul.u32 16, %s22
      %p366 = scmp.lt.s32.totalorder %s365, 31
      %s367 = scalar_select %p366, %s365, 31
      %s368 = smul.addr %s367, 8
      %s369 = scalar_lea.vmem %s9, %s368
      %s370 = smul.u32 16, %s22
      %s371 = smul.u32 16, %s22
      %p372 = scmp.lt.s32.totalorder %s371, 31
      %s373 = scalar_select %p372, %s371, 31
      %s374 = smul.addr %s373, 8
      %s375 = scalar_lea.vmem %s10, %s374
      %s376 = smul.u32 16, %s22
      %v377 = vld [vmem:[%s363] sm:$0xff]
      %v378 = vld [vmem:[%s363 + $0x8] sm:$0xff]
      %v379 = vld [vmem:[%s363 + $0x10] sm:$0xff]
      %v380 = vld [vmem:[%s363 + $0x18] sm:$0xff]
      %v381 = vld [vmem:[%s363 + $0x20] sm:$0xff]
      %v382 = vld [vmem:[%s363 + $0x28] sm:$0xff]
      %v383 = vld [vmem:[%s363 + $0x30] sm:$0xff]
      %v384 = vld [vmem:[%s363 + $0x38] sm:$0xff]
      %v385 = vld [vmem:[%s363 + $0x40] sm:$0xff]
      %v386 = vld [vmem:[%s363 + $0x48] sm:$0xff]
      %v387 = vld [vmem:[%s363 + $0x50] sm:$0xff]
      %v388 = vld [vmem:[%s363 + $0x58] sm:$0xff]
      %v389 = vld [vmem:[%s363 + $0x60] sm:$0xff]
      %v390 = vld [vmem:[%s363 + $0x68] sm:$0xff]
      %v391 = vld [vmem:[%s363 + $0x70] sm:$0xff]
      %v392 = vld [vmem:[%s363 + $0x78] sm:$0xff]
      %v393 = vld [vmem:[%s1] sm:$0xff]
      %v394 = vld [vmem:[%s1 + $0x8] sm:$0xff]
      %v395 = vld [vmem:[%s1 + $0x10] sm:$0xff]
      %v396 = vld [vmem:[%s1 + $0x18] sm:$0xff]
      %v397 = vld [vmem:[%s1 + $0x20] sm:$0xff]
      %v398 = vld [vmem:[%s1 + $0x28] sm:$0xff]
      %v399 = vld [vmem:[%s1 + $0x30] sm:$0xff]
      %v400 = vld [vmem:[%s1 + $0x38] sm:$0xff]
      %v401 = vld [vmem:[%s1 + $0x40] sm:$0xff]
      %v402 = vld [vmem:[%s1 + $0x48] sm:$0xff]
      %v403 = vld [vmem:[%s1 + $0x50] sm:$0xff]
      %v404 = vld [vmem:[%s1 + $0x58] sm:$0xff]
      %v405 = vld [vmem:[%s1 + $0x60] sm:$0xff]
      %v406 = vld [vmem:[%s1 + $0x68] sm:$0xff]
      %v407 = vld [vmem:[%s1 + $0x70] sm:$0xff]
      %v408 = vld [vmem:[%s1 + $0x78] sm:$0xff]
      %v409 = vld [vmem:[%s2] sm:$0x1]
      %v411 = vperm.slane %v409, 0
      %413 = vmatpush.msra.mxu0 %v408
      %414 = vmatpush.msra.mxu0 %v407
      %415 = vmatpush.msra.mxu0 %v406
      %416 = vmatpush.msra.mxu0 %v405
      %417 = vmatpush.msra.mxu0 %v404
      %418 = vmatpush.msra.mxu0 %v403
      %419 = vmatpush.msra.mxu0 %v402
      %420 = vmatpush.msra.mxu0 %v401
      %421 = vmatpush.msra.mxu0 %v400
      %422 = vmatpush.msra.mxu0 %v399
      %423 = vmatpush.msra.mxu0 %v398
      %424 = vmatpush.msra.mxu0 %v397
      %425 = vmatpush.msra.mxu0 %v396
      %426 = vmatpush.msra.mxu0 %v395
      %427 = vmatpush.msra.mxu0 %v394
      %428 = vmatpush.msra.mxu0 %v393
      %429 = vmatmul.f32.gmra.mxu0 %v377
      %v430 = vpop.f32.mrf.mxu0
      %v431 = vadd.f32 %v411, %v430
      %432 = vmatmul.f32.gmra.mxu0 %v378
      %v433 = vpop.f32.mrf.mxu0
      %v434 = vadd.f32 %v411, %v433
      %435 = vmatmul.f32.gmra.mxu0 %v379
      %v436 = vpop.f32.mrf.mxu0
      %v437 = vadd.f32 %v411, %v436
      %438 = vmatmul.f32.gmra.mxu0 %v380
      %v439 = vpop.f32.mrf.mxu0
      %v440 = vadd.f32 %v411, %v439
      %441 = vmatmul.f32.gmra.mxu0 %v381
      %v442 = vpop.f32.mrf.mxu0
      %v443 = vadd.f32 %v411, %v442
      %444 = vmatmul.f32.gmra.mxu0 %v382
      %v445 = vpop.f32.mrf.mxu0
      %v446 = vadd.f32 %v411, %v445
      %447 = vmatmul.f32.gmra.mxu0 %v383
      %v448 = vpop.f32.mrf.mxu0
      %v449 = vadd.f32 %v411, %v448
      %450 = vmatmul.f32.gmra.mxu0 %v384
      %v451 = vpop.f32.mrf.mxu0
      %v452 = vadd.f32 %v411, %v451
      %453 = vmatmul.f32.gmra.mxu0 %v385
      %v454 = vpop.f32.mrf.mxu0
      %v455 = vadd.f32 %v411, %v454
      %456 = vmatmul.f32.gmra.mxu0 %v386
      %v457 = vpop.f32.mrf.mxu0
      %v458 = vadd.f32 %v411, %v457
      %459 = vmatmul.f32.gmra.mxu0 %v387
      %v460 = vpop.f32.mrf.mxu0
      %v461 = vadd.f32 %v411, %v460
      %462 = vmatmul.f32.gmra.mxu0 %v388
      %v463 = vpop.f32.mrf.mxu0
      %v464 = vadd.f32 %v411, %v463
      %465 = vmatmul.f32.gmra.mxu0 %v389
      %v466 = vpop.f32.mrf.mxu0
      %v467 = vadd.f32 %v411, %v466
      %468 = vmatmul.f32.gmra.mxu0 %v390
      %v469 = vpop.f32.mrf.mxu0
      %v470 = vadd.f32 %v411, %v469
      %471 = vmatmul.f32.gmra.mxu0 %v391
      %v472 = vpop.f32.mrf.mxu0
      %v473 = vadd.f32 %v411, %v472
      %474 = vmatmul.f32.gmra.mxu0 %v392
      %v475 = vpop.f32.mrf.mxu0
      %v476 = vadd.f32 %v411, %v475
      %477 = vdwg.mxu0
      %478 = vst [vmem:[%s369] sm:$0xff] %v431
      %479 = vst [vmem:[%s369 + $0x8] sm:$0xff] %v434
      %480 = vst [vmem:[%s369 + $0x10] sm:$0xff] %v437
      %481 = vst [vmem:[%s369 + $0x18] sm:$0xff] %v440
      %482 = vst [vmem:[%s369 + $0x20] sm:$0xff] %v443
      %483 = vst [vmem:[%s369 + $0x28] sm:$0xff] %v446
      %484 = vst [vmem:[%s369 + $0x30] sm:$0xff] %v449
      %485 = vst [vmem:[%s369 + $0x38] sm:$0xff] %v452
      %486 = vst [vmem:[%s369 + $0x40] sm:$0xff] %v455
      %487 = vst [vmem:[%s369 + $0x48] sm:$0xff] %v458
      %488 = vst [vmem:[%s369 + $0x50] sm:$0xff] %v461
      %489 = vst [vmem:[%s369 + $0x58] sm:$0xff] %v464
      %490 = vst [vmem:[%s369 + $0x60] sm:$0xff] %v467
      %491 = vst [vmem:[%s369 + $0x68] sm:$0xff] %v470
      %492 = vst [vmem:[%s369 + $0x70] sm:$0xff] %v473
      %493 = vst [vmem:[%s369 + $0x78] sm:$0xff] %v476
      %v494 = vld [vmem:[%s3] sm:$0xff]
      %v495 = vld [vmem:[%s3 + $0x8] sm:$0xff]
      %v496 = vld [vmem:[%s3 + $0x10] sm:$0xff]
      %v497 = vld [vmem:[%s3 + $0x18] sm:$0xff]
      %v498 = vld [vmem:[%s3 + $0x20] sm:$0xff]
      %v499 = vld [vmem:[%s3 + $0x28] sm:$0xff]
      %v500 = vld [vmem:[%s3 + $0x30] sm:$0xff]
      %v501 = vld [vmem:[%s3 + $0x38] sm:$0xff]
      %v502 = vld [vmem:[%s3 + $0x40] sm:$0xff]
      %v503 = vld [vmem:[%s3 + $0x48] sm:$0xff]
      %v504 = vld [vmem:[%s3 + $0x50] sm:$0xff]
      %v505 = vld [vmem:[%s3 + $0x58] sm:$0xff]
      %v506 = vld [vmem:[%s3 + $0x60] sm:$0xff]
      %v507 = vld [vmem:[%s3 + $0x68] sm:$0xff]
      %v508 = vld [vmem:[%s3 + $0x70] sm:$0xff]
      %v509 = vld [vmem:[%s3 + $0x78] sm:$0xff]
      %v510 = vld [vmem:[%s4] sm:$0x1]
      %v512 = vperm.slane %v510, 0
      %514 = vmatpush.msra.mxu0 %v509
      %515 = vmatpush.msra.mxu0 %v508
      %516 = vmatpush.msra.mxu0 %v507
      %517 = vmatpush.msra.mxu0 %v506
      %518 = vmatpush.msra.mxu0 %v505
      %519 = vmatpush.msra.mxu0 %v504
      %520 = vmatpush.msra.mxu0 %v503
      %521 = vmatpush.msra.mxu0 %v502
      %522 = vmatpush.msra.mxu0 %v501
      %523 = vmatpush.msra.mxu0 %v500
      %524 = vmatpush.msra.mxu0 %v499
      %525 = vmatpush.msra.mxu0 %v498
      %526 = vmatpush.msra.mxu0 %v497
      %527 = vmatpush.msra.mxu0 %v496
      %528 = vmatpush.msra.mxu0 %v495
      %529 = vmatpush.msra.mxu0 %v494
      %530 = vmatmul.f32.gmra.mxu0 %v377
      %v531 = vpop.f32.mrf.mxu0
      %v532 = vadd.f32 %v512, %v531
      %533 = vmatmul.f32.gmra.mxu0 %v378
      %v534 = vpop.f32.mrf.mxu0
      %v535 = vadd.f32 %v512, %v534
      %536 = vmatmul.f32.gmra.mxu0 %v379
      %v537 = vpop.f32.mrf.mxu0
      %v538 = vadd.f32 %v512, %v537
      %539 = vmatmul.f32.gmra.mxu0 %v380
      %v540 = vpop.f32.mrf.mxu0
      %v541 = vadd.f32 %v512, %v540
      %542 = vmatmul.f32.gmra.mxu0 %v381
      %v543 = vpop.f32.mrf.mxu0
      %v544 = vadd.f32 %v512, %v543
      %545 = vmatmul.f32.gmra.mxu0 %v382
      %v546 = vpop.f32.mrf.mxu0
      %v547 = vadd.f32 %v512, %v546
      %548 = vmatmul.f32.gmra.mxu0 %v383
      %v549 = vpop.f32.mrf.mxu0
      %v550 = vadd.f32 %v512, %v549
      %551 = vmatmul.f32.gmra.mxu0 %v384
      %v552 = vpop.f32.mrf.mxu0
      %v553 = vadd.f32 %v512, %v552
      %554 = vmatmul.f32.gmra.mxu0 %v385
      %v555 = vpop.f32.mrf.mxu0
      %v556 = vadd.f32 %v512, %v555
      %557 = vmatmul.f32.gmra.mxu0 %v386
      %v558 = vpop.f32.mrf.mxu0
      %v559 = vadd.f32 %v512, %v558
      %560 = vmatmul.f32.gmra.mxu0 %v387
      %v561 = vpop.f32.mrf.mxu0
      %v562 = vadd.f32 %v512, %v561
      %563 = vmatmul.f32.gmra.mxu0 %v388
      %v564 = vpop.f32.mrf.mxu0
      %v565 = vadd.f32 %v512, %v564
      %566 = vmatmul.f32.gmra.mxu0 %v389
      %v567 = vpop.f32.mrf.mxu0
      %v568 = vadd.f32 %v512, %v567
      %569 = vmatmul.f32.gmra.mxu0 %v390
      %v570 = vpop.f32.mrf.mxu0
      %v571 = vadd.f32 %v512, %v570
      %572 = vmatmul.f32.gmra.mxu0 %v391
      %v573 = vpop.f32.mrf.mxu0
      %v574 = vadd.f32 %v512, %v573
      %575 = vmatmul.f32.gmra.mxu0 %v392
      %v576 = vpop.f32.mrf.mxu0
      %v577 = vadd.f32 %v512, %v576
      %578 = vdwg.mxu0
      %v579 = vmax.f32 %v532, 0.0
      %v580 = vmax.f32 %v535, 0.0
      %v581 = vmax.f32 %v538, 0.0
      %v582 = vmax.f32 %v541, 0.0
      %v583 = vmax.f32 %v544, 0.0
      %v584 = vmax.f32 %v547, 0.0
      %v585 = vmax.f32 %v550, 0.0
      %v586 = vmax.f32 %v553, 0.0
      %v587 = vmax.f32 %v556, 0.0
      %v588 = vmax.f32 %v559, 0.0
      %v589 = vmax.f32 %v562, 0.0
      %v590 = vmax.f32 %v565, 0.0
      %v591 = vmax.f32 %v568, 0.0
      %v592 = vmax.f32 %v571, 0.0
      %v593 = vmax.f32 %v574, 0.0
      %v594 = vmax.f32 %v577, 0.0
      %v595 = vld [vmem:[%s5] sm:$0xff]
      %v596 = vld [vmem:[%s5 + $0x8] sm:$0xff]
      %v597 = vld [vmem:[%s5 + $0x10] sm:$0xff]
      %v598 = vld [vmem:[%s5 + $0x18] sm:$0xff]
      %v599 = vld [vmem:[%s5 + $0x20] sm:$0xff]
      %v600 = vld [vmem:[%s5 + $0x28] sm:$0xff]
      %v601 = vld [vmem:[%s5 + $0x30] sm:$0xff]
      %v602 = vld [vmem:[%s5 + $0x38] sm:$0xff]
      %v603 = vld [vmem:[%s5 + $0x40] sm:$0xff]
      %v604 = vld [vmem:[%s5 + $0x48] sm:$0xff]
      %v605 = vld [vmem:[%s5 + $0x50] sm:$0xff]
      %v606 = vld [vmem:[%s5 + $0x58] sm:$0xff]
      %v607 = vld [vmem:[%s5 + $0x60] sm:$0xff]
      %v608 = vld [vmem:[%s5 + $0x68] sm:$0xff]
      %v609 = vld [vmem:[%s5 + $0x70] sm:$0xff]
      %v610 = vld [vmem:[%s5 + $0x78] sm:$0xff]
      %v611 = vld [vmem:[%s6] sm:$0x1]
      %v613 = vperm.slane %v611, 0
      %615 = vmatpush.msra.mxu0 %v610
      %616 = vmatpush.msra.mxu0 %v609
      %617 = vmatpush.msra.mxu0 %v608
      %618 = vmatpush.msra.mxu0 %v607
      %619 = vmatpush.msra.mxu0 %v606
      %620 = vmatpush.msra.mxu0 %v605
      %621 = vmatpush.msra.mxu0 %v604
      %622 = vmatpush.msra.mxu0 %v603
      %623 = vmatpush.msra.mxu0 %v602
      %624 = vmatpush.msra.mxu0 %v601
      %625 = vmatpush.msra.mxu0 %v600
      %626 = vmatpush.msra.mxu0 %v599
      %627 = vmatpush.msra.mxu0 %v598
      %628 = vmatpush.msra.mxu0 %v597
      %629 = vmatpush.msra.mxu0 %v596
      %630 = vmatpush.msra.mxu0 %v595
      %631 = vmatmul.f32.gmra.mxu0 %v579
      %v632 = vpop.f32.mrf.mxu0
      %v633 = vadd.f32 %v613, %v632
      %634 = vmatmul.f32.gmra.mxu0 %v580
      %v635 = vpop.f32.mrf.mxu0
      %v636 = vadd.f32 %v613, %v635
      %637 = vmatmul.f32.gmra.mxu0 %v581
      %v638 = vpop.f32.mrf.mxu0
      %v639 = vadd.f32 %v613, %v638
      %640 = vmatmul.f32.gmra.mxu0 %v582
      %v641 = vpop.f32.mrf.mxu0
      %v642 = vadd.f32 %v613, %v641
      %643 = vmatmul.f32.gmra.mxu0 %v583
      %v644 = vpop.f32.mrf.mxu0
      %v645 = vadd.f32 %v613, %v644
      %646 = vmatmul.f32.gmra.mxu0 %v584
      %v647 = vpop.f32.mrf.mxu0
      %v648 = vadd.f32 %v613, %v647
      %649 = vmatmul.f32.gmra.mxu0 %v585
      %v650 = vpop.f32.mrf.mxu0
      %v651 = vadd.f32 %v613, %v650
      %652 = vmatmul.f32.gmra.mxu0 %v586
      %v653 = vpop.f32.mrf.mxu0
      %v654 = vadd.f32 %v613, %v653
      %655 = vmatmul.f32.gmra.mxu0 %v587
      %v656 = vpop.f32.mrf.mxu0
      %v657 = vadd.f32 %v613, %v656
      %658 = vmatmul.f32.gmra.mxu0 %v588
      %v659 = vpop.f32.mrf.mxu0
      %v660 = vadd.f32 %v613, %v659
      %661 = vmatmul.f32.gmra.mxu0 %v589
      %v662 = vpop.f32.mrf.mxu0
      %v663 = vadd.f32 %v613, %v662
      %664 = vmatmul.f32.gmra.mxu0 %v590
      %v665 = vpop.f32.mrf.mxu0
      %v666 = vadd.f32 %v613, %v665
      %667 = vmatmul.f32.gmra.mxu0 %v591
      %v668 = vpop.f32.mrf.mxu0
      %v669 = vadd.f32 %v613, %v668
      %670 = vmatmul.f32.gmra.mxu0 %v592
      %v671 = vpop.f32.mrf.mxu0
      %v672 = vadd.f32 %v613, %v671
      %673 = vmatmul.f32.gmra.mxu0 %v593
      %v674 = vpop.f32.mrf.mxu0
      %v675 = vadd.f32 %v613, %v674
      %676 = vmatmul.f32.gmra.mxu0 %v594
      %v677 = vpop.f32.mrf.mxu0
      %v678 = vadd.f32 %v613, %v677
      %679 = vdwg.mxu0
      %v680 = vmax.f32 %v633, 0.0
      %v681 = vmax.f32 %v636, 0.0
      %v682 = vmax.f32 %v639, 0.0
      %v683 = vmax.f32 %v642, 0.0
      %v684 = vmax.f32 %v645, 0.0
      %v685 = vmax.f32 %v648, 0.0
      %v686 = vmax.f32 %v651, 0.0
      %v687 = vmax.f32 %v654, 0.0
      %v688 = vmax.f32 %v657, 0.0
      %v689 = vmax.f32 %v660, 0.0
      %v690 = vmax.f32 %v663, 0.0
      %v691 = vmax.f32 %v666, 0.0
      %v692 = vmax.f32 %v669, 0.0
      %v693 = vmax.f32 %v672, 0.0
      %v694 = vmax.f32 %v675, 0.0
      %v695 = vmax.f32 %v678, 0.0
      %v696 = vld [vmem:[%s7] sm:$0xff]
      %v697 = vld [vmem:[%s7 + $0x8] sm:$0xff]
      %v698 = vld [vmem:[%s7 + $0x10] sm:$0xff]
      %v699 = vld [vmem:[%s7 + $0x18] sm:$0xff]
      %v700 = vld [vmem:[%s7 + $0x20] sm:$0xff]
      %v701 = vld [vmem:[%s7 + $0x28] sm:$0xff]
      %v702 = vld [vmem:[%s7 + $0x30] sm:$0xff]
      %v703 = vld [vmem:[%s7 + $0x38] sm:$0xff]
      %v704 = vld [vmem:[%s7 + $0x40] sm:$0xff]
      %v705 = vld [vmem:[%s7 + $0x48] sm:$0xff]
      %v706 = vld [vmem:[%s7 + $0x50] sm:$0xff]
      %v707 = vld [vmem:[%s7 + $0x58] sm:$0xff]
      %v708 = vld [vmem:[%s7 + $0x60] sm:$0xff]
      %v709 = vld [vmem:[%s7 + $0x68] sm:$0xff]
      %v710 = vld [vmem:[%s7 + $0x70] sm:$0xff]
      %v711 = vld [vmem:[%s7 + $0x78] sm:$0xff]
      %v712 = vld [vmem:[%s8] sm:$0x1]
      %v714 = vperm.slane %v712, 0
      %716 = vmatpush.msra.mxu0 %v711
      %717 = vmatpush.msra.mxu0 %v710
      %718 = vmatpush.msra.mxu0 %v709
      %719 = vmatpush.msra.mxu0 %v708
      %720 = vmatpush.msra.mxu0 %v707
      %721 = vmatpush.msra.mxu0 %v706
      %722 = vmatpush.msra.mxu0 %v705
      %723 = vmatpush.msra.mxu0 %v704
      %724 = vmatpush.msra.mxu0 %v703
      %725 = vmatpush.msra.mxu0 %v702
      %726 = vmatpush.msra.mxu0 %v701
      %727 = vmatpush.msra.mxu0 %v700
      %728 = vmatpush.msra.mxu0 %v699
      %729 = vmatpush.msra.mxu0 %v698
      %730 = vmatpush.msra.mxu0 %v697
      %731 = vmatpush.msra.mxu0 %v696
      %732 = vmatmul.f32.gmra.mxu0 %v680
      %v733 = vpop.f32.mrf.mxu0
      %v734 = vadd.f32 %v714, %v733
      %735 = vmatmul.f32.gmra.mxu0 %v681
      %v736 = vpop.f32.mrf.mxu0
      %v737 = vadd.f32 %v714, %v736
      %738 = vmatmul.f32.gmra.mxu0 %v682
      %v739 = vpop.f32.mrf.mxu0
      %v740 = vadd.f32 %v714, %v739
      %741 = vmatmul.f32.gmra.mxu0 %v683
      %v742 = vpop.f32.mrf.mxu0
      %v743 = vadd.f32 %v714, %v742
      %744 = vmatmul.f32.gmra.mxu0 %v684
      %v745 = vpop.f32.mrf.mxu0
      %v746 = vadd.f32 %v714, %v745
      %747 = vmatmul.f32.gmra.mxu0 %v685
      %v748 = vpop.f32.mrf.mxu0
      %v749 = vadd.f32 %v714, %v748
      %750 = vmatmul.f32.gmra.mxu0 %v686
      %v751 = vpop.f32.mrf.mxu0
      %v752 = vadd.f32 %v714, %v751
      %753 = vmatmul.f32.gmra.mxu0 %v687
      %v754 = vpop.f32.mrf.mxu0
      %v755 = vadd.f32 %v714, %v754
      %756 = vmatmul.f32.gmra.mxu0 %v688
      %v757 = vpop.f32.mrf.mxu0
      %v758 = vadd.f32 %v714, %v757
      %759 = vmatmul.f32.gmra.mxu0 %v689
      %v760 = vpop.f32.mrf.mxu0
      %v761 = vadd.f32 %v714, %v760
      %762 = vmatmul.f32.gmra.mxu0 %v690
      %v763 = vpop.f32.mrf.mxu0
      %v764 = vadd.f32 %v714, %v763
      %765 = vmatmul.f32.gmra.mxu0 %v691
      %v766 = vpop.f32.mrf.mxu0
      %v767 = vadd.f32 %v714, %v766
      %768 = vmatmul.f32.gmra.mxu0 %v692
      %v769 = vpop.f32.mrf.mxu0
      %v770 = vadd.f32 %v714, %v769
      %771 = vmatmul.f32.gmra.mxu0 %v693
      %v772 = vpop.f32.mrf.mxu0
      %v773 = vadd.f32 %v714, %v772
      %774 = vmatmul.f32.gmra.mxu0 %v694
      %v775 = vpop.f32.mrf.mxu0
      %v776 = vadd.f32 %v714, %v775
      %777 = vmatmul.f32.gmra.mxu0 %v695
      %v778 = vpop.f32.mrf.mxu0
      %v779 = vadd.f32 %v714, %v778
      %780 = vdwg.mxu0
      %781 = vst [vmem:[%s375] sm:$0xff] %v734
      %782 = vst [vmem:[%s375 + $0x8] sm:$0xff] %v737
      %783 = vst [vmem:[%s375 + $0x10] sm:$0xff] %v740
      %784 = vst [vmem:[%s375 + $0x18] sm:$0xff] %v743
      %785 = vst [vmem:[%s375 + $0x20] sm:$0xff] %v746
      %786 = vst [vmem:[%s375 + $0x28] sm:$0xff] %v749
      %787 = vst [vmem:[%s375 + $0x30] sm:$0xff] %v752
      %788 = vst [vmem:[%s375 + $0x38] sm:$0xff] %v755
      %789 = vst [vmem:[%s375 + $0x40] sm:$0xff] %v758
      %790 = vst [vmem:[%s375 + $0x48] sm:$0xff] %v761
      %791 = vst [vmem:[%s375 + $0x50] sm:$0xff] %v764
      %792 = vst [vmem:[%s375 + $0x58] sm:$0xff] %v767
      %793 = vst [vmem:[%s375 + $0x60] sm:$0xff] %v770
      %794 = vst [vmem:[%s375 + $0x68] sm:$0xff] %v773
      %795 = vst [vmem:[%s375 + $0x70] sm:$0xff] %v776
      %796 = vst [vmem:[%s375 + $0x78] sm:$0xff] %v779
      %s797 = smul.u32 16, %s22
      %p798 = scmp.lt.s32.totalorder %s797, 31
      %s799 = scalar_select %p798, %s797, 31
      %s800 = smul.addr %s799, 8
      %s801 = scalar_lea.vmem %s9, %s800
      %s802 = smul.u32 16, %s22
      %p803 = scmp.lt.s32.totalorder %s802, 31
      %s804 = scalar_select %p803, %s802, 31
      %s805 = smul.addr %s804, 8
      %s806 = scalar_lea.vmem %s10, %s805
      // Predicated region
      $region57: #{gnn_ptcldpred_merg_side_forward.4} parent=55 // pred_check
        %p807 = pneg %p234
      $region58: #{gnn_ptcldpred_merg_side_forward.4} parent=55 // pred_check_branch
        %809 = sbr.rel (%p807) target = $region60
      $region59: #{gnn_ptcldpred_merg_side_forward.4} parent=55 // pred_region
        %s810 = smul.u32 16, %s22
      $region60: #{gnn_ptcldpred_merg_side_forward.4} parent=55 // pred_fallthru
        _
      // Predicated region
      $region61: #{gnn_ptcldpred_merg_side_forward.4} parent=55 // pred_check
        %p811 = pneg %p260
      $region62: #{gnn_ptcldpred_merg_side_forward.4} parent=55 // pred_check_branch
        %813 = sbr.rel (%p811) target = $region64
      $region63: #{gnn_ptcldpred_merg_side_forward.4} parent=55 // pred_region
        %s814 = smul.u32 16, %s22
      $region64: #{gnn_ptcldpred_merg_side_forward.4} parent=55 // pred_fallthru
        _
    $region56: #{gnn_ptcldpred_merg_side_forward.4} parent=5 // pred_fallthru
      _
    %p815 = scmp.le.s32.totalorder 2, %s17
    // Predicated region
    $region65: #{gnn_ptcldpred_merg_side_forward.4} parent=5 // pred_check
      %p816 = pneg %p815
    $region66: #{gnn_ptcldpred_merg_side_forward.4} parent=5 // pred_check_branch
      %818 = sbr.rel (%p816) target = $region68
    $region67: #{gnn_ptcldpred_merg_side_forward.4} parent=5 // pred_region
      %s819 = ssub.s32 %s17, 2
      // Predicated region
      $region69: #{gnn_ptcldpred_merg_side_forward.4} parent=67 // pred_check
        %p820 = pneg %p240
      $region70: #{gnn_ptcldpred_merg_side_forward.4} parent=67 // pred_check_branch
        %822 = sbr.rel (%p820) target = $region72
      $region71: #{gnn_ptcldpred_merg_side_forward.4} parent=67 // pred_region
        %s823 = smul.u32 16, %s23
        %p824 = scmp.lt.s32.totalorder %s823, 31
        %s825 = scalar_select %p824, %s823, 31
        %s826 = smul.addr %s825, 8
        %s827 = scalar_lea.vmem %s9, %s826
      $region72: #{gnn_ptcldpred_merg_side_forward.4} parent=67 // pred_fallthru
        _
      // Predicated region
      $region73: #{gnn_ptcldpred_merg_side_forward.4} parent=67 // pred_check
        %p828 = pneg %p266
      $region74: #{gnn_ptcldpred_merg_side_forward.4} parent=67 // pred_check_branch
        %830 = sbr.rel (%p828) target = $region76
      $region75: #{gnn_ptcldpred_merg_side_forward.4} parent=67 // pred_region
        %s831 = smul.u32 16, %s23
        %p832 = scmp.lt.s32.totalorder %s831, 31
        %s833 = scalar_select %p832, %s831, 31
        %s834 = smul.addr %s833, 8
        %s835 = scalar_lea.vmem %s10, %s834
      $region76: #{gnn_ptcldpred_merg_side_forward.4} parent=67 // pred_fallthru
        _
    $region68: #{gnn_ptcldpred_merg_side_forward.4} parent=5 // pred_fallthru
      _
  $region6: #{gnn_ptcldpred_merg_side_forward.4} parent=0 // loop_footer
    %s21 = sadd.s32 1, %s17
  $region7: #{gnn_ptcldpred_merg_side_forward.4} parent=0 // loop_footer_branch
    %16 = sbr.rel target = $region3
  $region8: #{gnn_ptcldpred_merg_side_forward.4} parent=0 // loop_exit
    _

// kernel: gnn_ptcldpred_merg_side_forward.5
$region0: #{gnn_ptcldpred_merg_side_forward.5}
  #allocation0 [shape = 'u32[]', space=smem, size = 0x4, offset = 0x4, fixed_abs, tag = 'smem constant byte address 0x4 - core index']
  #allocation1 [shape = 'u32[72,128]{1,0:T(1,128)}', space=vmem, size = 0x9000, scoped, tag = 'internal scratch']
  #allocation2 [shape = 'f32[128,128]{1,0:T(8,128)}', space=vmem, size = 0x10000, scoped, tag = 'scratch operand']
  %s0 = inlined_call_operand.vmem [shape: bf16[256,256], index: 0, kind: input, shape index: {}]
  %s1 = inlined_call_operand.vmem [shape: bf16[256,128], index: 1, kind: input, shape index: {}]
  %s2 = inlined_call_operand.vmem [shape: f32[256,128], index: 2, kind: input, shape index: {}]
  %s3 = inlined_call_operand.vmem [shape: f32[128,128], index: 3, kind: input, shape index: {}]
  %s4 = inlined_call_operand.vmem [shape: f32[1,128], index: 4, kind: input, shape index: {}]
  %s5 = inlined_call_operand.vmem [shape: f32[256,128], index: 5, kind: output, shape index: {}]
  %s6 = sld [smem:[#allocation0]]
  $region102: #{gnn_ptcldpred_merg_side_forward.5} parent=0
    _
  %s8 = ssub.s32 1, %s6
  %s9 = scalar_select 0, %s8, %s6
  $region1: #{gnn_ptcldpred_merg_side_forward.5} parent=0
    #allocation3 [shape = 'u8[65536]{0}', space=vmem, size = 0x10000, scoped, tag = 'input window, operand 0']
    loop: start=0, step=1, limit=6
    $region2: #{gnn_ptcldpred_merg_side_forward.5} parent=1 // loop_pre_header
      _
    $region3: #{gnn_ptcldpred_merg_side_forward.5} parent=1 // loop_header
      %s11 = sphi 0, %s15
      %p12 = scmp.ge.s32.totalorder %s11, 6
      %s18 = sphi 0, %s30
      %s19 = sphi 0, %s26
      %s20 = sphi 0, %s18
      %s21 = sphi 0, %s19
      %s22 = sphi 0, %s20
      %s23 = sphi 0, %s21
      %s35 = sphi 0, %s37
      %s38 = sphi 0, %s35
      %s39 = sphi 0, %s38
      %s55 = sphi 0, %s39
      %s61 = sphi 0, %s63
      %s64 = sphi 0, %s61
      %s65 = sphi 0, %s64
      %s81 = sphi 0, %s65
      %s87 = sphi 0, %s89
      %s90 = sphi 0, %s87
      %s91 = sphi 0, %s90
      %s107 = sphi 0, %s91
      %s111 = sphi 0, %s111
      %s113 = sphi 0, %s111
      %s114 = sphi 0, %s113
      %s128 = sphi 0, %s114
      %s132 = sphi 0, %s132
      %s134 = sphi 0, %s132
      %s135 = sphi 0, %s134
      %s149 = sphi 0, %s135
      %s155 = sphi 0, %s157
      %s158 = sphi 0, %s155
      %s159 = sphi 0, %s158
      %s175 = sphi 0, %s159
    $region4: #{gnn_ptcldpred_merg_side_forward.5} parent=1 // loop_header_branch
      %14 = sbr.rel (%p12) target = $region8
    $region5: #{gnn_ptcldpred_merg_side_forward.5} parent=1 // loop_body
      %s16 = ssub.s32 %s11, 1
      %s17 = ssub.s32 %s11, 2
      %s24 = sadd.s32 1, %s19
      %p25 = scmp.ge.s32.totalorder %s24, 2
      %s26 = scalar_select %p25, 0, %s24
      %s27 = sadd.s32 1, %s18
      %s28 = scalar_select %p25, %s27, %s18
      %p29 = scmp.ge.s32.totalorder %s28, 2
      %s30 = scalar_select %p29, 0, %s28
      %s31 = ssub.s32 %s18, %s30
      %s32 = ssub.s32 %s19, %s26
      %s33 = sor.u32 %s31, %s32
      %p34 = scmp.eq.s32.totalorder %s33, 0
      %s36 = sadd.s32 %s35, 1
      %s37 = scalar_select %p34, %s35, %s36
      %p40 = pneg %p34
      %p41 = scmp.eq.s32.totalorder %s11, 3
      %p42 = por %p40, %p41
      %p43 = scmp.ne.s32.totalorder %s35, %s38
      %p44 = scmp.eq.s32.totalorder %s11, 0
      %p45 = por %p43, %p44
      %p46 = scmp.ne.s32.totalorder %s35, %s38
      %p47 = scmp.eq.s32.totalorder %s16, 3
      %p48 = por %p46, %p47
      %p49 = scmp.ne.s32.totalorder %s38, %s39
      %p50 = scmp.eq.s32.totalorder %s16, 0
      %p51 = por %p49, %p50
      %p52 = scmp.ne.s32.totalorder %s38, %s39
      %p53 = scmp.eq.s32.totalorder %s17, 3
      %p54 = por %p52, %p53
      %p56 = scmp.ne.s32.totalorder %s39, %s55
      %p57 = scmp.eq.s32.totalorder %s17, 0
      %p58 = por %p56, %p57
      %s59 = ssub.s32 %s19, %s26
      %p60 = scmp.eq.s32.totalorder %s59, 0
      %s62 = sadd.s32 %s61, 1
      %s63 = scalar_select %p60, %s61, %s62
      %p66 = pneg %p60
      %p67 = scmp.eq.s32.totalorder %s11, 3
      %p68 = por %p66, %p67
      %p69 = scmp.ne.s32.totalorder %s61, %s64
      %p70 = scmp.eq.s32.totalorder %s11, 0
      %p71 = por %p69, %p70
      %p72 = scmp.ne.s32.totalorder %s61, %s64
      %p73 = scmp.eq.s32.totalorder %s16, 3
      %p74 = por %p72, %p73
      %p75 = scmp.ne.s32.totalorder %s64, %s65
      %p76 = scmp.eq.s32.totalorder %s16, 0
      %p77 = por %p75, %p76
      %p78 = scmp.ne.s32.totalorder %s64, %s65
      %p79 = scmp.eq.s32.totalorder %s17, 3
      %p80 = por %p78, %p79
      %p82 = scmp.ne.s32.totalorder %s65, %s81
      %p83 = scmp.eq.s32.totalorder %s17, 0
      %p84 = por %p82, %p83
      %s85 = ssub.s32 %s18, %s30
      %p86 = scmp.eq.s32.totalorder %s85, 0
      %s88 = sadd.s32 %s87, 1
      %s89 = scalar_select %p86, %s87, %s88
      %p92 = pneg %p86
      %p93 = scmp.eq.s32.totalorder %s11, 3
      %p94 = por %p92, %p93
      %p95 = scmp.ne.s32.totalorder %s87, %s90
      %p96 = scmp.eq.s32.totalorder %s11, 0
      %p97 = por %p95, %p96
      %p98 = scmp.ne.s32.totalorder %s87, %s90
      %p99 = scmp.eq.s32.totalorder %s16, 3
      %p100 = por %p98, %p99
      %p101 = scmp.ne.s32.totalorder %s90, %s91
      %p102 = scmp.eq.s32.totalorder %s16, 0
      %p103 = por %p101, %p102
      %p104 = scmp.ne.s32.totalorder %s90, %s91
      %p105 = scmp.eq.s32.totalorder %s17, 3
      %p106 = por %p104, %p105
      %p108 = scmp.ne.s32.totalorder %s91, %s107
      %p109 = scmp.eq.s32.totalorder %s17, 0
      %p110 = por %p108, %p109
      %s112 = sadd.s32 %s111, 1
      %p115 = scmp.eq.s32.totalorder %s11, 3
      %p116 = scmp.ne.s32.totalorder %s111, %s113
      %p117 = scmp.eq.s32.totalorder %s11, 0
      %p118 = por %p116, %p117
      %p119 = scmp.ne.s32.totalorder %s111, %s113
      %p120 = scmp.eq.s32.totalorder %s16, 3
      %p121 = por %p119, %p120
      %p122 = scmp.ne.s32.totalorder %s113, %s114
      %p123 = scmp.eq.s32.totalorder %s16, 0
      %p124 = por %p122, %p123
      %p125 = scmp.ne.s32.totalorder %s113, %s114
      %p126 = scmp.eq.s32.totalorder %s17, 3
      %p127 = por %p125, %p126
      %p129 = scmp.ne.s32.totalorder %s114, %s128
      %p130 = scmp.eq.s32.totalorder %s17, 0
      %p131 = por %p129, %p130
      %s133 = sadd.s32 %s132, 1
      %p136 = scmp.eq.s32.totalorder %s11, 3
      %p137 = scmp.ne.s32.totalorder %s132, %s134
      %p138 = scmp.eq.s32.totalorder %s11, 0
      %p139 = por %p137, %p138
      %p140 = scmp.ne.s32.totalorder %s132, %s134
      %p141 = scmp.eq.s32.totalorder %s16, 3
      %p142 = por %p140, %p141
      %p143 = scmp.ne.s32.totalorder %s134, %s135
      %p144 = scmp.eq.s32.totalorder %s16, 0
      %p145 = por %p143, %p144
      %p146 = scmp.ne.s32.totalorder %s134, %s135
      %p147 = scmp.eq.s32.totalorder %s17, 3
      %p148 = por %p146, %p147
      %p150 = scmp.ne.s32.totalorder %s135, %s149
      %p151 = scmp.eq.s32.totalorder %s17, 0
      %p152 = por %p150, %p151
      %s153 = ssub.s32 %s18, %s30
      %p154 = scmp.eq.s32.totalorder %s153, 0
      %s156 = sadd.s32 %s155, 1
      %s157 = scalar_select %p154, %s155, %s156
      %p160 = pneg %p154
      %p161 = scmp.eq.s32.totalorder %s11, 3
      %p162 = por %p160, %p161
      %p163 = scmp.ne.s32.totalorder %s155, %s158
      %p164 = scmp.eq.s32.totalorder %s11, 0
      %p165 = por %p163, %p164
      %p166 = scmp.ne.s32.totalorder %s155, %s158
      %p167 = scmp.eq.s32.totalorder %s16, 3
      %p168 = por %p166, %p167
      %p169 = scmp.ne.s32.totalorder %s158, %s159
      %p170 = scmp.eq.s32.totalorder %s16, 0
      %p171 = por %p169, %p170
      %p172 = scmp.ne.s32.totalorder %s158, %s159
      %p173 = scmp.eq.s32.totalorder %s17, 3
      %p174 = por %p172, %p173
      %p176 = scmp.ne.s32.totalorder %s159, %s175
      %p177 = scmp.eq.s32.totalorder %s17, 0
      %p178 = por %p176, %p177
      %p179 = scmp.le.s32.totalorder 1, %s11
      %p180 = scmp.lt.s32.totalorder %s11, 5
      %p181 = pnand %p179, %p180
      %p182 = pneg %p181
      // Predicated region
      $region9: #{gnn_ptcldpred_merg_side_forward.5} parent=5 // pred_check
        _
      $region10: #{gnn_ptcldpred_merg_side_forward.5} parent=5 // pred_check_branch
        %184 = sbr.rel (%p181) target = $region12
      $region11: #{gnn_ptcldpred_merg_side_forward.5} parent=5 // pred_region
        %s185 = ssub.s32 %s11, 1
        // Predicated region
        $region13: #{gnn_ptcldpred_merg_side_forward.5} parent=11 // pred_check
          %p186 = pneg %p124
        $region14: #{gnn_ptcldpred_merg_side_forward.5} parent=11 // pred_check_branch
          %188 = sbr.rel (%p186) target = $region16
        $region15: #{gnn_ptcldpred_merg_side_forward.5} parent=11 // pred_region
          _
        $region16: #{gnn_ptcldpred_merg_side_forward.5} parent=11 // pred_fallthru
          _
        // Predicated region
        $region17: #{gnn_ptcldpred_merg_side_forward.5} parent=11 // pred_check
          %p189 = pneg %p145
        $region18: #{gnn_ptcldpred_merg_side_forward.5} parent=11 // pred_check_branch
          %191 = sbr.rel (%p189) target = $region20
        $region19: #{gnn_ptcldpred_merg_side_forward.5} parent=11 // pred_region
          _
        $region20: #{gnn_ptcldpred_merg_side_forward.5} parent=11 // pred_fallthru
          _
      $region12: #{gnn_ptcldpred_merg_side_forward.5} parent=5 // pred_fallthru
        _
      %p192 = scmp.lt.s32.totalorder %s11, 4
      // Predicated region
      $region21: #{gnn_ptcldpred_merg_side_forward.5} parent=5 // pred_check
        %p193 = pneg %p192
      $region22: #{gnn_ptcldpred_merg_side_forward.5} parent=5 // pred_check_branch
        %195 = sbr.rel (%p193) target = $region24
      $region23: #{gnn_ptcldpred_merg_side_forward.5} parent=5 // pred_region
        // Predicated region
        $region25: #{gnn_ptcldpred_merg_side_forward.5} parent=23 // pred_check
          %p196 = pneg %p45
        $region26: #{gnn_ptcldpred_merg_side_forward.5} parent=23 // pred_check_branch
          %198 = sbr.rel (%p196) target = $region28
        $region27: #{gnn_ptcldpred_merg_side_forward.5} parent=23 // pred_region
          %s199 = sand.u32 %s35, 1
          %s200 = sand.u32 %s35, 1
          %s201 = smul.addr %s200, 64
          %s202 = scalar_lea.vmem [#allocation3], %s201
          %s203 = smul.u32 16, %s18
          %s204 = smul.addr %s203, 2
          %s205 = sadd.s32 %s19, %s204
          %s206 = smul.addr %s205, 4
          %s207 = scalar_lea.vmem %s0, %s206
          // Predicated region
          $region29: #{gnn_ptcldpred_merg_side_forward.5} parent=27 // pred_check
            _
          $region30: #{gnn_ptcldpred_merg_side_forward.5} parent=27 // pred_check_branch
            %209 = sbr.rel (0) target = $region32
          $region31: #{gnn_ptcldpred_merg_side_forward.5} parent=27 // pred_region
            // Predicated region
            $region33: #{gnn_ptcldpred_merg_side_forward.5} parent=31 // pred_check
              _
            $region34: #{gnn_ptcldpred_merg_side_forward.5} parent=31 // pred_check_branch
              %211 = sbr.rel target = $region36
            $region35: #{gnn_ptcldpred_merg_side_forward.5} parent=31 // pred_region
              // Predicated region
              $region48: #{gnn_ptcldpred_merg_side_forward.5} parent=35 // pred_check
                _
              $region49: #{gnn_ptcldpred_merg_side_forward.5} parent=35 // pred_check_branch
                %257 = sbr.rel (0) target = $region51
              $region50: #{gnn_ptcldpred_merg_side_forward.5} parent=35 // pred_region
                loop: start=0, step=1, limit=1
                $region52: #{gnn_ptcldpred_merg_side_forward.5} parent=50 // loop_pre_header
                  _
                $region53: #{gnn_ptcldpred_merg_side_forward.5} parent=50 // loop_header
                  %s259 = sphi 0, %s263
                  %p260 = scmp.ge.s32.totalorder %s259, 1
                  %s264 = sphi %s207, %s207
                  %s265 = sphi %s202, %s202
                $region54: #{gnn_ptcldpred_merg_side_forward.5} parent=50 // loop_header_branch
                  %262 = sbr.rel (%p260) target = $region58
                $region55: #{gnn_ptcldpred_merg_side_forward.5} parent=50 // loop_body
                  _
                $region56: #{gnn_ptcldpred_merg_side_forward.5} parent=50 // loop_footer
                  %s263 = sadd.s32 1, %s259
                $region57: #{gnn_ptcldpred_merg_side_forward.5} parent=50 // loop_footer_branch
                  %258 = sbr.rel target = $region53
                $region58: #{gnn_ptcldpred_merg_side_forward.5} parent=50 // loop_exit
                  _
                %s267 = ssub.s32 16, 1
                loop: start=0, step=1, limit=1
                $region59: #{gnn_ptcldpred_merg_side_forward.5} parent=50 // loop_pre_header
                  _
                $region60: #{gnn_ptcldpred_merg_side_forward.5} parent=50 // loop_header
                  %s269 = sphi 0, %s273
                  %p270 = scmp.ge.s32.totalorder %s269, 1
                  %s274 = sphi %s207, %s207
                  %s275 = sphi %s202, %s202
                $region61: #{gnn_ptcldpred_merg_side_forward.5} parent=50 // loop_header_branch
                  %272 = sbr.rel (%p270) target = $region65
                $region62: #{gnn_ptcldpred_merg_side_forward.5} parent=50 // loop_body
                  %v276 = vld [vmem:[%s274] sm:%s267]
                  %277 = vst [vmem:[%s275] sm:%s267] %v276
                  %v278 = vld [vmem:[%s274 + $0x8] sm:%s267]
                  %279 = vst [vmem:[%s275 + $0x4] sm:%s267] %v278
                  %v280 = vld [vmem:[%s274 + $0x10] sm:%s267]
                  %281 = vst [vmem:[%s275 + $0x8] sm:%s267] %v280
                  %v282 = vld [vmem:[%s274 + $0x18] sm:%s267]
                  %283 = vst [vmem:[%s275 + $0xc] sm:%s267] %v282
                  %v284 = vld [vmem:[%s274 + $0x20] sm:%s267]
                  %285 = vst [vmem:[%s275 + $0x10] sm:%s267] %v284
                  %v286 = vld [vmem:[%s274 + $0x28] sm:%s267]
                  %287 = vst [vmem:[%s275 + $0x14] sm:%s267] %v286
                  %v288 = vld [vmem:[%s274 + $0x30] sm:%s267]
                  %289 = vst [vmem:[%s275 + $0x18] sm:%s267] %v288
                  %v290 = vld [vmem:[%s274 + $0x38] sm:%s267]
                  %291 = vst [vmem:[%s275 + $0x1c] sm:%s267] %v290
                  %v292 = vld [vmem:[%s274 + $0x40] sm:%s267]
                  %293 = vst [vmem:[%s275 + $0x20] sm:%s267] %v292
                  %v294 = vld [vmem:[%s274 + $0x48] sm:%s267]
                  %295 = vst [vmem:[%s275 + $0x24] sm:%s267] %v294
                  %v296 = vld [vmem:[%s274 + $0x50] sm:%s267]
                  %297 = vst [vmem:[%s275 + $0x28] sm:%s267] %v296
                  %v298 = vld [vmem:[%s274 + $0x58] sm:%s267]
                  %299 = vst [vmem:[%s275 + $0x2c] sm:%s267] %v298
                  %v300 = vld [vmem:[%s274 + $0x60] sm:%s267]
                  %301 = vst [vmem:[%s275 + $0x30] sm:%s267] %v300
                  %v302 = vld [vmem:[%s274 + $0x68] sm:%s267]
                  %303 = vst [vmem:[%s275 + $0x34] sm:%s267] %v302
                  %v304 = vld [vmem:[%s274 + $0x70] sm:%s267]
                  %305 = vst [vmem:[%s275 + $0x38] sm:%s267] %v304
                  %v306 = vld [vmem:[%s274 + $0x78] sm:%s267]
                  %307 = vst [vmem:[%s275 + $0x3c] sm:%s267] %v306
                $region63: #{gnn_ptcldpred_merg_side_forward.5} parent=50 // loop_footer
                  %s273 = sadd.s32 1, %s269
                $region64: #{gnn_ptcldpred_merg_side_forward.5} parent=50 // loop_footer_branch
                  %268 = sbr.rel target = $region60
                $region65: #{gnn_ptcldpred_merg_side_forward.5} parent=50 // loop_exit
                  _
              $region51: #{gnn_ptcldpred_merg_side_forward.5} parent=35 // pred_fallthru
                _
            $region36: #{gnn_ptcldpred_merg_side_forward.5} parent=31 // pred_fallthru
              _
            // Predicated region
            $region37: #{gnn_ptcldpred_merg_side_forward.5} parent=31 // pred_check
              _
            $region38: #{gnn_ptcldpred_merg_side_forward.5} parent=31 // pred_check_branch
              %213 = sbr.rel (0) target = $region40
            $region39: #{gnn_ptcldpred_merg_side_forward.5} parent=31 // pred_region
              %s215 = ssub.s32 16, 1
              loop: start=0, step=1, limit=1
              $region41: #{gnn_ptcldpred_merg_side_forward.5} parent=39 // loop_pre_header
                _
              $region42: #{gnn_ptcldpred_merg_side_forward.5} parent=39 // loop_header
                %s217 = sphi 0, %s221
                %p218 = scmp.ge.s32.totalorder %s217, 1
                %s222 = sphi %s207, %s207
                %s223 = sphi %s202, %s202
              $region43: #{gnn_ptcldpred_merg_side_forward.5} parent=39 // loop_header_branch
                %220 = sbr.rel (%p218) target = $region47
              $region44: #{gnn_ptcldpred_merg_side_forward.5} parent=39 // loop_body
                %v224 = vld [vmem:[%s222] sm:%s215]
                %225 = vst [vmem:[%s223] sm:%s215] %v224
                %v226 = vld [vmem:[%s222 + $0x8] sm:%s215]
                %227 = vst [vmem:[%s223 + $0x4] sm:%s215] %v226
                %v228 = vld [vmem:[%s222 + $0x10] sm:%s215]
                %229 = vst [vmem:[%s223 + $0x8] sm:%s215] %v228
                %v230 = vld [vmem:[%s222 + $0x18] sm:%s215]
                %231 = vst [vmem:[%s223 + $0xc] sm:%s215] %v230
                %v232 = vld [vmem:[%s222 + $0x20] sm:%s215]
                %233 = vst [vmem:[%s223 + $0x10] sm:%s215] %v232
                %v234 = vld [vmem:[%s222 + $0x28] sm:%s215]
                %235 = vst [vmem:[%s223 + $0x14] sm:%s215] %v234
                %v236 = vld [vmem:[%s222 + $0x30] sm:%s215]
                %237 = vst [vmem:[%s223 + $0x18] sm:%s215] %v236
                %v238 = vld [vmem:[%s222 + $0x38] sm:%s215]
                %239 = vst [vmem:[%s223 + $0x1c] sm:%s215] %v238
                %v240 = vld [vmem:[%s222 + $0x40] sm:%s215]
                %241 = vst [vmem:[%s223 + $0x20] sm:%s215] %v240
                %v242 = vld [vmem:[%s222 + $0x48] sm:%s215]
                %243 = vst [vmem:[%s223 + $0x24] sm:%s215] %v242
                %v244 = vld [vmem:[%s222 + $0x50] sm:%s215]
                %245 = vst [vmem:[%s223 + $0x28] sm:%s215] %v244
                %v246 = vld [vmem:[%s222 + $0x58] sm:%s215]
                %247 = vst [vmem:[%s223 + $0x2c] sm:%s215] %v246
                %v248 = vld [vmem:[%s222 + $0x60] sm:%s215]
                %249 = vst [vmem:[%s223 + $0x30] sm:%s215] %v248
                %v250 = vld [vmem:[%s222 + $0x68] sm:%s215]
                %251 = vst [vmem:[%s223 + $0x34] sm:%s215] %v250
                %v252 = vld [vmem:[%s222 + $0x70] sm:%s215]
                %253 = vst [vmem:[%s223 + $0x38] sm:%s215] %v252
                %v254 = vld [vmem:[%s222 + $0x78] sm:%s215]
                %255 = vst [vmem:[%s223 + $0x3c] sm:%s215] %v254
              $region45: #{gnn_ptcldpred_merg_side_forward.5} parent=39 // loop_footer
                %s221 = sadd.s32 1, %s217
              $region46: #{gnn_ptcldpred_merg_side_forward.5} parent=39 // loop_footer_branch
                %216 = sbr.rel target = $region42
              $region47: #{gnn_ptcldpred_merg_side_forward.5} parent=39 // loop_exit
                _
            $region40: #{gnn_ptcldpred_merg_side_forward.5} parent=31 // pred_fallthru
              _
          $region32: #{gnn_ptcldpred_merg_side_forward.5} parent=27 // pred_fallthru
            _
          %308 = vnop
        $region28: #{gnn_ptcldpred_merg_side_forward.5} parent=23 // pred_fallthru
          _
        // Predicated region
        $region66: #{gnn_ptcldpred_merg_side_forward.5} parent=23 // pred_check
          %p309 = pneg %p71
        $region67: #{gnn_ptcldpred_merg_side_forward.5} parent=23 // pred_check_branch
          %311 = sbr.rel (%p309) target = $region69
        $region68: #{gnn_ptcldpred_merg_side_forward.5} parent=23 // pred_region
          %s312 = smul.u32 16, %s19
          %p313 = scmp.lt.s32.totalorder %s312, 31
          %s314 = scalar_select %p313, %s312, 31
          %s315 = smul.addr %s314, 4
          %s316 = scalar_lea.vmem %s1, %s315
          %s317 = smul.u32 16, %s19
        $region69: #{gnn_ptcldpred_merg_side_forward.5} parent=23 // pred_fallthru
          _
        // Predicated region
        $region70: #{gnn_ptcldpred_merg_side_forward.5} parent=23 // pred_check
          %p318 = pneg %p97
        $region71: #{gnn_ptcldpred_merg_side_forward.5} parent=23 // pred_check_branch
          %320 = sbr.rel (%p318) target = $region73
        $region72: #{gnn_ptcldpred_merg_side_forward.5} parent=23 // pred_region
          %s321 = smul.u32 16, %s18
          %p322 = scmp.lt.s32.totalorder %s321, 31
          %s323 = scalar_select %p322, %s321, 31
          %s324 = smul.addr %s323, 8
          %s325 = scalar_lea.vmem %s2, %s324
          %s326 = smul.u32 16, %s18
        $region73: #{gnn_ptcldpred_merg_side_forward.5} parent=23 // pred_fallthru
          _
      $region24: #{gnn_ptcldpred_merg_side_forward.5} parent=5 // pred_fallthru
        _
      %p327 = scmp.le.s32.totalorder 1, %s11
      %p328 = scmp.lt.s32.totalorder %s11, 5
      %p329 = pnand %p327, %p328
      %p330 = pneg %p329
      // Predicated region
      $region74: #{gnn_ptcldpred_merg_side_forward.5} parent=5 // pred_check
        _
      $region75: #{gnn_ptcldpred_merg_side_forward.5} parent=5 // pred_check_branch
        %332 = sbr.rel (%p329) target = $region77
      $region76: #{gnn_ptcldpred_merg_side_forward.5} parent=5 // pred_region
        %s333 = ssub.s32 %s11, 1
        %s334 = sand.u32 %s38, 1
        %s335 = sand.u32 %s38, 1
        %s336 = smul.addr %s335, 64
        %s337 = scalar_lea.vmem [#allocation3], %s336
        // Predicated region
        $region78: #{gnn_ptcldpred_merg_side_forward.5} parent=76 // pred_check
          %p338 = pneg %p51
        $region79: #{gnn_ptcldpred_merg_side_forward.5} parent=76 // pred_check_branch
          %340 = sbr.rel (%p338) target = $region81
        $region80: #{gnn_ptcldpred_merg_side_forward.5} parent=76 // pred_region
          _
        $region81: #{gnn_ptcldpred_merg_side_forward.5} parent=76 // pred_fallthru
          _
        %s341 = sand.u32 %s38, 1
        %s342 = sand.u32 %s38, 1
        %s343 = smul.addr %s342, 64
        %s344 = scalar_lea.vmem [#allocation3], %s343
        %p345 = pneg %p51
        %p346 = pneg %p48
        %s347 = smul.u32 16, %s21
        %p348 = scmp.lt.s32.totalorder %s347, 31
        %s349 = scalar_select %p348, %s347, 31
        %s350 = smul.addr %s349, 4
        %s351 = scalar_lea.vmem %s1, %s350
        %p352 = pneg %p77
        %p353 = pneg %p74
        %s354 = smul.u32 16, %s20
        %p355 = scmp.lt.s32.totalorder %s354, 31
        %s356 = scalar_select %p355, %s354, 31
        %s357 = smul.addr %s356, 8
        %s358 = scalar_lea.vmem %s2, %s357
        %p359 = pneg %p103
        %p360 = pneg %p100
        %p361 = pneg %p124
        %p362 = pneg %p121
        %p363 = pneg %p145
        %p364 = pneg %p142
        %p365 = pneg %p171
        %p366 = pneg %p168
        %s367 = smul.u32 16, %s20
        %p368 = scmp.lt.s32.totalorder %s367, 31
        %s369 = scalar_select %p368, %s367, 31
        %s370 = smul.addr %s369, 8
        %s371 = scalar_lea.vmem %s5, %s370
        %s372 = smul.u32 16, %s20
        %s373 = smul.u32 16, %s21
        %p374 = scmp.lt.s32.totalorder %s373, 31
        %s375 = scalar_select %p374, %s373, 31
        %s376 = smul.addr %s375, 4
        %s377 = scalar_lea.vmem %s1, %s376
        %s378 = smul.u32 16, %s21
        %s379 = smul.u32 16, %s20
        %p380 = scmp.lt.s32.totalorder %s379, 31
        %s381 = scalar_select %p380, %s379, 31
        %s382 = smul.addr %s381, 8
        %s383 = scalar_lea.vmem %s2, %s382
        %s384 = smul.u32 16, %s20
        %s385 = smul.u32 16, %s20
        %p386 = scmp.lt.s32.totalorder %s385, 31
        %s387 = scalar_select %p386, %s385, 31
        %s388 = smul.addr %s387, 8
        %s389 = scalar_lea.vmem %s5, %s388
        %s390 = smul.u32 16, %s20
        %p391 = scmp.eq.s32.totalorder %s21, 0
        // Predicated region
        $region82: #{gnn_ptcldpred_merg_side_forward.5} parent=76 // pred_check
          %p392 = pneg %p391
        $region83: #{gnn_ptcldpred_merg_side_forward.5} parent=76 // pred_check_branch
          %394 = sbr.rel (%p392) target = $region85
        $region84: #{gnn_ptcldpred_merg_side_forward.5} parent=76 // pred_region
          %v395 = vld [vmem:[%s383] sm:$0xff]
          %v396 = vld [vmem:[%s383 + $0x8] sm:$0xff]
          %v397 = vld [vmem:[%s383 + $0x10] sm:$0xff]
          %v398 = vld [vmem:[%s383 + $0x18] sm:$0xff]
          %v399 = vld [vmem:[%s383 + $0x20] sm:$0xff]
          %v400 = vld [vmem:[%s383 + $0x28] sm:$0xff]
          %v401 = vld [vmem:[%s383 + $0x30] sm:$0xff]
          %v402 = vld [vmem:[%s383 + $0x38] sm:$0xff]
          %v403 = vld [vmem:[%s383 + $0x40] sm:$0xff]
          %v404 = vld [vmem:[%s383 + $0x48] sm:$0xff]
          %v405 = vld [vmem:[%s383 + $0x50] sm:$0xff]
          %v406 = vld [vmem:[%s383 + $0x58] sm:$0xff]
          %v407 = vld [vmem:[%s383 + $0x60] sm:$0xff]
          %v408 = vld [vmem:[%s383 + $0x68] sm:$0xff]
          %v409 = vld [vmem:[%s383 + $0x70] sm:$0xff]
          %v410 = vld [vmem:[%s383 + $0x78] sm:$0xff]
          %411 = vst [vmem:[#allocation2] sm:$0xff] %v395
          %412 = vst [vmem:[#allocation2 + $0x8] sm:$0xff] %v396
          %413 = vst [vmem:[#allocation2 + $0x10] sm:$0xff] %v397
          %414 = vst [vmem:[#allocation2 + $0x18] sm:$0xff] %v398
          %415 = vst [vmem:[#allocation2 + $0x20] sm:$0xff] %v399
          %416 = vst [vmem:[#allocation2 + $0x28] sm:$0xff] %v400
          %417 = vst [vmem:[#allocation2 + $0x30] sm:$0xff] %v401
          %418 = vst [vmem:[#allocation2 + $0x38] sm:$0xff] %v402
          %419 = vst [vmem:[#allocation2 + $0x40] sm:$0xff] %v403
          %420 = vst [vmem:[#allocation2 + $0x48] sm:$0xff] %v404
          %421 = vst [vmem:[#allocation2 + $0x50] sm:$0xff] %v405
          %422 = vst [vmem:[#allocation2 + $0x58] sm:$0xff] %v406
          %423 = vst [vmem:[#allocation2 + $0x60] sm:$0xff] %v407
          %424 = vst [vmem:[#allocation2 + $0x68] sm:$0xff] %v408
          %425 = vst [vmem:[#allocation2 + $0x70] sm:$0xff] %v409
          %426 = vst [vmem:[#allocation2 + $0x78] sm:$0xff] %v410
        $region85: #{gnn_ptcldpred_merg_side_forward.5} parent=76 // pred_fallthru
          _
        %v427 = vld [vmem:[#allocation2] sm:$0xff]
        %v428 = vld [vmem:[#allocation2 + $0x8] sm:$0xff]
        %v429 = vld [vmem:[#allocation2 + $0x10] sm:$0xff]
        %v430 = vld [vmem:[#allocation2 + $0x18] sm:$0xff]
        %v431 = vld [vmem:[#allocation2 + $0x20] sm:$0xff]
        %v432 = vld [vmem:[#allocation2 + $0x28] sm:$0xff]
        %v433 = vld [vmem:[#allocation2 + $0x30] sm:$0xff]
        %v434 = vld [vmem:[#allocation2 + $0x38] sm:$0xff]
        %v435 = vld [vmem:[#allocation2 + $0x40] sm:$0xff]
        %v436 = vld [vmem:[#allocation2 + $0x48] sm:$0xff]
        %v437 = vld [vmem:[#allocation2 + $0x50] sm:$0xff]
        %v438 = vld [vmem:[#allocation2 + $0x58] sm:$0xff]
        %v439 = vld [vmem:[#allocation2 + $0x60] sm:$0xff]
        %v440 = vld [vmem:[#allocation2 + $0x68] sm:$0xff]
        %v441 = vld [vmem:[#allocation2 + $0x70] sm:$0xff]
        %v442 = vld [vmem:[#allocation2 + $0x78] sm:$0xff]
        %v443 = vld [vmem:[%s337] sm:$0xf]
        %v444 = vld [vmem:[%s337 + $0x4] sm:$0xf]
        %v445 = vld [vmem:[%s337 + $0x8] sm:$0xf]
        %v446 = vld [vmem:[%s337 + $0xc] sm:$0xf]
        %v447 = vld [vmem:[%s337 + $0x10] sm:$0xf]
        %v448 = vld [vmem:[%s337 + $0x14] sm:$0xf]
        %v449 = vld [vmem:[%s337 + $0x18] sm:$0xf]
        %v450 = vld [vmem:[%s337 + $0x1c] sm:$0xf]
        %v451 = vld [vmem:[%s337 + $0x20] sm:$0xf]
        %v452 = vld [vmem:[%s337 + $0x24] sm:$0xf]
        %v453 = vld [vmem:[%s337 + $0x28] sm:$0xf]
        %v454 = vld [vmem:[%s337 + $0x2c] sm:$0xf]
        %v455 = vld [vmem:[%s337 + $0x30] sm:$0xf]
        %v456 = vld [vmem:[%s337 + $0x34] sm:$0xf]
        %v457 = vld [vmem:[%s337 + $0x38] sm:$0xf]
        %v458 = vld [vmem:[%s337 + $0x3c] sm:$0xf]
        %v459 = vld [vmem:[%s377] sm:$0xf]
        %v460 = vld [vmem:[%s377 + $0x4] sm:$0xf]
        %v461 = vld [vmem:[%s377 + $0x8] sm:$0xf]
        %v462 = vld [vmem:[%s377 + $0xc] sm:$0xf]
        %v463 = vld [vmem:[%s377 + $0x10] sm:$0xf]
        %v464 = vld [vmem:[%s377 + $0x14] sm:$0xf]
        %v465 = vld [vmem:[%s377 + $0x18] sm:$0xf]
        %v466 = vld [vmem:[%s377 + $0x1c] sm:$0xf]
        %v467 = vld [vmem:[%s377 + $0x20] sm:$0xf]
        %v468 = vld [vmem:[%s377 + $0x24] sm:$0xf]
        %v469 = vld [vmem:[%s377 + $0x28] sm:$0xf]
        %v470 = vld [vmem:[%s377 + $0x2c] sm:$0xf]
        %v471 = vld [vmem:[%s377 + $0x30] sm:$0xf]
        %v472 = vld [vmem:[%s377 + $0x34] sm:$0xf]
        %v473 = vld [vmem:[%s377 + $0x38] sm:$0xf]
        %v474 = vld [vmem:[%s377 + $0x3c] sm:$0xf]
        %v491 = vunpack.c.l.b16 %v443
        %v492 = vunpack.c.l.b16 %v444
        %v493 = vunpack.c.l.b16 %v445
        %v494 = vunpack.c.l.b16 %v446
        %v495 = vunpack.c.l.b16 %v447
        %v496 = vunpack.c.l.b16 %v448
        %v497 = vunpack.c.l.b16 %v449
        %v498 = vunpack.c.l.b16 %v450
        %v499 = vunpack.c.l.b16 %v451
        %v500 = vunpack.c.l.b16 %v452
        %v501 = vunpack.c.l.b16 %v453
        %v502 = vunpack.c.l.b16 %v454
        %v503 = vunpack.c.l.b16 %v455
        %v504 = vunpack.c.l.b16 %v456
        %v505 = vunpack.c.l.b16 %v457
        %v506 = vunpack.c.l.b16 %v458
        %v507 = vpack.c.b16 %v492, %v491
        %v508 = vpack.c.b16 %v494, %v493
        %v509 = vpack.c.b16 %v496, %v495
        %v510 = vpack.c.b16 %v498, %v497
        %v511 = vpack.c.b16 %v500, %v499
        %v512 = vpack.c.b16 %v502, %v501
        %v513 = vpack.c.b16 %v504, %v503
        %v514 = vpack.c.b16 %v506, %v505
        %v539 = vunpack.c.l.b16 %v459
        %v540 = vunpack.c.l.b16 %v460
        %v541 = vunpack.c.l.b16 %v461
        %v542 = vunpack.c.l.b16 %v462
        %v543 = vunpack.c.l.b16 %v463
        %v544 = vunpack.c.l.b16 %v464
        %v545 = vunpack.c.l.b16 %v465
        %v546 = vunpack.c.l.b16 %v466
        %v547 = vunpack.c.l.b16 %v467
        %v548 = vunpack.c.l.b16 %v468
        %v549 = vunpack.c.l.b16 %v469
        %v550 = vunpack.c.l.b16 %v470
        %v551 = vunpack.c.l.b16 %v471
        %v552 = vunpack.c.l.b16 %v472
        %v553 = vunpack.c.l.b16 %v473
        %v554 = vunpack.c.l.b16 %v474
        %v555 = vpack.c.b16 %v540, %v539
        %v556 = vpack.c.b16 %v542, %v541
        %v557 = vpack.c.b16 %v544, %v543
        %v558 = vpack.c.b16 %v546, %v545
        %v559 = vpack.c.b16 %v548, %v547
        %v560 = vpack.c.b16 %v550, %v549
        %v561 = vpack.c.b16 %v552, %v551
        %v562 = vpack.c.b16 %v554, %v553
        %571 = vmatpush.bf16.msra.mxu0 %v562
        %572 = vmatpush.bf16.msra.mxu0 %v561
        %573 = vmatpush.bf16.msra.mxu0 %v560
        %574 = vmatpush.bf16.msra.mxu0 %v559
        %575 = vmatpush.bf16.msra.mxu0 %v558
        %576 = vmatpush.bf16.msra.mxu0 %v557
        %577 = vmatpush.bf16.msra.mxu0 %v556
        %578 = vmatpush.bf16.msra.mxu0 %v555
        %579 = vmatmul.bf16.gmra.mxu0 %v507
        %v580 = vpop.f32.mrf.mxu0
        %v581 = vadd.f32 0.0, %v580
        %v582 = vpop.f32.mrf.mxu0
        %v583 = vadd.f32 0.0, %v582
        %584 = vmatmul.bf16.gmra.mxu0 %v508
        %v585 = vpop.f32.mrf.mxu0
        %v586 = vadd.f32 0.0, %v585
        %v587 = vpop.f32.mrf.mxu0
        %v588 = vadd.f32 0.0, %v587
        %589 = vmatmul.bf16.gmra.mxu0 %v509
        %v590 = vpop.f32.mrf.mxu0
        %v591 = vadd.f32 0.0, %v590
        %v592 = vpop.f32.mrf.mxu0
        %v593 = vadd.f32 0.0, %v592
        %594 = vmatmul.bf16.gmra.mxu0 %v510
        %v595 = vpop.f32.mrf.mxu0
        %v596 = vadd.f32 0.0, %v595
        %v597 = vpop.f32.mrf.mxu0
        %v598 = vadd.f32 0.0, %v597
        %599 = vmatmul.bf16.gmra.mxu0 %v511
        %v600 = vpop.f32.mrf.mxu0
        %v601 = vadd.f32 0.0, %v600
        %v602 = vpop.f32.mrf.mxu0
        %v603 = vadd.f32 0.0, %v602
        %604 = vmatmul.bf16.gmra.mxu0 %v512
        %v605 = vpop.f32.mrf.mxu0
        %v606 = vadd.f32 0.0, %v605
        %v607 = vpop.f32.mrf.mxu0
        %v608 = vadd.f32 0.0, %v607
        %609 = vmatmul.bf16.gmra.mxu0 %v513
        %v610 = vpop.f32.mrf.mxu0
        %v611 = vadd.f32 0.0, %v610
        %v612 = vpop.f32.mrf.mxu0
        %v613 = vadd.f32 0.0, %v612
        %614 = vmatmul.bf16.gmra.mxu0 %v514
        %v615 = vpop.f32.mrf.mxu0
        %v616 = vadd.f32 0.0, %v615
        %v617 = vpop.f32.mrf.mxu0
        %v618 = vadd.f32 0.0, %v617
        %619 = vdwg.mxu0
        %v620 = vadd.f32 %v427, %v581
        %v621 = vadd.f32 %v428, %v583
        %v622 = vadd.f32 %v429, %v586
        %v623 = vadd.f32 %v430, %v588
        %v624 = vadd.f32 %v431, %v591
        %v625 = vadd.f32 %v432, %v593
        %v626 = vadd.f32 %v433, %v596
        %v627 = vadd.f32 %v434, %v598
        %v628 = vadd.f32 %v435, %v601
        %v629 = vadd.f32 %v436, %v603
        %v630 = vadd.f32 %v437, %v606
        %v631 = vadd.f32 %v438, %v608
        %v632 = vadd.f32 %v439, %v611
        %v633 = vadd.f32 %v440, %v613
        %v634 = vadd.f32 %v441, %v616
        %v635 = vadd.f32 %v442, %v618
        %636 = vst [vmem:[#allocation2] sm:$0xff] %v620
        %637 = vst [vmem:[#allocation2 + $0x8] sm:$0xff] %v621
        %638 = vst [vmem:[#allocation2 + $0x10] sm:$0xff] %v622
        %639 = vst [vmem:[#allocation2 + $0x18] sm:$0xff] %v623
        %640 = vst [vmem:[#allocation2 + $0x20] sm:$0xff] %v624
        %641 = vst [vmem:[#allocation2 + $0x28] sm:$0xff] %v625
        %642 = vst [vmem:[#allocation2 + $0x30] sm:$0xff] %v626
        %643 = vst [vmem:[#allocation2 + $0x38] sm:$0xff] %v627
        %644 = vst [vmem:[#allocation2 + $0x40] sm:$0xff] %v628
        %645 = vst [vmem:[#allocation2 + $0x48] sm:$0xff] %v629
        %646 = vst [vmem:[#allocation2 + $0x50] sm:$0xff] %v630
        %647 = vst [vmem:[#allocation2 + $0x58] sm:$0xff] %v631
        %648 = vst [vmem:[#allocation2 + $0x60] sm:$0xff] %v632
        %649 = vst [vmem:[#allocation2 + $0x68] sm:$0xff] %v633
        %650 = vst [vmem:[#allocation2 + $0x70] sm:$0xff] %v634
        %651 = vst [vmem:[#allocation2 + $0x78] sm:$0xff] %v635
        %p652 = scmp.eq.s32.totalorder %s21, 1
        // Predicated region
        $region86: #{gnn_ptcldpred_merg_side_forward.5} parent=76 // pred_check
          %p653 = pneg %p652
        $region87: #{gnn_ptcldpred_merg_side_forward.5} parent=76 // pred_check_branch
          %655 = sbr.rel (%p653) target = $region89
        $region88: #{gnn_ptcldpred_merg_side_forward.5} parent=76 // pred_region
          %v656 = vld [vmem:[#allocation2] sm:$0xff]
          %v657 = vld [vmem:[#allocation2 + $0x8] sm:$0xff]
          %v658 = vld [vmem:[#allocation2 + $0x10] sm:$0xff]
          %v659 = vld [vmem:[#allocation2 + $0x18] sm:$0xff]
          %v660 = vld [vmem:[#allocation2 + $0x20] sm:$0xff]
          %v661 = vld [vmem:[#allocation2 + $0x28] sm:$0xff]
          %v662 = vld [vmem:[#allocation2 + $0x30] sm:$0xff]
          %v663 = vld [vmem:[#allocation2 + $0x38] sm:$0xff]
          %v664 = vld [vmem:[#allocation2 + $0x40] sm:$0xff]
          %v665 = vld [vmem:[#allocation2 + $0x48] sm:$0xff]
          %v666 = vld [vmem:[#allocation2 + $0x50] sm:$0xff]
          %v667 = vld [vmem:[#allocation2 + $0x58] sm:$0xff]
          %v668 = vld [vmem:[#allocation2 + $0x60] sm:$0xff]
          %v669 = vld [vmem:[#allocation2 + $0x68] sm:$0xff]
          %v670 = vld [vmem:[#allocation2 + $0x70] sm:$0xff]
          %v671 = vld [vmem:[#allocation2 + $0x78] sm:$0xff]
          %v672 = vld [vmem:[%s3] sm:$0xff]
          %v673 = vld [vmem:[%s3 + $0x8] sm:$0xff]
          %v674 = vld [vmem:[%s3 + $0x10] sm:$0xff]
          %v675 = vld [vmem:[%s3 + $0x18] sm:$0xff]
          %v676 = vld [vmem:[%s3 + $0x20] sm:$0xff]
          %v677 = vld [vmem:[%s3 + $0x28] sm:$0xff]
          %v678 = vld [vmem:[%s3 + $0x30] sm:$0xff]
          %v679 = vld [vmem:[%s3 + $0x38] sm:$0xff]
          %v680 = vld [vmem:[%s3 + $0x40] sm:$0xff]
          %v681 = vld [vmem:[%s3 + $0x48] sm:$0xff]
          %v682 = vld [vmem:[%s3 + $0x50] sm:$0xff]
          %v683 = vld [vmem:[%s3 + $0x58] sm:$0xff]
          %v684 = vld [vmem:[%s3 + $0x60] sm:$0xff]
          %v685 = vld [vmem:[%s3 + $0x68] sm:$0xff]
          %v686 = vld [vmem:[%s3 + $0x70] sm:$0xff]
          %v687 = vld [vmem:[%s3 + $0x78] sm:$0xff]
          %v688 = vld [vmem:[%s4] sm:$0x1]
          %v690 = vperm.slane %v688, 0
          %692 = vmatpush.msra.mxu0 %v687
          %693 = vmatpush.msra.mxu0 %v686
          %694 = vmatpush.msra.mxu0 %v685
          %695 = vmatpush.msra.mxu0 %v684
          %696 = vmatpush.msra.mxu0 %v683
          %697 = vmatpush.msra.mxu0 %v682
          %698 = vmatpush.msra.mxu0 %v681
          %699 = vmatpush.msra.mxu0 %v680
          %700 = vmatpush.msra.mxu0 %v679
          %701 = vmatpush.msra.mxu0 %v678
          %702 = vmatpush.msra.mxu0 %v677
          %703 = vmatpush.msra.mxu0 %v676
          %704 = vmatpush.msra.mxu0 %v675
          %705 = vmatpush.msra.mxu0 %v674
          %706 = vmatpush.msra.mxu0 %v673
          %707 = vmatpush.msra.mxu0 %v672
          %708 = vmatmul.f32.gmra.mxu0 %v656
          %v709 = vpop.f32.mrf.mxu0
          %v710 = vadd.f32 %v690, %v709
          %711 = vmatmul.f32.gmra.mxu0 %v657
          %v712 = vpop.f32.mrf.mxu0
          %v713 = vadd.f32 %v690, %v712
          %714 = vmatmul.f32.gmra.mxu0 %v658
          %v715 = vpop.f32.mrf.mxu0
          %v716 = vadd.f32 %v690, %v715
          %717 = vmatmul.f32.gmra.mxu0 %v659
          %v718 = vpop.f32.mrf.mxu0
          %v719 = vadd.f32 %v690, %v718
          %720 = vmatmul.f32.gmra.mxu0 %v660
          %v721 = vpop.f32.mrf.mxu0
          %v722 = vadd.f32 %v690, %v721
          %723 = vmatmul.f32.gmra.mxu0 %v661
          %v724 = vpop.f32.mrf.mxu0
          %v725 = vadd.f32 %v690, %v724
          %726 = vmatmul.f32.gmra.mxu0 %v662
          %v727 = vpop.f32.mrf.mxu0
          %v728 = vadd.f32 %v690, %v727
          %729 = vmatmul.f32.gmra.mxu0 %v663
          %v730 = vpop.f32.mrf.mxu0
          %v731 = vadd.f32 %v690, %v730
          %732 = vmatmul.f32.gmra.mxu0 %v664
          %v733 = vpop.f32.mrf.mxu0
          %v734 = vadd.f32 %v690, %v733
          %735 = vmatmul.f32.gmra.mxu0 %v665
          %v736 = vpop.f32.mrf.mxu0
          %v737 = vadd.f32 %v690, %v736
          %738 = vmatmul.f32.gmra.mxu0 %v666
          %v739 = vpop.f32.mrf.mxu0
          %v740 = vadd.f32 %v690, %v739
          %741 = vmatmul.f32.gmra.mxu0 %v667
          %v742 = vpop.f32.mrf.mxu0
          %v743 = vadd.f32 %v690, %v742
          %744 = vmatmul.f32.gmra.mxu0 %v668
          %v745 = vpop.f32.mrf.mxu0
          %v746 = vadd.f32 %v690, %v745
          %747 = vmatmul.f32.gmra.mxu0 %v669
          %v748 = vpop.f32.mrf.mxu0
          %v749 = vadd.f32 %v690, %v748
          %750 = vmatmul.f32.gmra.mxu0 %v670
          %v751 = vpop.f32.mrf.mxu0
          %v752 = vadd.f32 %v690, %v751
          %753 = vmatmul.f32.gmra.mxu0 %v671
          %v754 = vpop.f32.mrf.mxu0
          %v755 = vadd.f32 %v690, %v754
          %756 = vdwg.mxu0
          %v757 = vmax.f32 %v710, 0.0
          %v758 = vmax.f32 %v713, 0.0
          %v759 = vmax.f32 %v716, 0.0
          %v760 = vmax.f32 %v719, 0.0
          %v761 = vmax.f32 %v722, 0.0
          %v762 = vmax.f32 %v725, 0.0
          %v763 = vmax.f32 %v728, 0.0
          %v764 = vmax.f32 %v731, 0.0
          %v765 = vmax.f32 %v734, 0.0
          %v766 = vmax.f32 %v737, 0.0
          %v767 = vmax.f32 %v740, 0.0
          %v768 = vmax.f32 %v743, 0.0
          %v769 = vmax.f32 %v746, 0.0
          %v770 = vmax.f32 %v749, 0.0
          %v771 = vmax.f32 %v752, 0.0
          %v772 = vmax.f32 %v755, 0.0
          %773 = vst [vmem:[%s389] sm:$0xff] %v757
          %774 = vst [vmem:[%s389 + $0x8] sm:$0xff] %v758
          %775 = vst [vmem:[%s389 + $0x10] sm:$0xff] %v759
          %776 = vst [vmem:[%s389 + $0x18] sm:$0xff] %v760
          %777 = vst [vmem:[%s389 + $0x20] sm:$0xff] %v761
          %778 = vst [vmem:[%s389 + $0x28] sm:$0xff] %v762
          %779 = vst [vmem:[%s389 + $0x30] sm:$0xff] %v763
          %780 = vst [vmem:[%s389 + $0x38] sm:$0xff] %v764
          %781 = vst [vmem:[%s389 + $0x40] sm:$0xff] %v765
          %782 = vst [vmem:[%s389 + $0x48] sm:$0xff] %v766
          %783 = vst [vmem:[%s389 + $0x50] sm:$0xff] %v767
          %784 = vst [vmem:[%s389 + $0x58] sm:$0xff] %v768
          %785 = vst [vmem:[%s389 + $0x60] sm:$0xff] %v769
          %786 = vst [vmem:[%s389 + $0x68] sm:$0xff] %v770
          %787 = vst [vmem:[%s389 + $0x70] sm:$0xff] %v771
          %788 = vst [vmem:[%s389 + $0x78] sm:$0xff] %v772
        $region89: #{gnn_ptcldpred_merg_side_forward.5} parent=76 // pred_fallthru
          _
        %s789 = smul.u32 16, %s20
        %p790 = scmp.lt.s32.totalorder %s789, 31
        %s791 = scalar_select %p790, %s789, 31
        %s792 = smul.addr %s791, 8
        %s793 = scalar_lea.vmem %s5, %s792
        // Predicated region
        $region90: #{gnn_ptcldpred_merg_side_forward.5} parent=76 // pred_check
          %p794 = pneg %p168
        $region91: #{gnn_ptcldpred_merg_side_forward.5} parent=76 // pred_check_branch
          %796 = sbr.rel (%p794) target = $region93
        $region92: #{gnn_ptcldpred_merg_side_forward.5} parent=76 // pred_region
          %s797 = smul.u32 16, %s20
        $region93: #{gnn_ptcldpred_merg_side_forward.5} parent=76 // pred_fallthru
          _
      $region77: #{gnn_ptcldpred_merg_side_forward.5} parent=5 // pred_fallthru
        _
      %p798 = scmp.le.s32.totalorder 2, %s11
      // Predicated region
      $region94: #{gnn_ptcldpred_merg_side_forward.5} parent=5 // pred_check
        %p799 = pneg %p798
      $region95: #{gnn_ptcldpred_merg_side_forward.5} parent=5 // pred_check_branch
        %801 = sbr.rel (%p799) target = $region97
      $region96: #{gnn_ptcldpred_merg_side_forward.5} parent=5 // pred_region
        %s802 = ssub.s32 %s11, 2
        // Predicated region
        $region98: #{gnn_ptcldpred_merg_side_forward.5} parent=96 // pred_check
          %p803 = pneg %p174
        $region99: #{gnn_ptcldpred_merg_side_forward.5} parent=96 // pred_check_branch
          %805 = sbr.rel (%p803) target = $region101
        $region100: #{gnn_ptcldpred_merg_side_forward.5} parent=96 // pred_region
          %s806 = smul.u32 16, %s22
          %p807 = scmp.lt.s32.totalorder %s806, 31
          %s808 = scalar_select %p807, %s806, 31
          %s809 = smul.addr %s808, 8
          %s810 = scalar_lea.vmem %s5, %s809
        $region101: #{gnn_ptcldpred_merg_side_forward.5} parent=96 // pred_fallthru
          _
      $region97: #{gnn_ptcldpred_merg_side_forward.5} parent=5 // pred_fallthru
        _
    $region6: #{gnn_ptcldpred_merg_side_forward.5} parent=1 // loop_footer
      %s15 = sadd.s32 1, %s11
    $region7: #{gnn_ptcldpred_merg_side_forward.5} parent=1 // loop_footer_branch
      %10 = sbr.rel target = $region3
    $region8: #{gnn_ptcldpred_merg_side_forward.5} parent=1 // loop_exit
      _

// kernel: gnn_ptcldpred_merg_side_forward.6
$region0: #{gnn_ptcldpred_merg_side_forward.6}
  #allocation0 [shape = 'u32[]', space=smem, size = 0x4, offset = 0x4, fixed_abs, tag = 'smem constant byte address 0x4 - core index']
  #allocation1 [shape = 'u32[72,128]{1,0:T(1,128)}', space=vmem, size = 0x9000, scoped, tag = 'internal scratch']
  #allocation2 [shape = 'f32[128,128]{1,0:T(8,128)}', space=vmem, size = 0x10000, scoped, tag = 'scratch operand']
  %s0 = inlined_call_operand.vmem [shape: bf16[256,256], index: 0, kind: input, shape index: {}]
  %s1 = inlined_call_operand.vmem [shape: bf16[256,128], index: 1, kind: input, shape index: {}]
  %s2 = inlined_call_operand.vmem [shape: f32[256,128], index: 2, kind: input, shape index: {}]
  %s3 = inlined_call_operand.vmem [shape: f32[128,128], index: 3, kind: input, shape index: {}]
  %s4 = inlined_call_operand.vmem [shape: f32[1,128], index: 4, kind: input, shape index: {}]
  %s5 = inlined_call_operand.vmem [shape: f32[256,128], index: 5, kind: output, shape index: {}]
  %s6 = sld [smem:[#allocation0]]
  $region102: #{gnn_ptcldpred_merg_side_forward.6} parent=0
    _
  %s8 = ssub.s32 1, %s6
  %s9 = scalar_select 0, %s8, %s6
  $region1: #{gnn_ptcldpred_merg_side_forward.6} parent=0
    #allocation3 [shape = 'u8[65536]{0}', space=vmem, size = 0x10000, scoped, tag = 'input window, operand 0']
    loop: start=0, step=1, limit=6
    $region2: #{gnn_ptcldpred_merg_side_forward.6} parent=1 // loop_pre_header
      _
    $region3: #{gnn_ptcldpred_merg_side_forward.6} parent=1 // loop_header
      %s11 = sphi 0, %s15
      %p12 = scmp.ge.s32.totalorder %s11, 6
      %s18 = sphi 0, %s30
      %s19 = sphi 0, %s26
      %s20 = sphi 0, %s18
      %s21 = sphi 0, %s19
      %s22 = sphi 0, %s20
      %s23 = sphi 0, %s21
      %s35 = sphi 0, %s37
      %s38 = sphi 0, %s35
      %s39 = sphi 0, %s38
      %s55 = sphi 0, %s39
      %s61 = sphi 0, %s63
      %s64 = sphi 0, %s61
      %s65 = sphi 0, %s64
      %s81 = sphi 0, %s65
      %s87 = sphi 0, %s89
      %s90 = sphi 0, %s87
      %s91 = sphi 0, %s90
      %s107 = sphi 0, %s91
      %s111 = sphi 0, %s111
      %s113 = sphi 0, %s111
      %s114 = sphi 0, %s113
      %s128 = sphi 0, %s114
      %s132 = sphi 0, %s132
      %s134 = sphi 0, %s132
      %s135 = sphi 0, %s134
      %s149 = sphi 0, %s135
      %s155 = sphi 0, %s157
      %s158 = sphi 0, %s155
      %s159 = sphi 0, %s158
      %s175 = sphi 0, %s159
    $region4: #{gnn_ptcldpred_merg_side_forward.6} parent=1 // loop_header_branch
      %14 = sbr.rel (%p12) target = $region8
    $region5: #{gnn_ptcldpred_merg_side_forward.6} parent=1 // loop_body
      %s16 = ssub.s32 %s11, 1
      %s17 = ssub.s32 %s11, 2
      %s24 = sadd.s32 1, %s19
      %p25 = scmp.ge.s32.totalorder %s24, 2
      %s26 = scalar_select %p25, 0, %s24
      %s27 = sadd.s32 1, %s18
      %s28 = scalar_select %p25, %s27, %s18
      %p29 = scmp.ge.s32.totalorder %s28, 2
      %s30 = scalar_select %p29, 0, %s28
      %s31 = ssub.s32 %s18, %s30
      %s32 = ssub.s32 %s19, %s26
      %s33 = sor.u32 %s31, %s32
      %p34 = scmp.eq.s32.totalorder %s33, 0
      %s36 = sadd.s32 %s35, 1
      %s37 = scalar_select %p34, %s35, %s36
      %p40 = pneg %p34
      %p41 = scmp.eq.s32.totalorder %s11, 3
      %p42 = por %p40, %p41
      %p43 = scmp.ne.s32.totalorder %s35, %s38
      %p44 = scmp.eq.s32.totalorder %s11, 0
      %p45 = por %p43, %p44
      %p46 = scmp.ne.s32.totalorder %s35, %s38
      %p47 = scmp.eq.s32.totalorder %s16, 3
      %p48 = por %p46, %p47
      %p49 = scmp.ne.s32.totalorder %s38, %s39
      %p50 = scmp.eq.s32.totalorder %s16, 0
      %p51 = por %p49, %p50
      %p52 = scmp.ne.s32.totalorder %s38, %s39
      %p53 = scmp.eq.s32.totalorder %s17, 3
      %p54 = por %p52, %p53
      %p56 = scmp.ne.s32.totalorder %s39, %s55
      %p57 = scmp.eq.s32.totalorder %s17, 0
      %p58 = por %p56, %p57
      %s59 = ssub.s32 %s19, %s26
      %p60 = scmp.eq.s32.totalorder %s59, 0
      %s62 = sadd.s32 %s61, 1
      %s63 = scalar_select %p60, %s61, %s62
      %p66 = pneg %p60
      %p67 = scmp.eq.s32.totalorder %s11, 3
      %p68 = por %p66, %p67
      %p69 = scmp.ne.s32.totalorder %s61, %s64
      %p70 = scmp.eq.s32.totalorder %s11, 0
      %p71 = por %p69, %p70
      %p72 = scmp.ne.s32.totalorder %s61, %s64
      %p73 = scmp.eq.s32.totalorder %s16, 3
      %p74 = por %p72, %p73
      %p75 = scmp.ne.s32.totalorder %s64, %s65
      %p76 = scmp.eq.s32.totalorder %s16, 0
      %p77 = por %p75, %p76
      %p78 = scmp.ne.s32.totalorder %s64, %s65
      %p79 = scmp.eq.s32.totalorder %s17, 3
      %p80 = por %p78, %p79
      %p82 = scmp.ne.s32.totalorder %s65, %s81
      %p83 = scmp.eq.s32.totalorder %s17, 0
      %p84 = por %p82, %p83
      %s85 = ssub.s32 %s18, %s30
      %p86 = scmp.eq.s32.totalorder %s85, 0
      %s88 = sadd.s32 %s87, 1
      %s89 = scalar_select %p86, %s87, %s88
      %p92 = pneg %p86
      %p93 = scmp.eq.s32.totalorder %s11, 3
      %p94 = por %p92, %p93
      %p95 = scmp.ne.s32.totalorder %s87, %s90
      %p96 = scmp.eq.s32.totalorder %s11, 0
      %p97 = por %p95, %p96
      %p98 = scmp.ne.s32.totalorder %s87, %s90
      %p99 = scmp.eq.s32.totalorder %s16, 3
      %p100 = por %p98, %p99
      %p101 = scmp.ne.s32.totalorder %s90, %s91
      %p102 = scmp.eq.s32.totalorder %s16, 0
      %p103 = por %p101, %p102
      %p104 = scmp.ne.s32.totalorder %s90, %s91
      %p105 = scmp.eq.s32.totalorder %s17, 3
      %p106 = por %p104, %p105
      %p108 = scmp.ne.s32.totalorder %s91, %s107
      %p109 = scmp.eq.s32.totalorder %s17, 0
      %p110 = por %p108, %p109
      %s112 = sadd.s32 %s111, 1
      %p115 = scmp.eq.s32.totalorder %s11, 3
      %p116 = scmp.ne.s32.totalorder %s111, %s113
      %p117 = scmp.eq.s32.totalorder %s11, 0
      %p118 = por %p116, %p117
      %p119 = scmp.ne.s32.totalorder %s111, %s113
      %p120 = scmp.eq.s32.totalorder %s16, 3
      %p121 = por %p119, %p120
      %p122 = scmp.ne.s32.totalorder %s113, %s114
      %p123 = scmp.eq.s32.totalorder %s16, 0
      %p124 = por %p122, %p123
      %p125 = scmp.ne.s32.totalorder %s113, %s114
      %p126 = scmp.eq.s32.totalorder %s17, 3
      %p127 = por %p125, %p126
      %p129 = scmp.ne.s32.totalorder %s114, %s128
      %p130 = scmp.eq.s32.totalorder %s17, 0
      %p131 = por %p129, %p130
      %s133 = sadd.s32 %s132, 1
      %p136 = scmp.eq.s32.totalorder %s11, 3
      %p137 = scmp.ne.s32.totalorder %s132, %s134
      %p138 = scmp.eq.s32.totalorder %s11, 0
      %p139 = por %p137, %p138
      %p140 = scmp.ne.s32.totalorder %s132, %s134
      %p141 = scmp.eq.s32.totalorder %s16, 3
      %p142 = por %p140, %p141
      %p143 = scmp.ne.s32.totalorder %s134, %s135
      %p144 = scmp.eq.s32.totalorder %s16, 0
      %p145 = por %p143, %p144
      %p146 = scmp.ne.s32.totalorder %s134, %s135
      %p147 = scmp.eq.s32.totalorder %s17, 3
      %p148 = por %p146, %p147
      %p150 = scmp.ne.s32.totalorder %s135, %s149
      %p151 = scmp.eq.s32.totalorder %s17, 0
      %p152 = por %p150, %p151
      %s153 = ssub.s32 %s18, %s30
      %p154 = scmp.eq.s32.totalorder %s153, 0
      %s156 = sadd.s32 %s155, 1
      %s157 = scalar_select %p154, %s155, %s156
      %p160 = pneg %p154
      %p161 = scmp.eq.s32.totalorder %s11, 3
      %p162 = por %p160, %p161
      %p163 = scmp.ne.s32.totalorder %s155, %s158
      %p164 = scmp.eq.s32.totalorder %s11, 0
      %p165 = por %p163, %p164
      %p166 = scmp.ne.s32.totalorder %s155, %s158
      %p167 = scmp.eq.s32.totalorder %s16, 3
      %p168 = por %p166, %p167
      %p169 = scmp.ne.s32.totalorder %s158, %s159
      %p170 = scmp.eq.s32.totalorder %s16, 0
      %p171 = por %p169, %p170
      %p172 = scmp.ne.s32.totalorder %s158, %s159
      %p173 = scmp.eq.s32.totalorder %s17, 3
      %p174 = por %p172, %p173
      %p176 = scmp.ne.s32.totalorder %s159, %s175
      %p177 = scmp.eq.s32.totalorder %s17, 0
      %p178 = por %p176, %p177
      %p179 = scmp.le.s32.totalorder 1, %s11
      %p180 = scmp.lt.s32.totalorder %s11, 5
      %p181 = pnand %p179, %p180
      %p182 = pneg %p181
      // Predicated region
      $region9: #{gnn_ptcldpred_merg_side_forward.6} parent=5 // pred_check
        _
      $region10: #{gnn_ptcldpred_merg_side_forward.6} parent=5 // pred_check_branch
        %184 = sbr.rel (%p181) target = $region12
      $region11: #{gnn_ptcldpred_merg_side_forward.6} parent=5 // pred_region
        %s185 = ssub.s32 %s11, 1
        // Predicated region
        $region13: #{gnn_ptcldpred_merg_side_forward.6} parent=11 // pred_check
          %p186 = pneg %p124
        $region14: #{gnn_ptcldpred_merg_side_forward.6} parent=11 // pred_check_branch
          %188 = sbr.rel (%p186) target = $region16
        $region15: #{gnn_ptcldpred_merg_side_forward.6} parent=11 // pred_region
          _
        $region16: #{gnn_ptcldpred_merg_side_forward.6} parent=11 // pred_fallthru
          _
        // Predicated region
        $region17: #{gnn_ptcldpred_merg_side_forward.6} parent=11 // pred_check
          %p189 = pneg %p145
        $region18: #{gnn_ptcldpred_merg_side_forward.6} parent=11 // pred_check_branch
          %191 = sbr.rel (%p189) target = $region20
        $region19: #{gnn_ptcldpred_merg_side_forward.6} parent=11 // pred_region
          _
        $region20: #{gnn_ptcldpred_merg_side_forward.6} parent=11 // pred_fallthru
          _
      $region12: #{gnn_ptcldpred_merg_side_forward.6} parent=5 // pred_fallthru
        _
      %p192 = scmp.lt.s32.totalorder %s11, 4
      // Predicated region
      $region21: #{gnn_ptcldpred_merg_side_forward.6} parent=5 // pred_check
        %p193 = pneg %p192
      $region22: #{gnn_ptcldpred_merg_side_forward.6} parent=5 // pred_check_branch
        %195 = sbr.rel (%p193) target = $region24
      $region23: #{gnn_ptcldpred_merg_side_forward.6} parent=5 // pred_region
        // Predicated region
        $region25: #{gnn_ptcldpred_merg_side_forward.6} parent=23 // pred_check
          %p196 = pneg %p45
        $region26: #{gnn_ptcldpred_merg_side_forward.6} parent=23 // pred_check_branch
          %198 = sbr.rel (%p196) target = $region28
        $region27: #{gnn_ptcldpred_merg_side_forward.6} parent=23 // pred_region
          %s199 = sand.u32 %s35, 1
          %s200 = sand.u32 %s35, 1
          %s201 = smul.addr %s200, 64
          %s202 = scalar_lea.vmem [#allocation3], %s201
          %s203 = smul.u32 16, %s18
          %s204 = smul.addr %s203, 2
          %s205 = sadd.s32 %s19, %s204
          %s206 = smul.addr %s205, 4
          %s207 = scalar_lea.vmem %s0, %s206
          // Predicated region
          $region29: #{gnn_ptcldpred_merg_side_forward.6} parent=27 // pred_check
            _
          $region30: #{gnn_ptcldpred_merg_side_forward.6} parent=27 // pred_check_branch
            %209 = sbr.rel (0) target = $region32
          $region31: #{gnn_ptcldpred_merg_side_forward.6} parent=27 // pred_region
            // Predicated region
            $region33: #{gnn_ptcldpred_merg_side_forward.6} parent=31 // pred_check
              _
            $region34: #{gnn_ptcldpred_merg_side_forward.6} parent=31 // pred_check_branch
              %211 = sbr.rel target = $region36
            $region35: #{gnn_ptcldpred_merg_side_forward.6} parent=31 // pred_region
              // Predicated region
              $region48: #{gnn_ptcldpred_merg_side_forward.6} parent=35 // pred_check
                _
              $region49: #{gnn_ptcldpred_merg_side_forward.6} parent=35 // pred_check_branch
                %257 = sbr.rel (0) target = $region51
              $region50: #{gnn_ptcldpred_merg_side_forward.6} parent=35 // pred_region
                loop: start=0, step=1, limit=1
                $region52: #{gnn_ptcldpred_merg_side_forward.6} parent=50 // loop_pre_header
                  _
                $region53: #{gnn_ptcldpred_merg_side_forward.6} parent=50 // loop_header
                  %s259 = sphi 0, %s263
                  %p260 = scmp.ge.s32.totalorder %s259, 1
                  %s264 = sphi %s207, %s207
                  %s265 = sphi %s202, %s202
                $region54: #{gnn_ptcldpred_merg_side_forward.6} parent=50 // loop_header_branch
                  %262 = sbr.rel (%p260) target = $region58
                $region55: #{gnn_ptcldpred_merg_side_forward.6} parent=50 // loop_body
                  _
                $region56: #{gnn_ptcldpred_merg_side_forward.6} parent=50 // loop_footer
                  %s263 = sadd.s32 1, %s259
                $region57: #{gnn_ptcldpred_merg_side_forward.6} parent=50 // loop_footer_branch
                  %258 = sbr.rel target = $region53
                $region58: #{gnn_ptcldpred_merg_side_forward.6} parent=50 // loop_exit
                  _
                %s267 = ssub.s32 16, 1
                loop: start=0, step=1, limit=1
                $region59: #{gnn_ptcldpred_merg_side_forward.6} parent=50 // loop_pre_header
                  _
                $region60: #{gnn_ptcldpred_merg_side_forward.6} parent=50 // loop_header
                  %s269 = sphi 0, %s273
                  %p270 = scmp.ge.s32.totalorder %s269, 1
                  %s274 = sphi %s207, %s207
                  %s275 = sphi %s202, %s202
                $region61: #{gnn_ptcldpred_merg_side_forward.6} parent=50 // loop_header_branch
                  %272 = sbr.rel (%p270) target = $region65
                $region62: #{gnn_ptcldpred_merg_side_forward.6} parent=50 // loop_body
                  %v276 = vld [vmem:[%s274] sm:%s267]
                  %277 = vst [vmem:[%s275] sm:%s267] %v276
                  %v278 = vld [vmem:[%s274 + $0x8] sm:%s267]
                  %279 = vst [vmem:[%s275 + $0x4] sm:%s267] %v278
                  %v280 = vld [vmem:[%s274 + $0x10] sm:%s267]
                  %281 = vst [vmem:[%s275 + $0x8] sm:%s267] %v280
                  %v282 = vld [vmem:[%s274 + $0x18] sm:%s267]
                  %283 = vst [vmem:[%s275 + $0xc] sm:%s267] %v282
                  %v284 = vld [vmem:[%s274 + $0x20] sm:%s267]
                  %285 = vst [vmem:[%s275 + $0x10] sm:%s267] %v284
                  %v286 = vld [vmem:[%s274 + $0x28] sm:%s267]
                  %287 = vst [vmem:[%s275 + $0x14] sm:%s267] %v286
                  %v288 = vld [vmem:[%s274 + $0x30] sm:%s267]
                  %289 = vst [vmem:[%s275 + $0x18] sm:%s267] %v288
                  %v290 = vld [vmem:[%s274 + $0x38] sm:%s267]
                  %291 = vst [vmem:[%s275 + $0x1c] sm:%s267] %v290
                  %v292 = vld [vmem:[%s274 + $0x40] sm:%s267]
                  %293 = vst [vmem:[%s275 + $0x20] sm:%s267] %v292
                  %v294 = vld [vmem:[%s274 + $0x48] sm:%s267]
                  %295 = vst [vmem:[%s275 + $0x24] sm:%s267] %v294
                  %v296 = vld [vmem:[%s274 + $0x50] sm:%s267]
                  %297 = vst [vmem:[%s275 + $0x28] sm:%s267] %v296
                  %v298 = vld [vmem:[%s274 + $0x58] sm:%s267]
                  %299 = vst [vmem:[%s275 + $0x2c] sm:%s267] %v298
                  %v300 = vld [vmem:[%s274 + $0x60] sm:%s267]
                  %301 = vst [vmem:[%s275 + $0x30] sm:%s267] %v300
                  %v302 = vld [vmem:[%s274 + $0x68] sm:%s267]
                  %303 = vst [vmem:[%s275 + $0x34] sm:%s267] %v302
                  %v304 = vld [vmem:[%s274 + $0x70] sm:%s267]
                  %305 = vst [vmem:[%s275 + $0x38] sm:%s267] %v304
                  %v306 = vld [vmem:[%s274 + $0x78] sm:%s267]
                  %307 = vst [vmem:[%s275 + $0x3c] sm:%s267] %v306
                $region63: #{gnn_ptcldpred_merg_side_forward.6} parent=50 // loop_footer
                  %s273 = sadd.s32 1, %s269
                $region64: #{gnn_ptcldpred_merg_side_forward.6} parent=50 // loop_footer_branch
                  %268 = sbr.rel target = $region60
                $region65: #{gnn_ptcldpred_merg_side_forward.6} parent=50 // loop_exit
                  _
              $region51: #{gnn_ptcldpred_merg_side_forward.6} parent=35 // pred_fallthru
                _
            $region36: #{gnn_ptcldpred_merg_side_forward.6} parent=31 // pred_fallthru
              _
            // Predicated region
            $region37: #{gnn_ptcldpred_merg_side_forward.6} parent=31 // pred_check
              _
            $region38: #{gnn_ptcldpred_merg_side_forward.6} parent=31 // pred_check_branch
              %213 = sbr.rel (0) target = $region40
            $region39: #{gnn_ptcldpred_merg_side_forward.6} parent=31 // pred_region
              %s215 = ssub.s32 16, 1
              loop: start=0, step=1, limit=1
              $region41: #{gnn_ptcldpred_merg_side_forward.6} parent=39 // loop_pre_header
                _
              $region42: #{gnn_ptcldpred_merg_side_forward.6} parent=39 // loop_header
                %s217 = sphi 0, %s221
                %p218 = scmp.ge.s32.totalorder %s217, 1
                %s222 = sphi %s207, %s207
                %s223 = sphi %s202, %s202
              $region43: #{gnn_ptcldpred_merg_side_forward.6} parent=39 // loop_header_branch
                %220 = sbr.rel (%p218) target = $region47
              $region44: #{gnn_ptcldpred_merg_side_forward.6} parent=39 // loop_body
                %v224 = vld [vmem:[%s222] sm:%s215]
                %225 = vst [vmem:[%s223] sm:%s215] %v224
                %v226 = vld [vmem:[%s222 + $0x8] sm:%s215]
                %227 = vst [vmem:[%s223 + $0x4] sm:%s215] %v226
                %v228 = vld [vmem:[%s222 + $0x10] sm:%s215]
                %229 = vst [vmem:[%s223 + $0x8] sm:%s215] %v228
                %v230 = vld [vmem:[%s222 + $0x18] sm:%s215]
                %231 = vst [vmem:[%s223 + $0xc] sm:%s215] %v230
                %v232 = vld [vmem:[%s222 + $0x20] sm:%s215]
                %233 = vst [vmem:[%s223 + $0x10] sm:%s215] %v232
                %v234 = vld [vmem:[%s222 + $0x28] sm:%s215]
                %235 = vst [vmem:[%s223 + $0x14] sm:%s215] %v234
                %v236 = vld [vmem:[%s222 + $0x30] sm:%s215]
                %237 = vst [vmem:[%s223 + $0x18] sm:%s215] %v236
                %v238 = vld [vmem:[%s222 + $0x38] sm:%s215]
                %239 = vst [vmem:[%s223 + $0x1c] sm:%s215] %v238
                %v240 = vld [vmem:[%s222 + $0x40] sm:%s215]
                %241 = vst [vmem:[%s223 + $0x20] sm:%s215] %v240
                %v242 = vld [vmem:[%s222 + $0x48] sm:%s215]
                %243 = vst [vmem:[%s223 + $0x24] sm:%s215] %v242
                %v244 = vld [vmem:[%s222 + $0x50] sm:%s215]
                %245 = vst [vmem:[%s223 + $0x28] sm:%s215] %v244
                %v246 = vld [vmem:[%s222 + $0x58] sm:%s215]
                %247 = vst [vmem:[%s223 + $0x2c] sm:%s215] %v246
                %v248 = vld [vmem:[%s222 + $0x60] sm:%s215]
                %249 = vst [vmem:[%s223 + $0x30] sm:%s215] %v248
                %v250 = vld [vmem:[%s222 + $0x68] sm:%s215]
                %251 = vst [vmem:[%s223 + $0x34] sm:%s215] %v250
                %v252 = vld [vmem:[%s222 + $0x70] sm:%s215]
                %253 = vst [vmem:[%s223 + $0x38] sm:%s215] %v252
                %v254 = vld [vmem:[%s222 + $0x78] sm:%s215]
                %255 = vst [vmem:[%s223 + $0x3c] sm:%s215] %v254
              $region45: #{gnn_ptcldpred_merg_side_forward.6} parent=39 // loop_footer
                %s221 = sadd.s32 1, %s217
              $region46: #{gnn_ptcldpred_merg_side_forward.6} parent=39 // loop_footer_branch
                %216 = sbr.rel target = $region42
              $region47: #{gnn_ptcldpred_merg_side_forward.6} parent=39 // loop_exit
                _
            $region40: #{gnn_ptcldpred_merg_side_forward.6} parent=31 // pred_fallthru
              _
          $region32: #{gnn_ptcldpred_merg_side_forward.6} parent=27 // pred_fallthru
            _
          %308 = vnop
        $region28: #{gnn_ptcldpred_merg_side_forward.6} parent=23 // pred_fallthru
          _
        // Predicated region
        $region66: #{gnn_ptcldpred_merg_side_forward.6} parent=23 // pred_check
          %p309 = pneg %p71
        $region67: #{gnn_ptcldpred_merg_side_forward.6} parent=23 // pred_check_branch
          %311 = sbr.rel (%p309) target = $region69
        $region68: #{gnn_ptcldpred_merg_side_forward.6} parent=23 // pred_region
          %s312 = smul.u32 16, %s19
          %p313 = scmp.lt.s32.totalorder %s312, 31
          %s314 = scalar_select %p313, %s312, 31
          %s315 = smul.addr %s314, 4
          %s316 = scalar_lea.vmem %s1, %s315
          %s317 = smul.u32 16, %s19
        $region69: #{gnn_ptcldpred_merg_side_forward.6} parent=23 // pred_fallthru
          _
        // Predicated region
        $region70: #{gnn_ptcldpred_merg_side_forward.6} parent=23 // pred_check
          %p318 = pneg %p97
        $region71: #{gnn_ptcldpred_merg_side_forward.6} parent=23 // pred_check_branch
          %320 = sbr.rel (%p318) target = $region73
        $region72: #{gnn_ptcldpred_merg_side_forward.6} parent=23 // pred_region
          %s321 = smul.u32 16, %s18
          %p322 = scmp.lt.s32.totalorder %s321, 31
          %s323 = scalar_select %p322, %s321, 31
          %s324 = smul.addr %s323, 8
          %s325 = scalar_lea.vmem %s2, %s324
          %s326 = smul.u32 16, %s18
        $region73: #{gnn_ptcldpred_merg_side_forward.6} parent=23 // pred_fallthru
          _
      $region24: #{gnn_ptcldpred_merg_side_forward.6} parent=5 // pred_fallthru
        _
      %p327 = scmp.le.s32.totalorder 1, %s11
      %p328 = scmp.lt.s32.totalorder %s11, 5
      %p329 = pnand %p327, %p328
      %p330 = pneg %p329
      // Predicated region
      $region74: #{gnn_ptcldpred_merg_side_forward.6} parent=5 // pred_check
        _
      $region75: #{gnn_ptcldpred_merg_side_forward.6} parent=5 // pred_check_branch
        %332 = sbr.rel (%p329) target = $region77
      $region76: #{gnn_ptcldpred_merg_side_forward.6} parent=5 // pred_region
        %s333 = ssub.s32 %s11, 1
        %s334 = sand.u32 %s38, 1
        %s335 = sand.u32 %s38, 1
        %s336 = smul.addr %s335, 64
        %s337 = scalar_lea.vmem [#allocation3], %s336
        // Predicated region
        $region78: #{gnn_ptcldpred_merg_side_forward.6} parent=76 // pred_check
          %p338 = pneg %p51
        $region79: #{gnn_ptcldpred_merg_side_forward.6} parent=76 // pred_check_branch
          %340 = sbr.rel (%p338) target = $region81
        $region80: #{gnn_ptcldpred_merg_side_forward.6} parent=76 // pred_region
          _
        $region81: #{gnn_ptcldpred_merg_side_forward.6} parent=76 // pred_fallthru
          _
        %s341 = sand.u32 %s38, 1
        %s342 = sand.u32 %s38, 1
        %s343 = smul.addr %s342, 64
        %s344 = scalar_lea.vmem [#allocation3], %s343
        %p345 = pneg %p51
        %p346 = pneg %p48
        %s347 = smul.u32 16, %s21
        %p348 = scmp.lt.s32.totalorder %s347, 31
        %s349 = scalar_select %p348, %s347, 31
        %s350 = smul.addr %s349, 4
        %s351 = scalar_lea.vmem %s1, %s350
        %p352 = pneg %p77
        %p353 = pneg %p74
        %s354 = smul.u32 16, %s20
        %p355 = scmp.lt.s32.totalorder %s354, 31
        %s356 = scalar_select %p355, %s354, 31
        %s357 = smul.addr %s356, 8
        %s358 = scalar_lea.vmem %s2, %s357
        %p359 = pneg %p103
        %p360 = pneg %p100
        %p361 = pneg %p124
        %p362 = pneg %p121
        %p363 = pneg %p145
        %p364 = pneg %p142
        %p365 = pneg %p171
        %p366 = pneg %p168
        %s367 = smul.u32 16, %s20
        %p368 = scmp.lt.s32.totalorder %s367, 31
        %s369 = scalar_select %p368, %s367, 31
        %s370 = smul.addr %s369, 8
        %s371 = scalar_lea.vmem %s5, %s370
        %s372 = smul.u32 16, %s20
        %s373 = smul.u32 16, %s21
        %p374 = scmp.lt.s32.totalorder %s373, 31
        %s375 = scalar_select %p374, %s373, 31
        %s376 = smul.addr %s375, 4
        %s377 = scalar_lea.vmem %s1, %s376
        %s378 = smul.u32 16, %s21
        %s379 = smul.u32 16, %s20
        %p380 = scmp.lt.s32.totalorder %s379, 31
        %s381 = scalar_select %p380, %s379, 31
        %s382 = smul.addr %s381, 8
        %s383 = scalar_lea.vmem %s2, %s382
        %s384 = smul.u32 16, %s20
        %s385 = smul.u32 16, %s20
        %p386 = scmp.lt.s32.totalorder %s385, 31
        %s387 = scalar_select %p386, %s385, 31
        %s388 = smul.addr %s387, 8
        %s389 = scalar_lea.vmem %s5, %s388
        %s390 = smul.u32 16, %s20
        %p391 = scmp.eq.s32.totalorder %s21, 0
        // Predicated region
        $region82: #{gnn_ptcldpred_merg_side_forward.6} parent=76 // pred_check
          %p392 = pneg %p391
        $region83: #{gnn_ptcldpred_merg_side_forward.6} parent=76 // pred_check_branch
          %394 = sbr.rel (%p392) target = $region85
        $region84: #{gnn_ptcldpred_merg_side_forward.6} parent=76 // pred_region
          %v395 = vld [vmem:[%s383] sm:$0xff]
          %v396 = vld [vmem:[%s383 + $0x8] sm:$0xff]
          %v397 = vld [vmem:[%s383 + $0x10] sm:$0xff]
          %v398 = vld [vmem:[%s383 + $0x18] sm:$0xff]
          %v399 = vld [vmem:[%s383 + $0x20] sm:$0xff]
          %v400 = vld [vmem:[%s383 + $0x28] sm:$0xff]
          %v401 = vld [vmem:[%s383 + $0x30] sm:$0xff]
          %v402 = vld [vmem:[%s383 + $0x38] sm:$0xff]
          %v403 = vld [vmem:[%s383 + $0x40] sm:$0xff]
          %v404 = vld [vmem:[%s383 + $0x48] sm:$0xff]
          %v405 = vld [vmem:[%s383 + $0x50] sm:$0xff]
          %v406 = vld [vmem:[%s383 + $0x58] sm:$0xff]
          %v407 = vld [vmem:[%s383 + $0x60] sm:$0xff]
          %v408 = vld [vmem:[%s383 + $0x68] sm:$0xff]
          %v409 = vld [vmem:[%s383 + $0x70] sm:$0xff]
          %v410 = vld [vmem:[%s383 + $0x78] sm:$0xff]
          %411 = vst [vmem:[#allocation2] sm:$0xff] %v395
          %412 = vst [vmem:[#allocation2 + $0x8] sm:$0xff] %v396
          %413 = vst [vmem:[#allocation2 + $0x10] sm:$0xff] %v397
          %414 = vst [vmem:[#allocation2 + $0x18] sm:$0xff] %v398
          %415 = vst [vmem:[#allocation2 + $0x20] sm:$0xff] %v399
          %416 = vst [vmem:[#allocation2 + $0x28] sm:$0xff] %v400
          %417 = vst [vmem:[#allocation2 + $0x30] sm:$0xff] %v401
          %418 = vst [vmem:[#allocation2 + $0x38] sm:$0xff] %v402
          %419 = vst [vmem:[#allocation2 + $0x40] sm:$0xff] %v403
          %420 = vst [vmem:[#allocation2 + $0x48] sm:$0xff] %v404
          %421 = vst [vmem:[#allocation2 + $0x50] sm:$0xff] %v405
          %422 = vst [vmem:[#allocation2 + $0x58] sm:$0xff] %v406
          %423 = vst [vmem:[#allocation2 + $0x60] sm:$0xff] %v407
          %424 = vst [vmem:[#allocation2 + $0x68] sm:$0xff] %v408
          %425 = vst [vmem:[#allocation2 + $0x70] sm:$0xff] %v409
          %426 = vst [vmem:[#allocation2 + $0x78] sm:$0xff] %v410
        $region85: #{gnn_ptcldpred_merg_side_forward.6} parent=76 // pred_fallthru
          _
        %v427 = vld [vmem:[#allocation2] sm:$0xff]
        %v428 = vld [vmem:[#allocation2 + $0x8] sm:$0xff]
        %v429 = vld [vmem:[#allocation2 + $0x10] sm:$0xff]
        %v430 = vld [vmem:[#allocation2 + $0x18] sm:$0xff]
        %v431 = vld [vmem:[#allocation2 + $0x20] sm:$0xff]
        %v432 = vld [vmem:[#allocation2 + $0x28] sm:$0xff]
        %v433 = vld [vmem:[#allocation2 + $0x30] sm:$0xff]
        %v434 = vld [vmem:[#allocation2 + $0x38] sm:$0xff]
        %v435 = vld [vmem:[#allocation2 + $0x40] sm:$0xff]
        %v436 = vld [vmem:[#allocation2 + $0x48] sm:$0xff]
        %v437 = vld [vmem:[#allocation2 + $0x50] sm:$0xff]
        %v438 = vld [vmem:[#allocation2 + $0x58] sm:$0xff]
        %v439 = vld [vmem:[#allocation2 + $0x60] sm:$0xff]
        %v440 = vld [vmem:[#allocation2 + $0x68] sm:$0xff]
        %v441 = vld [vmem:[#allocation2 + $0x70] sm:$0xff]
        %v442 = vld [vmem:[#allocation2 + $0x78] sm:$0xff]
        %v443 = vld [vmem:[%s337] sm:$0xf]
        %v444 = vld [vmem:[%s337 + $0x4] sm:$0xf]
        %v445 = vld [vmem:[%s337 + $0x8] sm:$0xf]
        %v446 = vld [vmem:[%s337 + $0xc] sm:$0xf]
        %v447 = vld [vmem:[%s337 + $0x10] sm:$0xf]
        %v448 = vld [vmem:[%s337 + $0x14] sm:$0xf]
        %v449 = vld [vmem:[%s337 + $0x18] sm:$0xf]
        %v450 = vld [vmem:[%s337 + $0x1c] sm:$0xf]
        %v451 = vld [vmem:[%s337 + $0x20] sm:$0xf]
        %v452 = vld [vmem:[%s337 + $0x24] sm:$0xf]
        %v453 = vld [vmem:[%s337 + $0x28] sm:$0xf]
        %v454 = vld [vmem:[%s337 + $0x2c] sm:$0xf]
        %v455 = vld [vmem:[%s337 + $0x30] sm:$0xf]
        %v456 = vld [vmem:[%s337 + $0x34] sm:$0xf]
        %v457 = vld [vmem:[%s337 + $0x38] sm:$0xf]
        %v458 = vld [vmem:[%s337 + $0x3c] sm:$0xf]
        %v459 = vld [vmem:[%s377] sm:$0xf]
        %v460 = vld [vmem:[%s377 + $0x4] sm:$0xf]
        %v461 = vld [vmem:[%s377 + $0x8] sm:$0xf]
        %v462 = vld [vmem:[%s377 + $0xc] sm:$0xf]
        %v463 = vld [vmem:[%s377 + $0x10] sm:$0xf]
        %v464 = vld [vmem:[%s377 + $0x14] sm:$0xf]
        %v465 = vld [vmem:[%s377 + $0x18] sm:$0xf]
        %v466 = vld [vmem:[%s377 + $0x1c] sm:$0xf]
        %v467 = vld [vmem:[%s377 + $0x20] sm:$0xf]
        %v468 = vld [vmem:[%s377 + $0x24] sm:$0xf]
        %v469 = vld [vmem:[%s377 + $0x28] sm:$0xf]
        %v470 = vld [vmem:[%s377 + $0x2c] sm:$0xf]
        %v471 = vld [vmem:[%s377 + $0x30] sm:$0xf]
        %v472 = vld [vmem:[%s377 + $0x34] sm:$0xf]
        %v473 = vld [vmem:[%s377 + $0x38] sm:$0xf]
        %v474 = vld [vmem:[%s377 + $0x3c] sm:$0xf]
        %v491 = vunpack.c.l.b16 %v443
        %v492 = vunpack.c.l.b16 %v444
        %v493 = vunpack.c.l.b16 %v445
        %v494 = vunpack.c.l.b16 %v446
        %v495 = vunpack.c.l.b16 %v447
        %v496 = vunpack.c.l.b16 %v448
        %v497 = vunpack.c.l.b16 %v449
        %v498 = vunpack.c.l.b16 %v450
        %v499 = vunpack.c.l.b16 %v451
        %v500 = vunpack.c.l.b16 %v452
        %v501 = vunpack.c.l.b16 %v453
        %v502 = vunpack.c.l.b16 %v454
        %v503 = vunpack.c.l.b16 %v455
        %v504 = vunpack.c.l.b16 %v456
        %v505 = vunpack.c.l.b16 %v457
        %v506 = vunpack.c.l.b16 %v458
        %v507 = vpack.c.b16 %v492, %v491
        %v508 = vpack.c.b16 %v494, %v493
        %v509 = vpack.c.b16 %v496, %v495
        %v510 = vpack.c.b16 %v498, %v497
        %v511 = vpack.c.b16 %v500, %v499
        %v512 = vpack.c.b16 %v502, %v501
        %v513 = vpack.c.b16 %v504, %v503
        %v514 = vpack.c.b16 %v506, %v505
        %v539 = vunpack.c.l.b16 %v459
        %v540 = vunpack.c.l.b16 %v460
        %v541 = vunpack.c.l.b16 %v461
        %v542 = vunpack.c.l.b16 %v462
        %v543 = vunpack.c.l.b16 %v463
        %v544 = vunpack.c.l.b16 %v464
        %v545 = vunpack.c.l.b16 %v465
        %v546 = vunpack.c.l.b16 %v466
        %v547 = vunpack.c.l.b16 %v467
        %v548 = vunpack.c.l.b16 %v468
        %v549 = vunpack.c.l.b16 %v469
        %v550 = vunpack.c.l.b16 %v470
        %v551 = vunpack.c.l.b16 %v471
        %v552 = vunpack.c.l.b16 %v472
        %v553 = vunpack.c.l.b16 %v473
        %v554 = vunpack.c.l.b16 %v474
        %v555 = vpack.c.b16 %v540, %v539
        %v556 = vpack.c.b16 %v542, %v541
        %v557 = vpack.c.b16 %v544, %v543
        %v558 = vpack.c.b16 %v546, %v545
        %v559 = vpack.c.b16 %v548, %v547
        %v560 = vpack.c.b16 %v550, %v549
        %v561 = vpack.c.b16 %v552, %v551
        %v562 = vpack.c.b16 %v554, %v553
        %571 = vmatpush.bf16.msra.mxu0 %v562
        %572 = vmatpush.bf16.msra.mxu0 %v561
        %573 = vmatpush.bf16.msra.mxu0 %v560
        %574 = vmatpush.bf16.msra.mxu0 %v559
        %575 = vmatpush.bf16.msra.mxu0 %v558
        %576 = vmatpush.bf16.msra.mxu0 %v557
        %577 = vmatpush.bf16.msra.mxu0 %v556
        %578 = vmatpush.bf16.msra.mxu0 %v555
        %579 = vmatmul.bf16.gmra.mxu0 %v507
        %v580 = vpop.f32.mrf.mxu0
        %v581 = vadd.f32 0.0, %v580
        %v582 = vpop.f32.mrf.mxu0
        %v583 = vadd.f32 0.0, %v582
        %584 = vmatmul.bf16.gmra.mxu0 %v508
        %v585 = vpop.f32.mrf.mxu0
        %v586 = vadd.f32 0.0, %v585
        %v587 = vpop.f32.mrf.mxu0
        %v588 = vadd.f32 0.0, %v587
        %589 = vmatmul.bf16.gmra.mxu0 %v509
        %v590 = vpop.f32.mrf.mxu0
        %v591 = vadd.f32 0.0, %v590
        %v592 = vpop.f32.mrf.mxu0
        %v593 = vadd.f32 0.0, %v592
        %594 = vmatmul.bf16.gmra.mxu0 %v510
        %v595 = vpop.f32.mrf.mxu0
        %v596 = vadd.f32 0.0, %v595
        %v597 = vpop.f32.mrf.mxu0
        %v598 = vadd.f32 0.0, %v597
        %599 = vmatmul.bf16.gmra.mxu0 %v511
        %v600 = vpop.f32.mrf.mxu0
        %v601 = vadd.f32 0.0, %v600
        %v602 = vpop.f32.mrf.mxu0
        %v603 = vadd.f32 0.0, %v602
        %604 = vmatmul.bf16.gmra.mxu0 %v512
        %v605 = vpop.f32.mrf.mxu0
        %v606 = vadd.f32 0.0, %v605
        %v607 = vpop.f32.mrf.mxu0
        %v608 = vadd.f32 0.0, %v607
        %609 = vmatmul.bf16.gmra.mxu0 %v513
        %v610 = vpop.f32.mrf.mxu0
        %v611 = vadd.f32 0.0, %v610
        %v612 = vpop.f32.mrf.mxu0
        %v613 = vadd.f32 0.0, %v612
        %614 = vmatmul.bf16.gmra.mxu0 %v514
        %v615 = vpop.f32.mrf.mxu0
        %v616 = vadd.f32 0.0, %v615
        %v617 = vpop.f32.mrf.mxu0
        %v618 = vadd.f32 0.0, %v617
        %619 = vdwg.mxu0
        %v620 = vadd.f32 %v427, %v581
        %v621 = vadd.f32 %v428, %v583
        %v622 = vadd.f32 %v429, %v586
        %v623 = vadd.f32 %v430, %v588
        %v624 = vadd.f32 %v431, %v591
        %v625 = vadd.f32 %v432, %v593
        %v626 = vadd.f32 %v433, %v596
        %v627 = vadd.f32 %v434, %v598
        %v628 = vadd.f32 %v435, %v601
        %v629 = vadd.f32 %v436, %v603
        %v630 = vadd.f32 %v437, %v606
        %v631 = vadd.f32 %v438, %v608
        %v632 = vadd.f32 %v439, %v611
        %v633 = vadd.f32 %v440, %v613
        %v634 = vadd.f32 %v441, %v616
        %v635 = vadd.f32 %v442, %v618
        %636 = vst [vmem:[#allocation2] sm:$0xff] %v620
        %637 = vst [vmem:[#allocation2 + $0x8] sm:$0xff] %v621
        %638 = vst [vmem:[#allocation2 + $0x10] sm:$0xff] %v622
        %639 = vst [vmem:[#allocation2 + $0x18] sm:$0xff] %v623
        %640 = vst [vmem:[#allocation2 + $0x20] sm:$0xff] %v624
        %641 = vst [vmem:[#allocation2 + $0x28] sm:$0xff] %v625
        %642 = vst [vmem:[#allocation2 + $0x30] sm:$0xff] %v626
        %643 = vst [vmem:[#allocation2 + $0x38] sm:$0xff] %v627
        %644 = vst [vmem:[#allocation2 + $0x40] sm:$0xff] %v628
        %645 = vst [vmem:[#allocation2 + $0x48] sm:$0xff] %v629
        %646 = vst [vmem:[#allocation2 + $0x50] sm:$0xff] %v630
        %647 = vst [vmem:[#allocation2 + $0x58] sm:$0xff] %v631
        %648 = vst [vmem:[#allocation2 + $0x60] sm:$0xff] %v632
        %649 = vst [vmem:[#allocation2 + $0x68] sm:$0xff] %v633
        %650 = vst [vmem:[#allocation2 + $0x70] sm:$0xff] %v634
        %651 = vst [vmem:[#allocation2 + $0x78] sm:$0xff] %v635
        %p652 = scmp.eq.s32.totalorder %s21, 1
        // Predicated region
        $region86: #{gnn_ptcldpred_merg_side_forward.6} parent=76 // pred_check
          %p653 = pneg %p652
        $region87: #{gnn_ptcldpred_merg_side_forward.6} parent=76 // pred_check_branch
          %655 = sbr.rel (%p653) target = $region89
        $region88: #{gnn_ptcldpred_merg_side_forward.6} parent=76 // pred_region
          %v656 = vld [vmem:[#allocation2] sm:$0xff]
          %v657 = vld [vmem:[#allocation2 + $0x8] sm:$0xff]
          %v658 = vld [vmem:[#allocation2 + $0x10] sm:$0xff]
          %v659 = vld [vmem:[#allocation2 + $0x18] sm:$0xff]
          %v660 = vld [vmem:[#allocation2 + $0x20] sm:$0xff]
          %v661 = vld [vmem:[#allocation2 + $0x28] sm:$0xff]
          %v662 = vld [vmem:[#allocation2 + $0x30] sm:$0xff]
          %v663 = vld [vmem:[#allocation2 + $0x38] sm:$0xff]
          %v664 = vld [vmem:[#allocation2 + $0x40] sm:$0xff]
          %v665 = vld [vmem:[#allocation2 + $0x48] sm:$0xff]
          %v666 = vld [vmem:[#allocation2 + $0x50] sm:$0xff]
          %v667 = vld [vmem:[#allocation2 + $0x58] sm:$0xff]
          %v668 = vld [vmem:[#allocation2 + $0x60] sm:$0xff]
          %v669 = vld [vmem:[#allocation2 + $0x68] sm:$0xff]
          %v670 = vld [vmem:[#allocation2 + $0x70] sm:$0xff]
          %v671 = vld [vmem:[#allocation2 + $0x78] sm:$0xff]
          %v672 = vld [vmem:[%s3] sm:$0xff]
          %v673 = vld [vmem:[%s3 + $0x8] sm:$0xff]
          %v674 = vld [vmem:[%s3 + $0x10] sm:$0xff]
          %v675 = vld [vmem:[%s3 + $0x18] sm:$0xff]
          %v676 = vld [vmem:[%s3 + $0x20] sm:$0xff]
          %v677 = vld [vmem:[%s3 + $0x28] sm:$0xff]
          %v678 = vld [vmem:[%s3 + $0x30] sm:$0xff]
          %v679 = vld [vmem:[%s3 + $0x38] sm:$0xff]
          %v680 = vld [vmem:[%s3 + $0x40] sm:$0xff]
          %v681 = vld [vmem:[%s3 + $0x48] sm:$0xff]
          %v682 = vld [vmem:[%s3 + $0x50] sm:$0xff]
          %v683 = vld [vmem:[%s3 + $0x58] sm:$0xff]
          %v684 = vld [vmem:[%s3 + $0x60] sm:$0xff]
          %v685 = vld [vmem:[%s3 + $0x68] sm:$0xff]
          %v686 = vld [vmem:[%s3 + $0x70] sm:$0xff]
          %v687 = vld [vmem:[%s3 + $0x78] sm:$0xff]
          %v688 = vld [vmem:[%s4] sm:$0x1]
          %v690 = vperm.slane %v688, 0
          %692 = vmatpush.msra.mxu0 %v687
          %693 = vmatpush.msra.mxu0 %v686
          %694 = vmatpush.msra.mxu0 %v685
          %695 = vmatpush.msra.mxu0 %v684
          %696 = vmatpush.msra.mxu0 %v683
          %697 = vmatpush.msra.mxu0 %v682
          %698 = vmatpush.msra.mxu0 %v681
          %699 = vmatpush.msra.mxu0 %v680
          %700 = vmatpush.msra.mxu0 %v679
          %701 = vmatpush.msra.mxu0 %v678
          %702 = vmatpush.msra.mxu0 %v677
          %703 = vmatpush.msra.mxu0 %v676
          %704 = vmatpush.msra.mxu0 %v675
          %705 = vmatpush.msra.mxu0 %v674
          %706 = vmatpush.msra.mxu0 %v673
          %707 = vmatpush.msra.mxu0 %v672
          %708 = vmatmul.f32.gmra.mxu0 %v656
          %v709 = vpop.f32.mrf.mxu0
          %v710 = vadd.f32 %v690, %v709
          %711 = vmatmul.f32.gmra.mxu0 %v657
          %v712 = vpop.f32.mrf.mxu0
          %v713 = vadd.f32 %v690, %v712
          %714 = vmatmul.f32.gmra.mxu0 %v658
          %v715 = vpop.f32.mrf.mxu0
          %v716 = vadd.f32 %v690, %v715
          %717 = vmatmul.f32.gmra.mxu0 %v659
          %v718 = vpop.f32.mrf.mxu0
          %v719 = vadd.f32 %v690, %v718
          %720 = vmatmul.f32.gmra.mxu0 %v660
          %v721 = vpop.f32.mrf.mxu0
          %v722 = vadd.f32 %v690, %v721
          %723 = vmatmul.f32.gmra.mxu0 %v661
          %v724 = vpop.f32.mrf.mxu0
          %v725 = vadd.f32 %v690, %v724
          %726 = vmatmul.f32.gmra.mxu0 %v662
          %v727 = vpop.f32.mrf.mxu0
          %v728 = vadd.f32 %v690, %v727
          %729 = vmatmul.f32.gmra.mxu0 %v663
          %v730 = vpop.f32.mrf.mxu0
          %v731 = vadd.f32 %v690, %v730
          %732 = vmatmul.f32.gmra.mxu0 %v664
          %v733 = vpop.f32.mrf.mxu0
          %v734 = vadd.f32 %v690, %v733
          %735 = vmatmul.f32.gmra.mxu0 %v665
          %v736 = vpop.f32.mrf.mxu0
          %v737 = vadd.f32 %v690, %v736
          %738 = vmatmul.f32.gmra.mxu0 %v666
          %v739 = vpop.f32.mrf.mxu0
          %v740 = vadd.f32 %v690, %v739
          %741 = vmatmul.f32.gmra.mxu0 %v667
          %v742 = vpop.f32.mrf.mxu0
          %v743 = vadd.f32 %v690, %v742
          %744 = vmatmul.f32.gmra.mxu0 %v668
          %v745 = vpop.f32.mrf.mxu0
          %v746 = vadd.f32 %v690, %v745
          %747 = vmatmul.f32.gmra.mxu0 %v669
          %v748 = vpop.f32.mrf.mxu0
          %v749 = vadd.f32 %v690, %v748
          %750 = vmatmul.f32.gmra.mxu0 %v670
          %v751 = vpop.f32.mrf.mxu0
          %v752 = vadd.f32 %v690, %v751
          %753 = vmatmul.f32.gmra.mxu0 %v671
          %v754 = vpop.f32.mrf.mxu0
          %v755 = vadd.f32 %v690, %v754
          %756 = vdwg.mxu0
          %757 = vst [vmem:[%s389] sm:$0xff] %v710
          %758 = vst [vmem:[%s389 + $0x8] sm:$0xff] %v713
          %759 = vst [vmem:[%s389 + $0x10] sm:$0xff] %v716
          %760 = vst [vmem:[%s389 + $0x18] sm:$0xff] %v719
          %761 = vst [vmem:[%s389 + $0x20] sm:$0xff] %v722
          %762 = vst [vmem:[%s389 + $0x28] sm:$0xff] %v725
          %763 = vst [vmem:[%s389 + $0x30] sm:$0xff] %v728
          %764 = vst [vmem:[%s389 + $0x38] sm:$0xff] %v731
          %765 = vst [vmem:[%s389 + $0x40] sm:$0xff] %v734
          %766 = vst [vmem:[%s389 + $0x48] sm:$0xff] %v737
          %767 = vst [vmem:[%s389 + $0x50] sm:$0xff] %v740
          %768 = vst [vmem:[%s389 + $0x58] sm:$0xff] %v743
          %769 = vst [vmem:[%s389 + $0x60] sm:$0xff] %v746
          %770 = vst [vmem:[%s389 + $0x68] sm:$0xff] %v749
          %771 = vst [vmem:[%s389 + $0x70] sm:$0xff] %v752
          %772 = vst [vmem:[%s389 + $0x78] sm:$0xff] %v755
        $region89: #{gnn_ptcldpred_merg_side_forward.6} parent=76 // pred_fallthru
          _
        %s773 = smul.u32 16, %s20
        %p774 = scmp.lt.s32.totalorder %s773, 31
        %s775 = scalar_select %p774, %s773, 31
        %s776 = smul.addr %s775, 8
        %s777 = scalar_lea.vmem %s5, %s776
        // Predicated region
        $region90: #{gnn_ptcldpred_merg_side_forward.6} parent=76 // pred_check
          %p778 = pneg %p168
        $region91: #{gnn_ptcldpred_merg_side_forward.6} parent=76 // pred_check_branch
          %780 = sbr.rel (%p778) target = $region93
        $region92: #{gnn_ptcldpred_merg_side_forward.6} parent=76 // pred_region
          %s781 = smul.u32 16, %s20
        $region93: #{gnn_ptcldpred_merg_side_forward.6} parent=76 // pred_fallthru
          _
      $region77: #{gnn_ptcldpred_merg_side_forward.6} parent=5 // pred_fallthru
        _
      %p782 = scmp.le.s32.totalorder 2, %s11
      // Predicated region
      $region94: #{gnn_ptcldpred_merg_side_forward.6} parent=5 // pred_check
        %p783 = pneg %p782
      $region95: #{gnn_ptcldpred_merg_side_forward.6} parent=5 // pred_check_branch
        %785 = sbr.rel (%p783) target = $region97
      $region96: #{gnn_ptcldpred_merg_side_forward.6} parent=5 // pred_region
        %s786 = ssub.s32 %s11, 2
        // Predicated region
        $region98: #{gnn_ptcldpred_merg_side_forward.6} parent=96 // pred_check
          %p787 = pneg %p174
        $region99: #{gnn_ptcldpred_merg_side_forward.6} parent=96 // pred_check_branch
          %789 = sbr.rel (%p787) target = $region101
        $region100: #{gnn_ptcldpred_merg_side_forward.6} parent=96 // pred_region
          %s790 = smul.u32 16, %s22
          %p791 = scmp.lt.s32.totalorder %s790, 31
          %s792 = scalar_select %p791, %s790, 31
          %s793 = smul.addr %s792, 8
          %s794 = scalar_lea.vmem %s5, %s793
        $region101: #{gnn_ptcldpred_merg_side_forward.6} parent=96 // pred_fallthru
          _
      $region97: #{gnn_ptcldpred_merg_side_forward.6} parent=5 // pred_fallthru
        _
    $region6: #{gnn_ptcldpred_merg_side_forward.6} parent=1 // loop_footer
      %s15 = sadd.s32 1, %s11
    $region7: #{gnn_ptcldpred_merg_side_forward.6} parent=1 // loop_footer_branch
      %10 = sbr.rel target = $region3
    $region8: #{gnn_ptcldpred_merg_side_forward.6} parent=1 // loop_exit
      _

// kernel: gnn_ptcldpred_merg_side_forward.7
$region0: #{gnn_ptcldpred_merg_side_forward.7}
  #allocation0 [shape = 'u32[]', space=smem, size = 0x4, offset = 0x4, fixed_abs, tag = 'smem constant byte address 0x4 - core index']
  #allocation1 [shape = 'u32[72,128]{1,0:T(1,128)}', space=vmem, size = 0x9000, scoped, tag = 'internal scratch']
  #allocation2 [shape = 'f32[2,128]{1,0:T(2,128)}', space=vmem, size = 0x400, scoped, tag = 'scratch operand']
  #allocation3 [shape = 'f32[1,1]{1,0:T(1,128)S(1)}', space=vmem, size = 0x200, scoped, tag = 'scoped memory for gnn_ptcldpred_merg_side_forward.7']
  %s0 = inlined_call_operand.vmem [shape: f32[256,128], index: 0, kind: input, shape index: {}]
  %s1 = inlined_call_operand.vmem [shape: f32[256,128], index: 1, kind: input, shape index: {}]
  %s2 = inlined_call_operand.vmem [shape: f32[2,256], index: 2, kind: input, shape index: {}]
  %s3 = inlined_call_operand.vmem [shape: f32[128,128], index: 3, kind: input, shape index: {}]
  %s4 = inlined_call_operand.vmem [shape: f32[1,128], index: 4, kind: input, shape index: {}]
  %s5 = inlined_call_operand.<no memory space> [shape: f32[1,1], index: 5, kind: input, shape index: {}]
  %s6 = inlined_call_operand.hbm [shape: f32[2,128], index: 6, kind: output, shape index: {}]
  %s7 = sld [smem:[#allocation0]]
  $region65: #{gnn_ptcldpred_merg_side_forward.7} parent=0
    _
  %s9 = ssub.s32 1, %s7
  %s10 = scalar_select 0, %s9, %s7
  %v11 = vstv %s5
  %12 = vst [vmem:[#allocation3] sm:$0x1] %v11
  $region1: #{gnn_ptcldpred_merg_side_forward.7} parent=0
    #allocation4 [shape = 'u8[1024]{0}', space=vmem, size = 0x400, scoped, tag = 'output window, operand 0, single buffered']
    #allocation5 [shape = 's32[2]{0}', space=sflag, size = 0x8, scoped, tag = 'scoped memory for gnn_ptcldpred_merg_side_forward.7']
    %13 = vsyncpa [#allocation5], 0
    loop: start=0, step=1, limit=4
    $region2: #{gnn_ptcldpred_merg_side_forward.7} parent=1 // loop_pre_header
      _
    $region3: #{gnn_ptcldpred_merg_side_forward.7} parent=1 // loop_header
      %s15 = sphi 0, %s19
      %p16 = scmp.ge.s32.totalorder %s15, 4
      %s25 = sphi 0, %s27
      %s28 = sphi 0, %s25
      %s29 = sphi 0, %s28
      %s45 = sphi 0, %s29
      %s51 = sphi 0, %s53
      %s54 = sphi 0, %s51
      %s55 = sphi 0, %s54
      %s71 = sphi 0, %s55
      %s77 = sphi 0, %s79
      %s80 = sphi 0, %s77
      %s81 = sphi 0, %s80
      %s97 = sphi 0, %s81
      %s101 = sphi 0, %s101
      %s103 = sphi 0, %s101
      %s104 = sphi 0, %s103
      %s118 = sphi 0, %s104
      %s122 = sphi 0, %s122
      %s124 = sphi 0, %s122
      %s125 = sphi 0, %s124
      %s139 = sphi 0, %s125
      %s143 = sphi 0, %s143
      %s145 = sphi 0, %s143
      %s146 = sphi 0, %s145
      %s160 = sphi 0, %s146
      %s164 = sphi 0, %s164
      %s166 = sphi 0, %s164
      %s167 = sphi 0, %s166
      %s181 = sphi 0, %s167
    $region4: #{gnn_ptcldpred_merg_side_forward.7} parent=1 // loop_header_branch
      %18 = sbr.rel (%p16) target = $region8
    $region5: #{gnn_ptcldpred_merg_side_forward.7} parent=1 // loop_body
      %s20 = ssub.s32 %s15, 1
      %s21 = ssub.s32 %s15, 2
      %s22 = sadd.s32 %s15, 1
      %s23 = ssub.s32 %s15, %s22
      %p24 = scmp.eq.s32.totalorder %s23, 0
      %s26 = sadd.s32 %s25, 1
      %s27 = scalar_select %p24, %s25, %s26
      %p30 = pneg %p24
      %p31 = scmp.eq.s32.totalorder %s15, 1
      %p32 = por %p30, %p31
      %p33 = scmp.ne.s32.totalorder %s25, %s28
      %p34 = scmp.eq.s32.totalorder %s15, 0
      %p35 = por %p33, %p34
      %p36 = scmp.ne.s32.totalorder %s25, %s28
      %p37 = scmp.eq.s32.totalorder %s20, 1
      %p38 = por %p36, %p37
      %p39 = scmp.ne.s32.totalorder %s28, %s29
      %p40 = scmp.eq.s32.totalorder %s20, 0
      %p41 = por %p39, %p40
      %p42 = scmp.ne.s32.totalorder %s28, %s29
      %p43 = scmp.eq.s32.totalorder %s21, 1
      %p44 = por %p42, %p43
      %p46 = scmp.ne.s32.totalorder %s29, %s45
      %p47 = scmp.eq.s32.totalorder %s21, 0
      %p48 = por %p46, %p47
      %s49 = ssub.s32 %s15, %s22
      %p50 = scmp.eq.s32.totalorder %s49, 0
      %s52 = sadd.s32 %s51, 1
      %s53 = scalar_select %p50, %s51, %s52
      %p56 = pneg %p50
      %p57 = scmp.eq.s32.totalorder %s15, 1
      %p58 = por %p56, %p57
      %p59 = scmp.ne.s32.totalorder %s51, %s54
      %p60 = scmp.eq.s32.totalorder %s15, 0
      %p61 = por %p59, %p60
      %p62 = scmp.ne.s32.totalorder %s51, %s54
      %p63 = scmp.eq.s32.totalorder %s20, 1
      %p64 = por %p62, %p63
      %p65 = scmp.ne.s32.totalorder %s54, %s55
      %p66 = scmp.eq.s32.totalorder %s20, 0
      %p67 = por %p65, %p66
      %p68 = scmp.ne.s32.totalorder %s54, %s55
      %p69 = scmp.eq.s32.totalorder %s21, 1
      %p70 = por %p68, %p69
      %p72 = scmp.ne.s32.totalorder %s55, %s71
      %p73 = scmp.eq.s32.totalorder %s21, 0
      %p74 = por %p72, %p73
      %s75 = ssub.s32 %s15, %s22
      %p76 = scmp.eq.s32.totalorder %s75, 0
      %s78 = sadd.s32 %s77, 1
      %s79 = scalar_select %p76, %s77, %s78
      %p82 = pneg %p76
      %p83 = scmp.eq.s32.totalorder %s15, 1
      %p84 = por %p82, %p83
      %p85 = scmp.ne.s32.totalorder %s77, %s80
      %p86 = scmp.eq.s32.totalorder %s15, 0
      %p87 = por %p85, %p86
      %p88 = scmp.ne.s32.totalorder %s77, %s80
      %p89 = scmp.eq.s32.totalorder %s20, 1
      %p90 = por %p88, %p89
      %p91 = scmp.ne.s32.totalorder %s80, %s81
      %p92 = scmp.eq.s32.totalorder %s20, 0
      %p93 = por %p91, %p92
      %p94 = scmp.ne.s32.totalorder %s80, %s81
      %p95 = scmp.eq.s32.totalorder %s21, 1
      %p96 = por %p94, %p95
      %p98 = scmp.ne.s32.totalorder %s81, %s97
      %p99 = scmp.eq.s32.totalorder %s21, 0
      %p100 = por %p98, %p99
      %s102 = sadd.s32 %s101, 1
      %p105 = scmp.eq.s32.totalorder %s15, 1
      %p106 = scmp.ne.s32.totalorder %s101, %s103
      %p107 = scmp.eq.s32.totalorder %s15, 0
      %p108 = por %p106, %p107
      %p109 = scmp.ne.s32.totalorder %s101, %s103
      %p110 = scmp.eq.s32.totalorder %s20, 1
      %p111 = por %p109, %p110
      %p112 = scmp.ne.s32.totalorder %s103, %s104
      %p113 = scmp.eq.s32.totalorder %s20, 0
      %p114 = por %p112, %p113
      %p115 = scmp.ne.s32.totalorder %s103, %s104
      %p116 = scmp.eq.s32.totalorder %s21, 1
      %p117 = por %p115, %p116
      %p119 = scmp.ne.s32.totalorder %s104, %s118
      %p120 = scmp.eq.s32.totalorder %s21, 0
      %p121 = por %p119, %p120
      %s123 = sadd.s32 %s122, 1
      %p126 = scmp.eq.s32.totalorder %s15, 1
      %p127 = scmp.ne.s32.totalorder %s122, %s124
      %p128 = scmp.eq.s32.totalorder %s15, 0
      %p129 = por %p127, %p128
      %p130 = scmp.ne.s32.totalorder %s122, %s124
      %p131 = scmp.eq.s32.totalorder %s20, 1
      %p132 = por %p130, %p131
      %p133 = scmp.ne.s32.totalorder %s124, %s125
      %p134 = scmp.eq.s32.totalorder %s20, 0
      %p135 = por %p133, %p134
      %p136 = scmp.ne.s32.totalorder %s124, %s125
      %p137 = scmp.eq.s32.totalorder %s21, 1
      %p138 = por %p136, %p137
      %p140 = scmp.ne.s32.totalorder %s125, %s139
      %p141 = scmp.eq.s32.totalorder %s21, 0
      %p142 = por %p140, %p141
      %s144 = sadd.s32 %s143, 1
      %p147 = scmp.eq.s32.totalorder %s15, 1
      %p148 = scmp.ne.s32.totalorder %s143, %s145
      %p149 = scmp.eq.s32.totalorder %s15, 0
      %p150 = por %p148, %p149
      %p151 = scmp.ne.s32.totalorder %s143, %s145
      %p152 = scmp.eq.s32.totalorder %s20, 1
      %p153 = por %p151, %p152
      %p154 = scmp.ne.s32.totalorder %s145, %s146
      %p155 = scmp.eq.s32.totalorder %s20, 0
      %p156 = por %p154, %p155
      %p157 = scmp.ne.s32.totalorder %s145, %s146
      %p158 = scmp.eq.s32.totalorder %s21, 1
      %p159 = por %p157, %p158
      %p161 = scmp.ne.s32.totalorder %s146, %s160
      %p162 = scmp.eq.s32.totalorder %s21, 0
      %p163 = por %p161, %p162
      %s165 = sadd.s32 %s164, 1
      %p168 = scmp.eq.s32.totalorder %s15, 1
      %p169 = scmp.ne.s32.totalorder %s164, %s166
      %p170 = scmp.eq.s32.totalorder %s15, 0
      %p171 = por %p169, %p170
      %p172 = scmp.ne.s32.totalorder %s164, %s166
      %p173 = scmp.eq.s32.totalorder %s20, 1
      %p174 = por %p172, %p173
      %p175 = scmp.ne.s32.totalorder %s166, %s167
      %p176 = scmp.eq.s32.totalorder %s20, 0
      %p177 = por %p175, %p176
      %p178 = scmp.ne.s32.totalorder %s166, %s167
      %p179 = scmp.eq.s32.totalorder %s21, 1
      %p180 = por %p178, %p179
      %p182 = scmp.ne.s32.totalorder %s167, %s181
      %p183 = scmp.eq.s32.totalorder %s21, 0
      %p184 = por %p182, %p183
      %p185 = scmp.le.s32.totalorder 1, %s15
      %p186 = scmp.lt.s32.totalorder %s15, 3
      %p187 = pnand %p185, %p186
      %p188 = pneg %p187
      // Predicated region
      $region9: #{gnn_ptcldpred_merg_side_forward.7} parent=5 // pred_check
        _
      $region10: #{gnn_ptcldpred_merg_side_forward.7} parent=5 // pred_check_branch
        %190 = sbr.rel (%p187) target = $region12
      $region11: #{gnn_ptcldpred_merg_side_forward.7} parent=5 // pred_region
        %s191 = ssub.s32 %s15, 1
        // Predicated region
        $region13: #{gnn_ptcldpred_merg_side_forward.7} parent=11 // pred_check
          %p192 = pneg %p114
        $region14: #{gnn_ptcldpred_merg_side_forward.7} parent=11 // pred_check_branch
          %194 = sbr.rel (%p192) target = $region16
        $region15: #{gnn_ptcldpred_merg_side_forward.7} parent=11 // pred_region
          _
        $region16: #{gnn_ptcldpred_merg_side_forward.7} parent=11 // pred_fallthru
          _
        // Predicated region
        $region17: #{gnn_ptcldpred_merg_side_forward.7} parent=11 // pred_check
          %p195 = pneg %p135
        $region18: #{gnn_ptcldpred_merg_side_forward.7} parent=11 // pred_check_branch
          %197 = sbr.rel (%p195) target = $region20
        $region19: #{gnn_ptcldpred_merg_side_forward.7} parent=11 // pred_region
          _
        $region20: #{gnn_ptcldpred_merg_side_forward.7} parent=11 // pred_fallthru
          _
        // Predicated region
        $region21: #{gnn_ptcldpred_merg_side_forward.7} parent=11 // pred_check
          %p198 = pneg %p156
        $region22: #{gnn_ptcldpred_merg_side_forward.7} parent=11 // pred_check_branch
          %200 = sbr.rel (%p198) target = $region24
        $region23: #{gnn_ptcldpred_merg_side_forward.7} parent=11 // pred_region
          _
        $region24: #{gnn_ptcldpred_merg_side_forward.7} parent=11 // pred_fallthru
          _
      $region12: #{gnn_ptcldpred_merg_side_forward.7} parent=5 // pred_fallthru
        _
      %p201 = scmp.lt.s32.totalorder %s15, 2
      // Predicated region
      $region25: #{gnn_ptcldpred_merg_side_forward.7} parent=5 // pred_check
        %p202 = pneg %p201
      $region26: #{gnn_ptcldpred_merg_side_forward.7} parent=5 // pred_check_branch
        %204 = sbr.rel (%p202) target = $region28
      $region27: #{gnn_ptcldpred_merg_side_forward.7} parent=5 // pred_region
        // Predicated region
        $region29: #{gnn_ptcldpred_merg_side_forward.7} parent=27 // pred_check
          %p205 = pneg %p35
        $region30: #{gnn_ptcldpred_merg_side_forward.7} parent=27 // pred_check_branch
          %207 = sbr.rel (%p205) target = $region32
        $region31: #{gnn_ptcldpred_merg_side_forward.7} parent=27 // pred_region
          %s208 = smul.u32 16, %s15
          %p209 = scmp.lt.s32.totalorder %s208, 31
          %s210 = scalar_select %p209, %s208, 31
          %s211 = smul.addr %s210, 8
          %s212 = scalar_lea.vmem %s0, %s211
          %s213 = smul.u32 16, %s15
        $region32: #{gnn_ptcldpred_merg_side_forward.7} parent=27 // pred_fallthru
          _
        // Predicated region
        $region33: #{gnn_ptcldpred_merg_side_forward.7} parent=27 // pred_check
          %p214 = pneg %p61
        $region34: #{gnn_ptcldpred_merg_side_forward.7} parent=27 // pred_check_branch
          %216 = sbr.rel (%p214) target = $region36
        $region35: #{gnn_ptcldpred_merg_side_forward.7} parent=27 // pred_region
          %s217 = smul.u32 16, %s15
          %p218 = scmp.lt.s32.totalorder %s217, 31
          %s219 = scalar_select %p218, %s217, 31
          %s220 = smul.addr %s219, 8
          %s221 = scalar_lea.vmem %s1, %s220
          %s222 = smul.u32 16, %s15
        $region36: #{gnn_ptcldpred_merg_side_forward.7} parent=27 // pred_fallthru
          _
        // Predicated region
        $region37: #{gnn_ptcldpred_merg_side_forward.7} parent=27 // pred_check
          %p223 = pneg %p87
        $region38: #{gnn_ptcldpred_merg_side_forward.7} parent=27 // pred_check_branch
          %225 = sbr.rel (%p223) target = $region40
        $region39: #{gnn_ptcldpred_merg_side_forward.7} parent=27 // pred_region
          %p226 = scmp.lt.s32.totalorder %s15, 1
          %s227 = scalar_select %p226, %s15, 1
          %s228 = smul.addr %s227, 2
          %s229 = scalar_lea.vmem %s2, %s228
        $region40: #{gnn_ptcldpred_merg_side_forward.7} parent=27 // pred_fallthru
          _
      $region28: #{gnn_ptcldpred_merg_side_forward.7} parent=5 // pred_fallthru
        _
      %p230 = scmp.le.s32.totalorder 1, %s15
      %p231 = scmp.lt.s32.totalorder %s15, 3
      %p232 = pnand %p230, %p231
      %p233 = pneg %p232
      // Predicated region
      $region41: #{gnn_ptcldpred_merg_side_forward.7} parent=5 // pred_check
        _
      $region42: #{gnn_ptcldpred_merg_side_forward.7} parent=5 // pred_check_branch
        %235 = sbr.rel (%p232) target = $region44
      $region43: #{gnn_ptcldpred_merg_side_forward.7} parent=5 // pred_region
        %s236 = ssub.s32 %s15, 1
        %s237 = smul.u32 16, %s20
        %p238 = scmp.lt.s32.totalorder %s237, 31
        %s239 = scalar_select %p238, %s237, 31
        %s240 = smul.addr %s239, 8
        %s241 = scalar_lea.vmem %s0, %s240
        %p242 = pneg %p41
        %p243 = pneg %p38
        %s244 = smul.u32 16, %s20
        %p245 = scmp.lt.s32.totalorder %s244, 31
        %s246 = scalar_select %p245, %s244, 31
        %s247 = smul.addr %s246, 8
        %s248 = scalar_lea.vmem %s1, %s247
        %p249 = pneg %p67
        %p250 = pneg %p64
        %p251 = scmp.lt.s32.totalorder %s20, 1
        %s252 = scalar_select %p251, %s20, 1
        %s253 = smul.addr %s252, 2
        %s254 = scalar_lea.vmem %s2, %s253
        %p255 = pneg %p93
        %p256 = pneg %p90
        %p257 = pneg %p114
        %p258 = pneg %p111
        %p259 = pneg %p135
        %p260 = pneg %p132
        %p261 = pneg %p156
        %p262 = pneg %p153
        %p263 = pneg %p177
        %p264 = pneg %p174
        %s265 = smul.u32 16, %s20
        %p266 = scmp.lt.s32.totalorder %s265, 31
        %s267 = scalar_select %p266, %s265, 31
        %s268 = smul.addr %s267, 8
        %s269 = scalar_lea.vmem %s0, %s268
        %s270 = smul.u32 16, %s20
        %s271 = smul.u32 16, %s20
        %p272 = scmp.lt.s32.totalorder %s271, 31
        %s273 = scalar_select %p272, %s271, 31
        %s274 = smul.addr %s273, 8
        %s275 = scalar_lea.vmem %s1, %s274
        %s276 = smul.u32 16, %s20
        %p277 = scmp.lt.s32.totalorder %s20, 1
        %s278 = scalar_select %p277, %s20, 1
        %s279 = smul.addr %s278, 2
        %s280 = scalar_lea.vmem %s2, %s279
        %p281 = scmp.eq.s32.totalorder %s20, 0
        // Predicated region
        $region45: #{gnn_ptcldpred_merg_side_forward.7} parent=43 // pred_check
          %p282 = pneg %p281
        $region46: #{gnn_ptcldpred_merg_side_forward.7} parent=43 // pred_check_branch
          %284 = sbr.rel (%p282) target = $region48
        $region47: #{gnn_ptcldpred_merg_side_forward.7} parent=43 // pred_region
          %285 = vst [vmem:[#allocation2] sm:$0x3] -1e+30
        $region48: #{gnn_ptcldpred_merg_side_forward.7} parent=43 // pred_fallthru
          _
        %v286 = vld [vmem:[#allocation3] sm:$0x1]
        %v287 = vsub.f32 1.0, %v286
        %v288 = vld [vmem:[%s269] sm:$0xff]
        %v289 = vld [vmem:[%s269 + $0x8] sm:$0xff]
        %v290 = vld [vmem:[%s269 + $0x10] sm:$0xff]
        %v291 = vld [vmem:[%s269 + $0x18] sm:$0xff]
        %v292 = vld [vmem:[%s269 + $0x20] sm:$0xff]
        %v293 = vld [vmem:[%s269 + $0x28] sm:$0xff]
        %v294 = vld [vmem:[%s269 + $0x30] sm:$0xff]
        %v295 = vld [vmem:[%s269 + $0x38] sm:$0xff]
        %v296 = vld [vmem:[%s269 + $0x40] sm:$0xff]
        %v297 = vld [vmem:[%s269 + $0x48] sm:$0xff]
        %v298 = vld [vmem:[%s269 + $0x50] sm:$0xff]
        %v299 = vld [vmem:[%s269 + $0x58] sm:$0xff]
        %v300 = vld [vmem:[%s269 + $0x60] sm:$0xff]
        %v301 = vld [vmem:[%s269 + $0x68] sm:$0xff]
        %v302 = vld [vmem:[%s269 + $0x70] sm:$0xff]
        %v303 = vld [vmem:[%s269 + $0x78] sm:$0xff]
        %v305 = vperm.slane %v287, 0
        %306 = vset.pattern.permute.xlu0 0
        %307 = vperm.xlu0 %306, %v305
        %v308 = vpop.permute.xlu0 %307
        %v310 = vmul.f32 %v308, %v288
        %v311 = vmul.f32 %v308, %v289
        %v312 = vmul.f32 %v308, %v290
        %v313 = vmul.f32 %v308, %v291
        %v314 = vmul.f32 %v308, %v292
        %v315 = vmul.f32 %v308, %v293
        %v316 = vmul.f32 %v308, %v294
        %v317 = vmul.f32 %v308, %v295
        %v318 = vmul.f32 %v308, %v296
        %v319 = vmul.f32 %v308, %v297
        %v320 = vmul.f32 %v308, %v298
        %v321 = vmul.f32 %v308, %v299
        %v322 = vmul.f32 %v308, %v300
        %v323 = vmul.f32 %v308, %v301
        %v324 = vmul.f32 %v308, %v302
        %v325 = vmul.f32 %v308, %v303
        %v326 = vld [vmem:[%s275] sm:$0xff]
        %v327 = vld [vmem:[%s275 + $0x8] sm:$0xff]
        %v328 = vld [vmem:[%s275 + $0x10] sm:$0xff]
        %v329 = vld [vmem:[%s275 + $0x18] sm:$0xff]
        %v330 = vld [vmem:[%s275 + $0x20] sm:$0xff]
        %v331 = vld [vmem:[%s275 + $0x28] sm:$0xff]
        %v332 = vld [vmem:[%s275 + $0x30] sm:$0xff]
        %v333 = vld [vmem:[%s275 + $0x38] sm:$0xff]
        %v334 = vld [vmem:[%s275 + $0x40] sm:$0xff]
        %v335 = vld [vmem:[%s275 + $0x48] sm:$0xff]
        %v336 = vld [vmem:[%s275 + $0x50] sm:$0xff]
        %v337 = vld [vmem:[%s275 + $0x58] sm:$0xff]
        %v338 = vld [vmem:[%s275 + $0x60] sm:$0xff]
        %v339 = vld [vmem:[%s275 + $0x68] sm:$0xff]
        %v340 = vld [vmem:[%s275 + $0x70] sm:$0xff]
        %v341 = vld [vmem:[%s275 + $0x78] sm:$0xff]
        %v343 = vperm.slane %v286, 0
        %344 = vset.pattern.permute.xlu0 0
        %345 = vperm.xlu0 %344, %v343
        %v346 = vpop.permute.xlu0 %345
        %v348 = vmul.f32 %v346, %v326
        %v349 = vmul.f32 %v346, %v327
        %v350 = vmul.f32 %v346, %v328
        %v351 = vmul.f32 %v346, %v329
        %v352 = vmul.f32 %v346, %v330
        %v353 = vmul.f32 %v346, %v331
        %v354 = vmul.f32 %v346, %v332
        %v355 = vmul.f32 %v346, %v333
        %v356 = vmul.f32 %v346, %v334
        %v357 = vmul.f32 %v346, %v335
        %v358 = vmul.f32 %v346, %v336
        %v359 = vmul.f32 %v346, %v337
        %v360 = vmul.f32 %v346, %v338
        %v361 = vmul.f32 %v346, %v339
        %v362 = vmul.f32 %v346, %v340
        %v363 = vmul.f32 %v346, %v341
        %v364 = vadd.f32 %v310, %v348
        %v365 = vadd.f32 %v311, %v349
        %v366 = vadd.f32 %v312, %v350
        %v367 = vadd.f32 %v313, %v351
        %v368 = vadd.f32 %v314, %v352
        %v369 = vadd.f32 %v315, %v353
        %v370 = vadd.f32 %v316, %v354
        %v371 = vadd.f32 %v317, %v355
        %v372 = vadd.f32 %v318, %v356
        %v373 = vadd.f32 %v319, %v357
        %v374 = vadd.f32 %v320, %v358
        %v375 = vadd.f32 %v321, %v359
        %v376 = vadd.f32 %v322, %v360
        %v377 = vadd.f32 %v323, %v361
        %v378 = vadd.f32 %v324, %v362
        %v379 = vadd.f32 %v325, %v363
        %v380 = vld [vmem:[%s280] sm:$0x3]
        %v381 = vperm.slane %v380, 0
        %v382 = vlaneseq
        %v383 = vshrl.u32 %v382, 7
        %385 = vset.pattern.permute.xlu0 %v383
        %386 = vperm.xlu0 %385, %v381
        %v387 = vpop.permute.xlu0 %386
        %v388 = vlaneseq
        %v389 = vshrl.u32 %v388, 7
        %v390 = vadd.s32 %v389, 8
        %391 = vset.pattern.permute.xlu0 %v390
        %392 = vperm.xlu0 %391, %v381
        %v393 = vpop.permute.xlu0 %392
        %v394 = vlaneseq
        %v395 = vshrl.u32 %v394, 7
        %v396 = vadd.s32 %v395, 16
        %397 = vset.pattern.permute.xlu0 %v396
        %398 = vperm.xlu0 %397, %v381
        %v399 = vpop.permute.xlu0 %398
        %v400 = vlaneseq
        %v401 = vshrl.u32 %v400, 7
        %v402 = vadd.s32 %v401, 24
        %403 = vset.pattern.permute.xlu0 %v402
        %404 = vperm.xlu0 %403, %v381
        %v405 = vpop.permute.xlu0 %404
        %v406 = vlaneseq
        %v407 = vshrl.u32 %v406, 7
        %v408 = vadd.s32 %v407, 32
        %409 = vset.pattern.permute.xlu0 %v408
        %410 = vperm.xlu0 %409, %v381
        %v411 = vpop.permute.xlu0 %410
        %v412 = vlaneseq
        %v413 = vshrl.u32 %v412, 7
        %v414 = vadd.s32 %v413, 40
        %415 = vset.pattern.permute.xlu0 %v414
        %416 = vperm.xlu0 %415, %v381
        %v417 = vpop.permute.xlu0 %416
        %v418 = vlaneseq
        %v419 = vshrl.u32 %v418, 7
        %v420 = vadd.s32 %v419, 48
        %421 = vset.pattern.permute.xlu0 %v420
        %422 = vperm.xlu0 %421, %v381
        %v423 = vpop.permute.xlu0 %422
        %v424 = vlaneseq
        %v425 = vshrl.u32 %v424, 7
        %v426 = vadd.s32 %v425, 56
        %427 = vset.pattern.permute.xlu0 %v426
        %428 = vperm.xlu0 %427, %v381
        %v429 = vpop.permute.xlu0 %428
        %v430 = vlaneseq
        %v431 = vshrl.u32 %v430, 7
        %v432 = vadd.s32 %v431, 64
        %433 = vset.pattern.permute.xlu0 %v432
        %434 = vperm.xlu0 %433, %v381
        %v435 = vpop.permute.xlu0 %434
        %v436 = vlaneseq
        %v437 = vshrl.u32 %v436, 7
        %v438 = vadd.s32 %v437, 72
        %439 = vset.pattern.permute.xlu0 %v438
        %440 = vperm.xlu0 %439, %v381
        %v441 = vpop.permute.xlu0 %440
        %v442 = vlaneseq
        %v443 = vshrl.u32 %v442, 7
        %v444 = vadd.s32 %v443, 80
        %445 = vset.pattern.permute.xlu0 %v444
        %446 = vperm.xlu0 %445, %v381
        %v447 = vpop.permute.xlu0 %446
        %v448 = vlaneseq
        %v449 = vshrl.u32 %v448, 7
        %v450 = vadd.s32 %v449, 88
        %451 = vset.pattern.permute.xlu0 %v450
        %452 = vperm.xlu0 %451, %v381
        %v453 = vpop.permute.xlu0 %452
        %v454 = vlaneseq
        %v455 = vshrl.u32 %v454, 7
        %v456 = vadd.s32 %v455, 96
        %457 = vset.pattern.permute.xlu0 %v456
        %458 = vperm.xlu0 %457, %v381
        %v459 = vpop.permute.xlu0 %458
        %v460 = vlaneseq
        %v461 = vshrl.u32 %v460, 7
        %v462 = vadd.s32 %v461, 104
        %463 = vset.pattern.permute.xlu0 %v462
        %464 = vperm.xlu0 %463, %v381
        %v465 = vpop.permute.xlu0 %464
        %v466 = vlaneseq
        %v467 = vshrl.u32 %v466, 7
        %v468 = vadd.s32 %v467, 112
        %469 = vset.pattern.permute.xlu0 %v468
        %470 = vperm.xlu0 %469, %v381
        %v471 = vpop.permute.xlu0 %470
        %v472 = vlaneseq
        %v473 = vshrl.u32 %v472, 7
        %v474 = vadd.s32 %v473, 120
        %475 = vset.pattern.permute.xlu0 %v474
        %476 = vperm.xlu0 %475, %v381
        %v477 = vpop.permute.xlu0 %476
        %v478 = vperm.slane %v380, 1
        %v479 = vlaneseq
        %v480 = vshrl.u32 %v479, 7
        %482 = vset.pattern.permute.xlu0 %v480
        %483 = vperm.xlu0 %482, %v478
        %v484 = vpop.permute.xlu0 %483
        %v485 = vlaneseq
        %v486 = vshrl.u32 %v485, 7
        %v487 = vadd.s32 %v486, 8
        %488 = vset.pattern.permute.xlu0 %v487
        %489 = vperm.xlu0 %488, %v478
        %v490 = vpop.permute.xlu0 %489
        %v491 = vlaneseq
        %v492 = vshrl.u32 %v491, 7
        %v493 = vadd.s32 %v492, 16
        %494 = vset.pattern.permute.xlu0 %v493
        %495 = vperm.xlu0 %494, %v478
        %v496 = vpop.permute.xlu0 %495
        %v497 = vlaneseq
        %v498 = vshrl.u32 %v497, 7
        %v499 = vadd.s32 %v498, 24
        %500 = vset.pattern.permute.xlu0 %v499
        %501 = vperm.xlu0 %500, %v478
        %v502 = vpop.permute.xlu0 %501
        %v503 = vlaneseq
        %v504 = vshrl.u32 %v503, 7
        %v505 = vadd.s32 %v504, 32
        %506 = vset.pattern.permute.xlu0 %v505
        %507 = vperm.xlu0 %506, %v478
        %v508 = vpop.permute.xlu0 %507
        %v509 = vlaneseq
        %v510 = vshrl.u32 %v509, 7
        %v511 = vadd.s32 %v510, 40
        %512 = vset.pattern.permute.xlu0 %v511
        %513 = vperm.xlu0 %512, %v478
        %v514 = vpop.permute.xlu0 %513
        %v515 = vlaneseq
        %v516 = vshrl.u32 %v515, 7
        %v517 = vadd.s32 %v516, 48
        %518 = vset.pattern.permute.xlu0 %v517
        %519 = vperm.xlu0 %518, %v478
        %v520 = vpop.permute.xlu0 %519
        %v521 = vlaneseq
        %v522 = vshrl.u32 %v521, 7
        %v523 = vadd.s32 %v522, 56
        %524 = vset.pattern.permute.xlu0 %v523
        %525 = vperm.xlu0 %524, %v478
        %v526 = vpop.permute.xlu0 %525
        %v527 = vlaneseq
        %v528 = vshrl.u32 %v527, 7
        %v529 = vadd.s32 %v528, 64
        %530 = vset.pattern.permute.xlu0 %v529
        %531 = vperm.xlu0 %530, %v478
        %v532 = vpop.permute.xlu0 %531
        %v533 = vlaneseq
        %v534 = vshrl.u32 %v533, 7
        %v535 = vadd.s32 %v534, 72
        %536 = vset.pattern.permute.xlu0 %v535
        %537 = vperm.xlu0 %536, %v478
        %v538 = vpop.permute.xlu0 %537
        %v539 = vlaneseq
        %v540 = vshrl.u32 %v539, 7
        %v541 = vadd.s32 %v540, 80
        %542 = vset.pattern.permute.xlu0 %v541
        %543 = vperm.xlu0 %542, %v478
        %v544 = vpop.permute.xlu0 %543
        %v545 = vlaneseq
        %v546 = vshrl.u32 %v545, 7
        %v547 = vadd.s32 %v546, 88
        %548 = vset.pattern.permute.xlu0 %v547
        %549 = vperm.xlu0 %548, %v478
        %v550 = vpop.permute.xlu0 %549
        %v551 = vlaneseq
        %v552 = vshrl.u32 %v551, 7
        %v553 = vadd.s32 %v552, 96
        %554 = vset.pattern.permute.xlu0 %v553
        %555 = vperm.xlu0 %554, %v478
        %v556 = vpop.permute.xlu0 %555
        %v557 = vlaneseq
        %v558 = vshrl.u32 %v557, 7
        %v559 = vadd.s32 %v558, 104
        %560 = vset.pattern.permute.xlu0 %v559
        %561 = vperm.xlu0 %560, %v478
        %v562 = vpop.permute.xlu0 %561
        %v563 = vlaneseq
        %v564 = vshrl.u32 %v563, 7
        %v565 = vadd.s32 %v564, 112
        %566 = vset.pattern.permute.xlu0 %v565
        %567 = vperm.xlu0 %566, %v478
        %v568 = vpop.permute.xlu0 %567
        %v569 = vlaneseq
        %v570 = vshrl.u32 %v569, 7
        %v571 = vadd.s32 %v570, 120
        %572 = vset.pattern.permute.xlu0 %v571
        %573 = vperm.xlu0 %572, %v478
        %v574 = vpop.permute.xlu0 %573
        %vm575 = vcmp.gt.f32.partialorder %v387, 0.0
        %vm576 = vcmp.gt.f32.partialorder %v393, 0.0
        %vm577 = vcmp.gt.f32.partialorder %v399, 0.0
        %vm578 = vcmp.gt.f32.partialorder %v405, 0.0
        %vm579 = vcmp.gt.f32.partialorder %v411, 0.0
        %vm580 = vcmp.gt.f32.partialorder %v417, 0.0
        %vm581 = vcmp.gt.f32.partialorder %v423, 0.0
        %vm582 = vcmp.gt.f32.partialorder %v429, 0.0
        %vm583 = vcmp.gt.f32.partialorder %v435, 0.0
        %vm584 = vcmp.gt.f32.partialorder %v441, 0.0
        %vm585 = vcmp.gt.f32.partialorder %v447, 0.0
        %vm586 = vcmp.gt.f32.partialorder %v453, 0.0
        %vm587 = vcmp.gt.f32.partialorder %v459, 0.0
        %vm588 = vcmp.gt.f32.partialorder %v465, 0.0
        %vm589 = vcmp.gt.f32.partialorder %v471, 0.0
        %vm590 = vcmp.gt.f32.partialorder %v477, 0.0
        %vm591 = vcmp.gt.f32.partialorder %v484, 0.0
        %vm592 = vcmp.gt.f32.partialorder %v490, 0.0
        %vm593 = vcmp.gt.f32.partialorder %v496, 0.0
        %vm594 = vcmp.gt.f32.partialorder %v502, 0.0
        %vm595 = vcmp.gt.f32.partialorder %v508, 0.0
        %vm596 = vcmp.gt.f32.partialorder %v514, 0.0
        %vm597 = vcmp.gt.f32.partialorder %v520, 0.0
        %vm598 = vcmp.gt.f32.partialorder %v526, 0.0
        %vm599 = vcmp.gt.f32.partialorder %v532, 0.0
        %vm600 = vcmp.gt.f32.partialorder %v538, 0.0
        %vm601 = vcmp.gt.f32.partialorder %v544, 0.0
        %vm602 = vcmp.gt.f32.partialorder %v550, 0.0
        %vm603 = vcmp.gt.f32.partialorder %v556, 0.0
        %vm604 = vcmp.gt.f32.partialorder %v562, 0.0
        %vm605 = vcmp.gt.f32.partialorder %v568, 0.0
        %vm606 = vcmp.gt.f32.partialorder %v574, 0.0
        %v607 = vsel %vm575, 1, 0
        %v608 = vsel %vm576, 1, 0
        %v609 = vsel %vm577, 1, 0
        %v610 = vsel %vm578, 1, 0
        %v611 = vsel %vm579, 1, 0
        %v612 = vsel %vm580, 1, 0
        %v613 = vsel %vm581, 1, 0
        %v614 = vsel %vm582, 1, 0
        %v615 = vsel %vm583, 1, 0
        %v616 = vsel %vm584, 1, 0
        %v617 = vsel %vm585, 1, 0
        %v618 = vsel %vm586, 1, 0
        %v619 = vsel %vm587, 1, 0
        %v620 = vsel %vm588, 1, 0
        %v621 = vsel %vm589, 1, 0
        %v622 = vsel %vm590, 1, 0
        %v623 = vsel %vm591, 1, 0
        %v624 = vsel %vm592, 1, 0
        %v625 = vsel %vm593, 1, 0
        %v626 = vsel %vm594, 1, 0
        %v627 = vsel %vm595, 1, 0
        %v628 = vsel %vm596, 1, 0
        %v629 = vsel %vm597, 1, 0
        %v630 = vsel %vm598, 1, 0
        %v631 = vsel %vm599, 1, 0
        %v632 = vsel %vm600, 1, 0
        %v633 = vsel %vm601, 1, 0
        %v634 = vsel %vm602, 1, 0
        %v635 = vsel %vm603, 1, 0
        %v636 = vsel %vm604, 1, 0
        %v637 = vsel %vm605, 1, 0
        %v638 = vsel %vm606, 1, 0
        %vm639 = vcmp.eq.s32.totalorder %v607, 1
        %vm640 = vcmp.eq.s32.totalorder %v608, 1
        %vm641 = vcmp.eq.s32.totalorder %v609, 1
        %vm642 = vcmp.eq.s32.totalorder %v610, 1
        %vm643 = vcmp.eq.s32.totalorder %v611, 1
        %vm644 = vcmp.eq.s32.totalorder %v612, 1
        %vm645 = vcmp.eq.s32.totalorder %v613, 1
        %vm646 = vcmp.eq.s32.totalorder %v614, 1
        %vm647 = vcmp.eq.s32.totalorder %v615, 1
        %vm648 = vcmp.eq.s32.totalorder %v616, 1
        %vm649 = vcmp.eq.s32.totalorder %v617, 1
        %vm650 = vcmp.eq.s32.totalorder %v618, 1
        %vm651 = vcmp.eq.s32.totalorder %v619, 1
        %vm652 = vcmp.eq.s32.totalorder %v620, 1
        %vm653 = vcmp.eq.s32.totalorder %v621, 1
        %vm654 = vcmp.eq.s32.totalorder %v622, 1
        %vm655 = vcmp.eq.s32.totalorder %v623, 1
        %vm656 = vcmp.eq.s32.totalorder %v624, 1
        %vm657 = vcmp.eq.s32.totalorder %v625, 1
        %vm658 = vcmp.eq.s32.totalorder %v626, 1
        %vm659 = vcmp.eq.s32.totalorder %v627, 1
        %vm660 = vcmp.eq.s32.totalorder %v628, 1
        %vm661 = vcmp.eq.s32.totalorder %v629, 1
        %vm662 = vcmp.eq.s32.totalorder %v630, 1
        %vm663 = vcmp.eq.s32.totalorder %v631, 1
        %vm664 = vcmp.eq.s32.totalorder %v632, 1
        %vm665 = vcmp.eq.s32.totalorder %v633, 1
        %vm666 = vcmp.eq.s32.totalorder %v634, 1
        %vm667 = vcmp.eq.s32.totalorder %v635, 1
        %vm668 = vcmp.eq.s32.totalorder %v636, 1
        %vm669 = vcmp.eq.s32.totalorder %v637, 1
        %vm670 = vcmp.eq.s32.totalorder %v638, 1
        %v671 = vsel %vm639, %v364, -1e+30
        %v672 = vsel %vm640, %v365, -1e+30
        %v673 = vsel %vm641, %v366, -1e+30
        %v674 = vsel %vm642, %v367, -1e+30
        %v675 = vsel %vm643, %v368, -1e+30
        %v676 = vsel %vm644, %v369, -1e+30
        %v677 = vsel %vm645, %v370, -1e+30
        %v678 = vsel %vm646, %v371, -1e+30
        %v679 = vsel %vm647, %v372, -1e+30
        %v680 = vsel %vm648, %v373, -1e+30
        %v681 = vsel %vm649, %v374, -1e+30
        %v682 = vsel %vm650, %v375, -1e+30
        %v683 = vsel %vm651, %v376, -1e+30
        %v684 = vsel %vm652, %v377, -1e+30
        %v685 = vsel %vm653, %v378, -1e+30
        %v686 = vsel %vm654, %v379, -1e+30
        %v687 = vsel %vm655, %v364, -1e+30
        %v688 = vsel %vm656, %v365, -1e+30
        %v689 = vsel %vm657, %v366, -1e+30
        %v690 = vsel %vm658, %v367, -1e+30
        %v691 = vsel %vm659, %v368, -1e+30
        %v692 = vsel %vm660, %v369, -1e+30
        %v693 = vsel %vm661, %v370, -1e+30
        %v694 = vsel %vm662, %v371, -1e+30
        %v695 = vsel %vm663, %v372, -1e+30
        %v696 = vsel %vm664, %v373, -1e+30
        %v697 = vsel %vm665, %v374, -1e+30
        %v698 = vsel %vm666, %v375, -1e+30
        %v699 = vsel %vm667, %v376, -1e+30
        %v700 = vsel %vm668, %v377, -1e+30
        %v701 = vsel %vm669, %v378, -1e+30
        %v702 = vsel %vm670, %v379, -1e+30
        %v703 = vld [vmem:[#allocation2] sm:$0x3]
        %v704 = vmax.f32 %v671, %v673
        %v705 = vmax.f32 %v672, %v674
        %v706 = vmax.f32 %v704, %v675
        %v707 = vmax.f32 %v705, %v676
        %v708 = vmax.f32 %v706, %v677
        %v709 = vmax.f32 %v707, %v678
        %v710 = vmax.f32 %v708, %v679
        %v711 = vmax.f32 %v709, %v680
        %v712 = vmax.f32 %v710, %v681
        %v713 = vmax.f32 %v711, %v682
        %v714 = vmax.f32 %v712, %v683
        %v715 = vmax.f32 %v713, %v684
        %v716 = vmax.f32 %v714, %v685
        %v717 = vmax.f32 %v715, %v686
        %v718 = vmax.f32 %v716, %v717
        %v719 = vrot.slane %v718, 4
        %v720 = vmax.f32 %v718, %v719
        %v721 = vrot.slane %v720, 2
        %v722 = vmax.f32 %v720, %v721
        %v723 = vrot.slane %v722, 1
        %v724 = vmax.f32 %v722, %v723
        %v725 = vmax.f32 %v687, %v689
        %v726 = vmax.f32 %v688, %v690
        %v727 = vmax.f32 %v725, %v691
        %v728 = vmax.f32 %v726, %v692
        %v729 = vmax.f32 %v727, %v693
        %v730 = vmax.f32 %v728, %v694
        %v731 = vmax.f32 %v729, %v695
        %v732 = vmax.f32 %v730, %v696
        %v733 = vmax.f32 %v731, %v697
        %v734 = vmax.f32 %v732, %v698
        %v735 = vmax.f32 %v733, %v699
        %v736 = vmax.f32 %v734, %v700
        %v737 = vmax.f32 %v735, %v701
        %v738 = vmax.f32 %v736, %v702
        %v739 = vmax.f32 %v737, %v738
        %v740 = vrot.slane %v739, 4
        %v741 = vmax.f32 %v739, %v740
        %v742 = vrot.slane %v741, 2
        %v743 = vmax.f32 %v741, %v742
        %v744 = vrot.slane %v743, 1
        %v745 = vmax.f32 %v743, %v744
        %vm748 = vcmask 1041409
        %v749 = vsel %vm748, %v745, %v724
        %v751 = vmax.f32 %v703, %v749
        %752 = vst [vmem:[#allocation2] sm:$0x3] %v751
        %p753 = scmp.eq.s32.totalorder %s20, 1
        // Predicated region
        $region49: #{gnn_ptcldpred_merg_side_forward.7} parent=43 // pred_check
          %p754 = pneg %p753
        $region50: #{gnn_ptcldpred_merg_side_forward.7} parent=43 // pred_check_branch
          %756 = sbr.rel (%p754) target = $region52
        $region51: #{gnn_ptcldpred_merg_side_forward.7} parent=43 // pred_region
          %v757 = vld [vmem:[#allocation2] sm:$0x3]
          %vm758 = vcmp.gt.f32.partialorder %v757, -1e+29
          %v759 = vsel %vm758, %v757, 0.0
          %v760 = vld [vmem:[%s3] sm:$0xff]
          %v761 = vld [vmem:[%s3 + $0x8] sm:$0xff]
          %v762 = vld [vmem:[%s3 + $0x10] sm:$0xff]
          %v763 = vld [vmem:[%s3 + $0x18] sm:$0xff]
          %v764 = vld [vmem:[%s3 + $0x20] sm:$0xff]
          %v765 = vld [vmem:[%s3 + $0x28] sm:$0xff]
          %v766 = vld [vmem:[%s3 + $0x30] sm:$0xff]
          %v767 = vld [vmem:[%s3 + $0x38] sm:$0xff]
          %v768 = vld [vmem:[%s3 + $0x40] sm:$0xff]
          %v769 = vld [vmem:[%s3 + $0x48] sm:$0xff]
          %v770 = vld [vmem:[%s3 + $0x50] sm:$0xff]
          %v771 = vld [vmem:[%s3 + $0x58] sm:$0xff]
          %v772 = vld [vmem:[%s3 + $0x60] sm:$0xff]
          %v773 = vld [vmem:[%s3 + $0x68] sm:$0xff]
          %v774 = vld [vmem:[%s3 + $0x70] sm:$0xff]
          %v775 = vld [vmem:[%s3 + $0x78] sm:$0xff]
          %v776 = vld [vmem:[%s4] sm:$0x1]
          %v778 = vperm.slane %v776, 0
          %780 = vmatpush.msra.mxu0 %v775
          %781 = vmatpush.msra.mxu0 %v774
          %782 = vmatpush.msra.mxu0 %v773
          %783 = vmatpush.msra.mxu0 %v772
          %784 = vmatpush.msra.mxu0 %v771
          %785 = vmatpush.msra.mxu0 %v770
          %786 = vmatpush.msra.mxu0 %v769
          %787 = vmatpush.msra.mxu0 %v768
          %788 = vmatpush.msra.mxu0 %v767
          %789 = vmatpush.msra.mxu0 %v766
          %790 = vmatpush.msra.mxu0 %v765
          %791 = vmatpush.msra.mxu0 %v764
          %792 = vmatpush.msra.mxu0 %v763
          %793 = vmatpush.msra.mxu0 %v762
          %794 = vmatpush.msra.mxu0 %v761
          %795 = vmatpush.msra.mxu0 %v760
          %796 = vmatmul.f32.gmra.mxu0 %v759
          %v797 = vpop.f32.mrf.mxu0
          %v798 = vadd.f32 %v778, %v797
          %799 = vdwg.mxu0
          %800 = vst [vmem:[#allocation4] sm:$0x3] %v798
        $region52: #{gnn_ptcldpred_merg_side_forward.7} parent=43 // pred_fallthru
          _
        // Predicated region
        $region53: #{gnn_ptcldpred_merg_side_forward.7} parent=43 // pred_check
          %p801 = pneg %p174
        $region54: #{gnn_ptcldpred_merg_side_forward.7} parent=43 // pred_check_branch
          %803 = sbr.rel (%p801) target = $region56
        $region55: #{gnn_ptcldpred_merg_side_forward.7} parent=43 // pred_region
          %805 = vsyncadd [#allocation5], 0
          %s807 = sshll.u32 [#allocation4], 4
          %s808 = int_to_ptr.vmem [resolvable:$true] %s807
          %s809 = sshll.u32 %s6, 4
          %s810 = int_to_ptr.hbm [resolvable:$true] %s809
          %812 = dma.vmem_to_hbm [thread:$0]  %s808, 32, %s810, [#allocation5]
        $region56: #{gnn_ptcldpred_merg_side_forward.7} parent=43 // pred_fallthru
          _
        // Predicated region
        $region57: #{gnn_ptcldpred_merg_side_forward.7} parent=43 // pred_check
          %p813 = pneg %p174
        $region58: #{gnn_ptcldpred_merg_side_forward.7} parent=43 // pred_check_branch
          %815 = sbr.rel (%p813) target = $region60
        $region59: #{gnn_ptcldpred_merg_side_forward.7} parent=43 // pred_region
          %817 = dma.done [#allocation5], 32
        $region60: #{gnn_ptcldpred_merg_side_forward.7} parent=43 // pred_fallthru
          _
      $region44: #{gnn_ptcldpred_merg_side_forward.7} parent=5 // pred_fallthru
        _
      %p818 = scmp.le.s32.totalorder 2, %s15
      // Predicated region
      $region61: #{gnn_ptcldpred_merg_side_forward.7} parent=5 // pred_check
        %p819 = pneg %p818
      $region62: #{gnn_ptcldpred_merg_side_forward.7} parent=5 // pred_check_branch
        %821 = sbr.rel (%p819) target = $region64
      $region63: #{gnn_ptcldpred_merg_side_forward.7} parent=5 // pred_region
        %s822 = ssub.s32 %s15, 2
      $region64: #{gnn_ptcldpred_merg_side_forward.7} parent=5 // pred_fallthru
        _
    $region6: #{gnn_ptcldpred_merg_side_forward.7} parent=1 // loop_footer
      %s19 = sadd.s32 1, %s15
    $region7: #{gnn_ptcldpred_merg_side_forward.7} parent=1 // loop_footer_branch
      %14 = sbr.rel target = $region3
    $region8: #{gnn_ptcldpred_merg_side_forward.7} parent=1 // loop_exit
      _
    %823 = vsyncpa [#allocation5], 1
    %s824 = scalar_lea.sflag [#allocation5], 1
    %825 = vsyncpa %s824, 1

</llo_original>
